<compile_context>
chip_gen: v5e
topology: v5e:2x2
jax: 0.10.0
libtpu: 0.0.40
codegen_flags: <defaults>
</compile_context>

<pallas_src>
import functools

import numpy as np
import jax
import jax.numpy as jnp
from jax import lax
from jax.experimental import pallas as pl
from jax.experimental.pallas import tpu as pltpu

EPS = 1e-6            # nn.LayerNorm(eps=1e-6)
NEG_INF = -1e9        # masked_fill value in the reference module
NT_DIM_NUMBERS = (((1,), (1,)), ((), ()))  # contract last dims of both: q @ k^T


# ----------------------------- in-kernel helpers ------------------------------

def _layer_norm(x, gamma, beta):
    # PyTorch LayerNorm uses biased variance.
    mean = jnp.mean(x, axis=-1, keepdims=True)
    var = jnp.mean(jnp.square(x - mean), axis=-1, keepdims=True)
    return (x - mean) * lax.rsqrt(var + EPS) * gamma + beta


def _mha(x_res, xq_bf, xkv_bf, mask, wq, wk, wv, wo, gamma, beta,
         *, B, Lq, Lk, H, dk, dv):
    """Multi-head attention sublayer (+ residual + LayerNorm), VMEM-resident.

    xq_bf: (B*Lq, D) bf16, xkv_bf: (B*Lk, D) bf16.
    wq/wk/wv: (D, H*dk|H*dv) bf16 (W_q pre-scaled by 1/sqrt(dk)); wo: (H*dv, D) bf16.
    mask: (B, Lq, Lk) bf16 {0,1}.
    """
    # Fused full-width projections (single MXU matmuls over all rows / all heads).
    q = jnp.dot(xq_bf, wq, preferred_element_type=jnp.float32)    # (B*Lq, H*dk)
    k = jnp.dot(xkv_bf, wk, preferred_element_type=jnp.float32)   # (B*Lk, H*dk)
    v = jnp.dot(xkv_bf, wv, preferred_element_type=jnp.float32)   # (B*Lk, H*dv)

    # Score / softmax / AV.  TODO(synk): flash-tile Lk + fori_loop over (b, h) at
    # production sizes instead of dense (Lq, Lk) tiles and Python unrolling.
    rows = []
    for b in range(B):
        qb = q[b * Lq:(b + 1) * Lq]
        kb = k[b * Lk:(b + 1) * Lk]
        vb = v[b * Lk:(b + 1) * Lk]
        keep = mask[b] != 0                       # hoisted out of the head loop
        heads = []
        for h in range(H):
            qh = qb[:, h * dk:(h + 1) * dk].astype(jnp.bfloat16)
            kh = kb[:, h * dk:(h + 1) * dk].astype(jnp.bfloat16)
            vh = vb[:, h * dv:(h + 1) * dv].astype(jnp.bfloat16)
            s = lax.dot_general(qh, kh, NT_DIM_NUMBERS,
                                preferred_element_type=jnp.float32)  # (Lq, Lk)
            s = jnp.where(keep, s, NEG_INF)       # exact masked_fill semantics
            s = s - jnp.max(s, axis=-1, keepdims=True)
            p = jnp.exp(s)
            p = p * pl.reciprocal(jnp.sum(p, axis=-1, keepdims=True), approx=True)
            heads.append(jnp.dot(p.astype(jnp.bfloat16), vh,
                                 preferred_element_type=jnp.float32))  # (Lq, dv)
        rows.append(jnp.concatenate(heads, axis=-1))                   # (Lq, H*dv)
    o = jnp.concatenate(rows, axis=0).astype(jnp.bfloat16)             # (B*Lq, H*dv)
    y = jnp.dot(o, wo, preferred_element_type=jnp.float32)             # (B*Lq, D)
    return _layer_norm(y + x_res, gamma, beta)


def _ffn(x, w1, b1, w2, b2, gamma, beta):
    h = jnp.dot(x.astype(jnp.bfloat16), w1, preferred_element_type=jnp.float32) + b1
    h = jnp.maximum(h, 0.0)                                            # ReLU
    y = jnp.dot(h.astype(jnp.bfloat16), w2, preferred_element_type=jnp.float32) + b2
    return _layer_norm(y + x, gamma, beta)


# --------------------------------- kernel -------------------------------------

def decoder_stack_kernel(x0_ref, tmask_ref, smask_ref, enc_ref,
                         wq_ref, wk_ref, wv_ref, wo_ref, ag_ref, ab_ref,
                         w1_ref, b1_ref, w2_ref, b2_ref, fg_ref, fb_ref,
                         out_ref, *, B, L, Ls, n_head, d_k, d_v):
    layer = pl.program_id(0)

    # The output block is revisited every layer (constant index map), so it doubles
    # as the VMEM-resident residual carry.
    @pl.when(layer == 0)
    def _init():
        out_ref[...] = x0_ref[...]

    x = out_ref[...]                    # (B*L, D) f32 residual stream
    tmask = tmask_ref[...]              # (B, L, L)  bf16 {0,1}
    smask = smask_ref[...]              # (B, L, Ls) bf16 {0,1}
    enc_b = enc_ref[...]                # (B*Ls, D)  bf16

    # --- masked multi-head self-attention (+ add & norm) ---
    xb = x.astype(jnp.bfloat16)
    x = _mha(x, xb, xb, tmask,
             wq_ref[0, 0], wk_ref[0, 0], wv_ref[0, 0], wo_ref[0, 0],
             ag_ref[0, 0], ab_ref[0, 0],
             B=B, Lq=L, Lk=L, H=n_head, dk=d_k, dv=d_v)
    # --- encoder-decoder multi-head attention (+ add & norm) ---
    xb = x.astype(jnp.bfloat16)
    x = _mha(x, xb, enc_b, smask,
             wq_ref[0, 1], wk_ref[0, 1], wv_ref[0, 1], wo_ref[0, 1],
             ag_ref[0, 1], ab_ref[0, 1],
             B=B, Lq=L, Lk=Ls, H=n_head, dk=d_k, dv=d_v)
    # --- position-wise FFN (+ add & norm) ---
    x = _ffn(x, w1_ref[0], b1_ref[0], w2_ref[0], b2_ref[0], fg_ref[0], fb_ref[0])

    out_ref[...] = x                    # carry to the next layer step


# ------------------------------ param packing ----------------------------------

def sinusoid_table(n_position, d_hid):
    pos = np.arange(n_position, dtype=np.float64)[:, None]
    j = np.arange(d_hid)[None, :]
    angle = pos / np.power(10000.0, 2.0 * (j // 2) / d_hid)
    table = np.zeros((n_position, d_hid), dtype=np.float64)
    table[:, 0::2] = np.sin(angle[:, 0::2])
    table[:, 1::2] = np.cos(angle[:, 1::2])
    return jnp.asarray(table, dtype=jnp.float32)


def pack_params(params, *, n_head, d_k, d_v):
    """Lane-dense packing for the fused kernel: layer axis in front, self/cross
    stacked on axis 1, 1/sqrt(d_k) folded into W_q, MXU operands stored in bf16."""
    inv_scale = 1.0 / (d_k ** 0.5)

    wq, wk, wv, wo, ag, ab = [], [], [], [], [], []
    w1, b1, w2, b2, fg, fb = [], [], [], [], [], []
    for lp in params['layers']:
        sa, ca, ff = lp['self_attn'], lp['cross_attn'], lp['ffn']
        wq.append(jnp.stack([sa['wq'] * inv_scale, ca['wq'] * inv_scale], axis=0))
        wk.append(jnp.stack([sa['wk'], ca['wk']], axis=0))
        wv.append(jnp.stack([sa['wv'], ca['wv']], axis=0))
        wo.append(jnp.stack([sa['wo'], ca['wo']], axis=0))
        ag.append(jnp.stack([sa['ln_g'][0], ca['ln_g'][0]], axis=0))   # (2, D)
        ab.append(jnp.stack([sa['ln_b'][0], ca['ln_b'][0]], axis=0))
        w1.append(ff['w1']); b1.append(ff['b1'])
        w2.append(ff['w2']); b2.append(ff['b2'])
        fg.append(ff['ln_g']); fb.append(ff['ln_b'])

    bf16 = jnp.bfloat16
    stk = lambda xs: jnp.stack(xs, axis=0)
    return {
        'wq': stk(wq).astype(bf16),   # (nl, 2, D, H*dk)
        'wk': stk(wk).astype(bf16),   # (nl, 2, D, H*dk)
        'wv': stk(wv).astype(bf16),   # (nl, 2, D, H*dv)
        'wo': stk(wo).astype(bf16),   # (nl, 2, H*dv, D)
        'ag': stk(ag), 'ab': stk(ab),
        'w1': stk(w1).astype(bf16), 'b1': stk(b1),
        'w2': stk(w2).astype(bf16), 'b2': stk(b2),
        'fg': stk(fg), 'fb': stk(fb),
    }


def init_params(key, *, vocab_size, d_model, d_ff, n_head, d_k, d_v,
                n_layer, n_position, pad_idx):
    def nrm(k, shape, s=0.1):
        return jax.random.normal(k, shape, dtype=jnp.float32) * s

    keys = jax.random.split(key, 1 + n_layer)
    emb = nrm(keys[0], (vocab_size, d_model))
    emb = emb.at[pad_idx].set(0.0)  # padding_idx row is zero

    layers = []
    for li in range(n_layer):
        lk = jax.random.split(keys[1 + li], 8)

        def attn(ki):
            kq, kk, kv, ko = jax.random.split(ki, 4)
            return {
                'wq': nrm(kq, (d_model, n_head * d_k)),
                'wk': nrm(kk, (d_model, n_head * d_k)),
                'wv': nrm(kv, (d_model, n_head * d_v)),
                'wo': nrm(ko, (n_head * d_v, d_model)),
                'ln_g': jnp.ones((1, d_model), jnp.float32),
                'ln_b': jnp.zeros((1, d_model), jnp.float32),
            }

        layers.append({
            'self_attn': attn(lk[0]),
            'cross_attn': attn(lk[1]),
            'ffn': {
                'w1': nrm(lk[2], (d_model, d_ff)),
                'b1': nrm(lk[3], (1, d_ff), 0.02),
                'w2': nrm(lk[4], (d_ff, d_model)),
                'b2': nrm(lk[5], (1, d_model), 0.02),
                'ln_g': jnp.ones((1, d_model), jnp.float32),
                'ln_b': jnp.zeros((1, d_model), jnp.float32),
            },
        })

    params = {
        'embedding': emb,
        'pos_table': sinusoid_table(n_position, d_model),
        'ln_g': jnp.ones((1, d_model), jnp.float32),
        'ln_b': jnp.zeros((1, d_model), jnp.float32),
        'layers': layers,
    }
    params['packed'] = pack_params(params, n_head=n_head, d_k=d_k, d_v=d_v)
    return params


# -------------------------------- forward --------------------------------------

def _vmem_limit_bytes(B, L, Ls, D, d_ff, n_head, d_k, d_v):
    """Explicit scoped-VMEM sizing from the resident buffers (with 2x buffering)."""
    f32, bf16 = 4, 2
    act = B * L * D * f32 * 3                        # x0 (double-buffered) + out carry
    masks = (B * L * L + B * L * Ls) * bf16 * 2
    enc = B * Ls * D * bf16 * 2
    w = bf16 * (2 * D * n_head * d_k * 2             # wq + wk
                + 2 * D * n_head * d_v               # wv
                + 2 * n_head * d_v * D               # wo
                + D * d_ff + d_ff * D)               # w1 + w2
    w += f32 * (2 * 2 * D + d_ff + 3 * D)            # LN params + biases
    est = act + masks + enc + 2 * w                  # layer weights double-buffered
    return int(max(32 << 20, min(96 << 20, 2 * est + (4 << 20))))


def decoder_forward(params, trg_seq, trg_mask, enc_output, src_mask, *,
                    scale_emb, d_model, n_head, d_k, d_v):
    B, L = trg_seq.shape
    Ls = enc_output.shape[1]
    D = d_model
    pk = params['packed']
    n_layer = pk['w1'].shape[0]
    d_ff = pk['w1'].shape[2]

    # Prelude (one-time elementwise + data-dependent gather) stays in JAX glue:
    # embedding gather + scale + positional encoding + decoder-level LayerNorm.
    # Dropout == identity (eval-mode semantics).
    x0 = jnp.take(params['embedding'], trg_seq, axis=0)             # (B, L, D)
    if scale_emb:
        x0 = x0 * (d_model ** 0.5)
    x0 = x0 + params['pos_table'][:L][None]
    mean = jnp.mean(x0, -1, keepdims=True)
    var = jnp.mean((x0 - mean) ** 2, -1, keepdims=True)
    x0 = (x0 - mean) * lax.rsqrt(var + EPS) * params['ln_g'] + params['ln_b']
    x0 = x0.reshape(B * L, D).astype(jnp.float32)

    enc_flat = enc_output.astype(jnp.bfloat16).reshape(B * Ls, D)
    tmask = trg_mask.astype(jnp.bfloat16)                           # {0,1}, half bytes
    smask = src_mask.astype(jnp.bfloat16)

    full = lambda shape: pl.BlockSpec(shape, lambda l: (0,) * len(shape))
    per_l = lambda shape: pl.BlockSpec(shape, lambda l: (l,) + (0,) * (len(shape) - 1))

    grid_spec = pltpu.PrefetchScalarGridSpec(
        num_scalar_prefetch=0,
        grid=(n_layer,),                       # weights DMA'd once per layer
        in_specs=[
            full((B * L, D)),                  # x0 (layer-invariant, resident)
            full((B, L, L)),                   # trg mask (bf16, resident)
            full((B, L, Ls)),                  # src mask
            full((B * Ls, D)),                 # enc_output (bf16, resident)
            per_l((1, 2, D, n_head * d_k)),    # W_q (self|cross, lane-dense, pre-scaled)
            per_l((1, 2, D, n_head * d_k)),    # W_k
            per_l((1, 2, D, n_head * d_v)),    # W_v
            per_l((1, 2, n_head * d_v, D)),    # W_o
            per_l((1, 2, D)),                  # attention LN gamma (self, cross)
            per_l((1, 2, D)),                  # attention LN beta
            per_l((1, D, d_ff)),               # FFN w1
            per_l((1, 1, d_ff)),               # FFN b1
            per_l((1, d_ff, D)),               # FFN w2
            per_l((1, 1, D)),                  # FFN b2
            per_l((1, 1, D)),                  # FFN LN gamma
            per_l((1, 1, D)),                  # FFN LN beta
        ],
        # Constant out index across the layer axis -> VMEM-resident residual carry.
        out_specs=pl.BlockSpec((B * L, D), lambda l: (0, 0)),
    )

    kernel = functools.partial(decoder_stack_kernel, B=B, L=L, Ls=Ls,
                               n_head=n_head, d_k=d_k, d_v=d_v)
    out = pl.pallas_call(
        kernel,
        out_shape=jax.ShapeDtypeStruct((B * L, D), jnp.float32),
        grid_spec=grid_spec,
        compiler_params=pltpu.CompilerParams(
            dimension_semantics=("arbitrary",),   # layers are sequential
            vmem_limit_bytes=_vmem_limit_bytes(B, L, Ls, D, d_ff, n_head, d_k, d_v)),
    )(x0, tmask, smask, enc_flat,
      pk['wq'], pk['wk'], pk['wv'], pk['wo'], pk['ag'], pk['ab'],
      pk['w1'], pk['b1'], pk['w2'], pk['b2'], pk['fg'], pk['fb'])
    return (out.reshape(B, L, D),)


# -------------------------- pure-JAX reference (f32) ----------------------------

def reference_forward(params, trg_seq, trg_mask, enc_output, src_mask, *,
                      scale_emb, d_model, n_head, d_k, d_v):
    def ln(x, g, b):
        m = jnp.mean(x, -1, keepdims=True)
        v = jnp.mean((x - m) ** 2, -1, keepdims=True)
        return (x - m) / jnp.sqrt(v + EPS) * g + b

    def mha(xq, xkv, mask, p):
        B, Lq, _ = xq.shape
        Lk = xkv.shape[1]
        q = (xq @ p['wq']).reshape(B, Lq, n_head, d_k).transpose(0, 2, 1, 3)
        k = (xkv @ p['wk']).reshape(B, Lk, n_head, d_k).transpose(0, 2, 1, 3)
        v = (xkv @ p['wv']).reshape(B, Lk, n_head, d_v).transpose(0, 2, 1, 3)
        s = jnp.einsum('bhqd,bhkd->bhqk', q, k) / (d_k ** 0.5)
        s = jnp.where(mask[:, None] == 0, NEG_INF, s)
        a = jax.nn.softmax(s, axis=-1)
        o = jnp.einsum('bhqk,bhkd->bhqd', a, v).transpose(0, 2, 1, 3)
        o = o.reshape(B, Lq, n_head * d_v)
        return ln(o @ p['wo'] + xq, p['ln_g'], p['ln_b'])

    def ffn(x, p):
        h = jax.nn.relu(x @ p['w1'] + p['b1'])
        return ln(h @ p['w2'] + p['b2'] + x, p['ln_g'], p['ln_b'])

    x = jnp.take(params['embedding'], trg_seq, axis=0)
    if scale_emb:
        x = x * (d_model ** 0.5)
    x = x + params['pos_table'][:trg_seq.shape[1]][None]
    x = ln(x, params['ln_g'], params['ln_b'])
    for lp in params['layers']:
        x = mha(x, x, trg_mask, lp['self_attn'])
        x = mha(x, enc_output, src_mask, lp['cross_attn'])
        x = ffn(x, lp['ffn'])
    return x


# ---------------------------------- main ----------------------------------------

if __name__ == "__main__":
    # small config
    vocab_size, d_model, d_ff = 50, 32, 64
    n_head, d_k, d_v = 4, 8, 8
    n_layer, n_position, pad_idx = 2, 200, 0
    scale_emb = True
    B, L_trg, L_src = 2, 8, 8

    root = jax.random.PRNGKey(0)
    k_par, k_seq, k_enc = jax.random.split(root, 3)

    params = init_params(k_par, vocab_size=vocab_size, d_model=d_model, d_ff=d_ff,
                         n_head=n_head, d_k=d_k, d_v=d_v, n_layer=n_layer,
                         n_position=n_position, pad_idx=pad_idx)

    trg_seq = jax.random.randint(k_seq, (B, L_trg), 1, vocab_size, dtype=jnp.int32)
    trg_seq = trg_seq.at[1, -2:].set(pad_idx)  # some padding in batch 1
    enc_output = jax.random.normal(k_enc, (B, L_src, d_model), dtype=jnp.float32)

    # masks (float {0,1}), pre-broadcast over the head dim like mask.unsqueeze(1)
    pad = (trg_seq != pad_idx).astype(jnp.float32)[:, None, :]          # (B, 1, L)
    subseq = jnp.tril(jnp.ones((L_trg, L_trg), jnp.float32))[None]      # (1, L, L)
    trg_mask = pad * subseq                                             # (B, L, L)
    src_valid = jnp.ones((B, L_src), jnp.float32).at[1, -3:].set(0.0)   # (B, Ls)
    src_mask = jnp.broadcast_to(src_valid[:, None, :], (B, L_trg, L_src))

    (out,) = decoder_forward(params, trg_seq, trg_mask, enc_output, src_mask,
                             scale_emb=scale_emb, d_model=d_model,
                             n_head=n_head, d_k=d_k, d_v=d_v)
    jax.block_until_ready(out)

    ref = reference_forward(params, trg_seq, trg_mask, enc_output, src_mask,
                            scale_emb=scale_emb, d_model=d_model,
                            n_head=n_head, d_k=d_k, d_v=d_v)

    assert out.shape == (B, L_trg, d_model)
    assert bool(jnp.all(jnp.isfinite(out)))
    max_err = float(jnp.max(jnp.abs(out - ref)))
    assert max_err < 0.2, f"max |kernel - reference| = {max_err}"  # bf16-MXU tolerance
    print("KERNEL_OK")
</pallas_src>

<mosaic_0001>
module attributes {stable_mosaic.version = 11 : i64} {
  func.func @decoder_stack_kernel(%arg0: i32, %arg1: memref<16x32xf32, #tpu.memory_space<vmem>>, %arg2: memref<2x8x8xbf16, #tpu.memory_space<vmem>>, %arg3: memref<2x8x8xbf16, #tpu.memory_space<vmem>>, %arg4: memref<16x32xbf16, #tpu.memory_space<vmem>>, %arg5: memref<1x2x32x32xbf16, #tpu.memory_space<vmem>>, %arg6: memref<1x2x32x32xbf16, #tpu.memory_space<vmem>>, %arg7: memref<1x2x32x32xbf16, #tpu.memory_space<vmem>>, %arg8: memref<1x2x32x32xbf16, #tpu.memory_space<vmem>>, %arg9: memref<1x2x32xf32, #tpu.memory_space<vmem>>, %arg10: memref<1x2x32xf32, #tpu.memory_space<vmem>>, %arg11: memref<1x32x64xbf16, #tpu.memory_space<vmem>>, %arg12: memref<1x1x64xf32, #tpu.memory_space<vmem>>, %arg13: memref<1x64x32xbf16, #tpu.memory_space<vmem>>, %arg14: memref<1x1x32xf32, #tpu.memory_space<vmem>>, %arg15: memref<1x1x32xf32, #tpu.memory_space<vmem>>, %arg16: memref<1x1x32xf32, #tpu.memory_space<vmem>>, %arg17: memref<16x32xf32, #tpu.memory_space<vmem>>) attributes {dimension_semantics = [#tpu.dimension_semantics<arbitrary>], iteration_bounds = array<i64: 2>, scalar_prefetch = 0 : i64, scratch_operands = 0 : i64, tpu.core_type = #tpu.core_type<tc>, window_params = [{pipeline_mode = #tpu.pipeline_mode<synchronous>, transform_indices = @transform_0, window_bounds = array<i64: 16, 32>}, {pipeline_mode = #tpu.pipeline_mode<synchronous>, transform_indices = @transform_1, window_bounds = array<i64: 2, 8, 8>}, {pipeline_mode = #tpu.pipeline_mode<synchronous>, transform_indices = @transform_2, window_bounds = array<i64: 2, 8, 8>}, {pipeline_mode = #tpu.pipeline_mode<synchronous>, transform_indices = @transform_3, window_bounds = array<i64: 16, 32>}, {transform_indices = @transform_4, window_bounds = array<i64: 1, 2, 32, 32>}, {transform_indices = @transform_5, window_bounds = array<i64: 1, 2, 32, 32>}, {transform_indices = @transform_6, window_bounds = array<i64: 1, 2, 32, 32>}, {transform_indices = @transform_7, window_bounds = array<i64: 1, 2, 32, 32>}, {transform_indices = @transform_8, window_bounds = array<i64: 1, 2, 32>}, {transform_indices = @transform_9, window_bounds = array<i64: 1, 2, 32>}, {transform_indices = @transform_10, window_bounds = array<i64: 1, 32, 64>}, {transform_indices = @transform_11, window_bounds = array<i64: 1, 1, 64>}, {transform_indices = @transform_12, window_bounds = array<i64: 1, 64, 32>}, {transform_indices = @transform_13, window_bounds = array<i64: 1, 1, 32>}, {transform_indices = @transform_14, window_bounds = array<i64: 1, 1, 32>}, {transform_indices = @transform_15, window_bounds = array<i64: 1, 1, 32>}, {pipeline_mode = #tpu.pipeline_mode<synchronous>, transform_indices = @transform_16, window_bounds = array<i64: 16, 32>}]} {
    %c0_i32 = arith.constant 0 : i32
    %0 = arith.cmpi eq, %arg0, %c0_i32 : i32
    %1 = arith.extui %0 : i1 to i32
    %c0_i32_0 = arith.constant 0 : i32
    %2 = arith.cmpi ne, %1, %c0_i32_0 : i32
    scf.if %2 {
      %c0_182 = arith.constant 0 : index
      %c0_183 = arith.constant 0 : index
      %509 = vector.load %arg1[%c0_182, %c0_183] : memref<16x32xf32, #tpu.memory_space<vmem>>, vector<16x32xf32>
      %c0_184 = arith.constant 0 : index
      %c0_185 = arith.constant 0 : index
      %510 = vector.load %arg17[%c0_184, %c0_185] : memref<16x32xf32, #tpu.memory_space<vmem>>, vector<16x32xf32>
      tpu.vector_store %arg17[%c0_184, %c0_185], %509 {strides = array<i32>} : memref<16x32xf32, #tpu.memory_space<vmem>>, vector<16x32xf32>,
    } else {
    }
    %c0 = arith.constant 0 : index
    %c0_1 = arith.constant 0 : index
    %3 = vector.load %arg17[%c0, %c0_1] : memref<16x32xf32, #tpu.memory_space<vmem>>, vector<16x32xf32>
    %c0_2 = arith.constant 0 : index
    %c0_3 = arith.constant 0 : index
    %c0_4 = arith.constant 0 : index
    %4 = vector.load %arg2[%c0_2, %c0_3, %c0_4] : memref<2x8x8xbf16, #tpu.memory_space<vmem>>, vector<2x8x8xbf16>
    %c0_5 = arith.constant 0 : index
    %c0_6 = arith.constant 0 : index
    %c0_7 = arith.constant 0 : index
    %5 = vector.load %arg3[%c0_5, %c0_6, %c0_7] : memref<2x8x8xbf16, #tpu.memory_space<vmem>>, vector<2x8x8xbf16>
    %c0_8 = arith.constant 0 : index
    %c0_9 = arith.constant 0 : index
    %6 = vector.load %arg4[%c0_8, %c0_9] : memref<16x32xbf16, #tpu.memory_space<vmem>>, vector<16x32xbf16>
    %7 = arith.truncf %3 : vector<16x32xf32> to vector<16x32xbf16>
    %c0_10 = arith.constant 0 : index
    %c0_11 = arith.constant 0 : index
    %c0_12 = arith.constant 0 : index
    %c0_13 = arith.constant 0 : index
    %8 = vector.load %arg5[%c0_10, %c0_11, %c0_12, %c0_13] : memref<1x2x32x32xbf16, #tpu.memory_space<vmem>>, vector<1x1x32x32xbf16>
    %9 = vector.shape_cast %8 : vector<1x1x32x32xbf16> to vector<32x32xbf16>
    %c0_14 = arith.constant 0 : index
    %c0_15 = arith.constant 0 : index
    %c0_16 = arith.constant 0 : index
    %c0_17 = arith.constant 0 : index
    %10 = vector.load %arg6[%c0_14, %c0_15, %c0_16, %c0_17] : memref<1x2x32x32xbf16, #tpu.memory_space<vmem>>, vector<1x1x32x32xbf16>
    %11 = vector.shape_cast %10 : vector<1x1x32x32xbf16> to vector<32x32xbf16>
    %c0_18 = arith.constant 0 : index
    %c0_19 = arith.constant 0 : index
    %c0_20 = arith.constant 0 : index
    %c0_21 = arith.constant 0 : index
    %12 = vector.load %arg7[%c0_18, %c0_19, %c0_20, %c0_21] : memref<1x2x32x32xbf16, #tpu.memory_space<vmem>>, vector<1x1x32x32xbf16>
    %13 = vector.shape_cast %12 : vector<1x1x32x32xbf16> to vector<32x32xbf16>
    %c0_22 = arith.constant 0 : index
    %c0_23 = arith.constant 0 : index
    %c0_24 = arith.constant 0 : index
    %c0_25 = arith.constant 0 : index
    %14 = vector.load %arg8[%c0_22, %c0_23, %c0_24, %c0_25] : memref<1x2x32x32xbf16, #tpu.memory_space<vmem>>, vector<1x1x32x32xbf16>
    %15 = vector.shape_cast %14 : vector<1x1x32x32xbf16> to vector<32x32xbf16>
    %c0_26 = arith.constant 0 : index
    %c0_27 = arith.constant 0 : index
    %c0_28 = arith.constant 0 : index
    %16 = vector.load %arg9[%c0_26, %c0_27, %c0_28] : memref<1x2x32xf32, #tpu.memory_space<vmem>>, vector<1x1x32xf32>
    %17 = vector.shape_cast %16 : vector<1x1x32xf32> to vector<32xf32>
    %c0_29 = arith.constant 0 : index
    %c0_30 = arith.constant 0 : index
    %c0_31 = arith.constant 0 : index
    %18 = vector.load %arg10[%c0_29, %c0_30, %c0_31] : memref<1x2x32xf32, #tpu.memory_space<vmem>>, vector<1x1x32xf32>
    %19 = vector.shape_cast %18 : vector<1x1x32xf32> to vector<32xf32>
    %cst = arith.constant dense<0.000000e+00> : vector<16x32xf32>
    %20 = tpu.matmul %7, %9, %cst {dimension_numbers = #tpu.dot_dimension_numbers<[1], [0], [0], [1], [0, 0, 1, 1], [], []>} : vector<16x32xbf16>, vector<32x32xbf16>, vector<16x32xf32> -> vector<16x32xf32>
    %cst_32 = arith.constant dense<0.000000e+00> : vector<16x32xf32>
    %21 = tpu.matmul %7, %11, %cst_32 {dimension_numbers = #tpu.dot_dimension_numbers<[1], [0], [0], [1], [0, 0, 1, 1], [], []>} : vector<16x32xbf16>, vector<32x32xbf16>, vector<16x32xf32> -> vector<16x32xf32>
    %cst_33 = arith.constant dense<0.000000e+00> : vector<16x32xf32>
    %22 = tpu.matmul %7, %13, %cst_33 {dimension_numbers = #tpu.dot_dimension_numbers<[1], [0], [0], [1], [0, 0, 1, 1], [], []>} : vector<16x32xbf16>, vector<32x32xbf16>, vector<16x32xf32> -> vector<16x32xf32>
    %23 = vector.extract_strided_slice %20 {offsets = [0, 0], sizes = [8, 32], strides = [1, 1]} : vector<16x32xf32> to vector<8x32xf32>
    %24 = vector.extract_strided_slice %21 {offsets = [0, 0], sizes = [8, 32], strides = [1, 1]} : vector<16x32xf32> to vector<8x32xf32>
    %25 = vector.extract_strided_slice %22 {offsets = [0, 0], sizes = [8, 32], strides = [1, 1]} : vector<16x32xf32> to vector<8x32xf32>
    %26 = vector.extract_strided_slice %4 {offsets = [0, 0, 0], sizes = [1, 8, 8], strides = [1, 1, 1]} : vector<2x8x8xbf16> to vector<1x8x8xbf16>
    %27 = vector.shape_cast %26 : vector<1x8x8xbf16> to vector<8x8xbf16>
    %cst_34 = arith.constant 0.000000e+00 : bf16
    %28 = vector.broadcast %cst_34 : bf16 to vector<8x8xbf16>
    %29 = arith.cmpf one, %27, %28 : vector<8x8xbf16>
    %30 = vector.extract_strided_slice %23 {offsets = [0, 0], sizes = [8, 8], strides = [1, 1]} : vector<8x32xf32> to vector<8x8xf32>
    %31 = arith.truncf %30 : vector<8x8xf32> to vector<8x8xbf16>
    %32 = vector.extract_strided_slice %24 {offsets = [0, 0], sizes = [8, 8], strides = [1, 1]} : vector<8x32xf32> to vector<8x8xf32>
    %33 = arith.truncf %32 : vector<8x8xf32> to vector<8x8xbf16>
    %34 = vector.extract_strided_slice %25 {offsets = [0, 0], sizes = [8, 8], strides = [1, 1]} : vector<8x32xf32> to vector<8x8xf32>
    %35 = arith.truncf %34 : vector<8x8xf32> to vector<8x8xbf16>
    %cst_35 = arith.constant dense<0.000000e+00> : vector<8x8xf32>
    %36 = tpu.matmul %31, %33, %cst_35 {dimension_numbers = #tpu.dot_dimension_numbers<[1], [1], [0], [0], [0, 0, 1, 0], [], []>} : vector<8x8xbf16>, vector<8x8xbf16>, vector<8x8xf32> -> vector<8x8xf32>
    %cst_36 = arith.constant -1.000000e+09 : f32
    %37 = vector.broadcast %cst_36 : f32 to vector<8x8xf32>
    %38 = arith.select %29, %36, %37 : vector<8x8xi1>, vector<8x8xf32>
    %cst_37 = arith.constant dense<0xFF800000> : vector<8xf32>
    %39 = vector.multi_reduction <maximumf>, %38, %cst_37 [1] : vector<8x8xf32> to vector<8xf32>
    %40 = vector.shape_cast %39 : vector<8xf32> to vector<8x1xf32>
    %41 = vector.broadcast %40 : vector<8x1xf32> to vector<8x8xf32>
    %42 = arith.subf %38, %41 : vector<8x8xf32>
    %43 = math.exp %42 : vector<8x8xf32>
    %cst_38 = arith.constant dense<0.000000e+00> : vector<8xf32>
    %44 = vector.multi_reduction <add>, %43, %cst_38 [1] : vector<8x8xf32> to vector<8xf32>
    %45 = vector.shape_cast %44 : vector<8xf32> to vector<8x1xf32>
    %46 = tpu.reciprocal %45 {approx = true} : vector<8x1xf32> -> vector<8x1xf32>
    %47 = vector.broadcast %46 : vector<8x1xf32> to vector<8x8xf32>
    %48 = arith.mulf %43, %47 : vector<8x8xf32>
    %49 = arith.truncf %48 : vector<8x8xf32> to vector<8x8xbf16>
    %cst_39 = arith.constant dense<0.000000e+00> : vector<8x8xf32>
    %50 = tpu.matmul %49, %35, %cst_39 {dimension_numbers = #tpu.dot_dimension_numbers<[1], [0], [0], [1], [0, 0, 1, 1], [], []>} : vector<8x8xbf16>, vector<8x8xbf16>, vector<8x8xf32> -> vector<8x8xf32>
    %51 = vector.extract_strided_slice %23 {offsets = [0, 8], sizes = [8, 8], strides = [1, 1]} : vector<8x32xf32> to vector<8x8xf32>
    %52 = arith.truncf %51 : vector<8x8xf32> to vector<8x8xbf16>
    %53 = vector.extract_strided_slice %24 {offsets = [0, 8], sizes = [8, 8], strides = [1, 1]} : vector<8x32xf32> to vector<8x8xf32>
    %54 = arith.truncf %53 : vector<8x8xf32> to vector<8x8xbf16>
    %55 = vector.extract_strided_slice %25 {offsets = [0, 8], sizes = [8, 8], strides = [1, 1]} : vector<8x32xf32> to vector<8x8xf32>
    %56 = arith.truncf %55 : vector<8x8xf32> to vector<8x8xbf16>
    %cst_40 = arith.constant dense<0.000000e+00> : vector<8x8xf32>
    %57 = tpu.matmul %52, %54, %cst_40 {dimension_numbers = #tpu.dot_dimension_numbers<[1], [1], [0], [0], [0, 0, 1, 0], [], []>} : vector<8x8xbf16>, vector<8x8xbf16>, vector<8x8xf32> -> vector<8x8xf32>
    %cst_41 = arith.constant -1.000000e+09 : f32
    %58 = vector.broadcast %cst_41 : f32 to vector<8x8xf32>
    %59 = arith.select %29, %57, %58 : vector<8x8xi1>, vector<8x8xf32>
    %cst_42 = arith.constant dense<0xFF800000> : vector<8xf32>
    %60 = vector.multi_reduction <maximumf>, %59, %cst_42 [1] : vector<8x8xf32> to vector<8xf32>
    %61 = vector.shape_cast %60 : vector<8xf32> to vector<8x1xf32>
    %62 = vector.broadcast %61 : vector<8x1xf32> to vector<8x8xf32>
    %63 = arith.subf %59, %62 : vector<8x8xf32>
    %64 = math.exp %63 : vector<8x8xf32>
    %cst_43 = arith.constant dense<0.000000e+00> : vector<8xf32>
    %65 = vector.multi_reduction <add>, %64, %cst_43 [1] : vector<8x8xf32> to vector<8xf32>
    %66 = vector.shape_cast %65 : vector<8xf32> to vector<8x1xf32>
    %67 = tpu.reciprocal %66 {approx = true} : vector<8x1xf32> -> vector<8x1xf32>
    %68 = vector.broadcast %67 : vector<8x1xf32> to vector<8x8xf32>
    %69 = arith.mulf %64, %68 : vector<8x8xf32>
    %70 = arith.truncf %69 : vector<8x8xf32> to vector<8x8xbf16>
    %cst_44 = arith.constant dense<0.000000e+00> : vector<8x8xf32>
    %71 = tpu.matmul %70, %56, %cst_44 {dimension_numbers = #tpu.dot_dimension_numbers<[1], [0], [0], [1], [0, 0, 1, 1], [], []>} : vector<8x8xbf16>, vector<8x8xbf16>, vector<8x8xf32> -> vector<8x8xf32>
    %72 = vector.extract_strided_slice %23 {offsets = [0, 16], sizes = [8, 8], strides = [1, 1]} : vector<8x32xf32> to vector<8x8xf32>
    %73 = arith.truncf %72 : vector<8x8xf32> to vector<8x8xbf16>
    %74 = vector.extract_strided_slice %24 {offsets = [0, 16], sizes = [8, 8], strides = [1, 1]} : vector<8x32xf32> to vector<8x8xf32>
    %75 = arith.truncf %74 : vector<8x8xf32> to vector<8x8xbf16>
    %76 = vector.extract_strided_slice %25 {offsets = [0, 16], sizes = [8, 8], strides = [1, 1]} : vector<8x32xf32> to vector<8x8xf32>
    %77 = arith.truncf %76 : vector<8x8xf32> to vector<8x8xbf16>
    %cst_45 = arith.constant dense<0.000000e+00> : vector<8x8xf32>
    %78 = tpu.matmul %73, %75, %cst_45 {dimension_numbers = #tpu.dot_dimension_numbers<[1], [1], [0], [0], [0, 0, 1, 0], [], []>} : vector<8x8xbf16>, vector<8x8xbf16>, vector<8x8xf32> -> vector<8x8xf32>
    %cst_46 = arith.constant -1.000000e+09 : f32
    %79 = vector.broadcast %cst_46 : f32 to vector<8x8xf32>
    %80 = arith.select %29, %78, %79 : vector<8x8xi1>, vector<8x8xf32>
    %cst_47 = arith.constant dense<0xFF800000> : vector<8xf32>
    %81 = vector.multi_reduction <maximumf>, %80, %cst_47 [1] : vector<8x8xf32> to vector<8xf32>
    %82 = vector.shape_cast %81 : vector<8xf32> to vector<8x1xf32>
    %83 = vector.broadcast %82 : vector<8x1xf32> to vector<8x8xf32>
    %84 = arith.subf %80, %83 : vector<8x8xf32>
    %85 = math.exp %84 : vector<8x8xf32>
    %cst_48 = arith.constant dense<0.000000e+00> : vector<8xf32>
    %86 = vector.multi_reduction <add>, %85, %cst_48 [1] : vector<8x8xf32> to vector<8xf32>
    %87 = vector.shape_cast %86 : vector<8xf32> to vector<8x1xf32>
    %88 = tpu.reciprocal %87 {approx = true} : vector<8x1xf32> -> vector<8x1xf32>
    %89 = vector.broadcast %88 : vector<8x1xf32> to vector<8x8xf32>
    %90 = arith.mulf %85, %89 : vector<8x8xf32>
    %91 = arith.truncf %90 : vector<8x8xf32> to vector<8x8xbf16>
    %cst_49 = arith.constant dense<0.000000e+00> : vector<8x8xf32>
    %92 = tpu.matmul %91, %77, %cst_49 {dimension_numbers = #tpu.dot_dimension_numbers<[1], [0], [0], [1], [0, 0, 1, 1], [], []>} : vector<8x8xbf16>, vector<8x8xbf16>, vector<8x8xf32> -> vector<8x8xf32>
    %93 = vector.extract_strided_slice %23 {offsets = [0, 24], sizes = [8, 8], strides = [1, 1]} : vector<8x32xf32> to vector<8x8xf32>
    %94 = arith.truncf %93 : vector<8x8xf32> to vector<8x8xbf16>
    %95 = vector.extract_strided_slice %24 {offsets = [0, 24], sizes = [8, 8], strides = [1, 1]} : vector<8x32xf32> to vector<8x8xf32>
    %96 = arith.truncf %95 : vector<8x8xf32> to vector<8x8xbf16>
    %97 = vector.extract_strided_slice %25 {offsets = [0, 24], sizes = [8, 8], strides = [1, 1]} : vector<8x32xf32> to vector<8x8xf32>
    %98 = arith.truncf %97 : vector<8x8xf32> to vector<8x8xbf16>
    %cst_50 = arith.constant dense<0.000000e+00> : vector<8x8xf32>
    %99 = tpu.matmul %94, %96, %cst_50 {dimension_numbers = #tpu.dot_dimension_numbers<[1], [1], [0], [0], [0, 0, 1, 0], [], []>} : vector<8x8xbf16>, vector<8x8xbf16>, vector<8x8xf32> -> vector<8x8xf32>
    %cst_51 = arith.constant -1.000000e+09 : f32
    %100 = vector.broadcast %cst_51 : f32 to vector<8x8xf32>
    %101 = arith.select %29, %99, %100 : vector<8x8xi1>, vector<8x8xf32>
    %cst_52 = arith.constant dense<0xFF800000> : vector<8xf32>
    %102 = vector.multi_reduction <maximumf>, %101, %cst_52 [1] : vector<8x8xf32> to vector<8xf32>
    %103 = vector.shape_cast %102 : vector<8xf32> to vector<8x1xf32>
    %104 = vector.broadcast %103 : vector<8x1xf32> to vector<8x8xf32>
    %105 = arith.subf %101, %104 : vector<8x8xf32>
    %106 = math.exp %105 : vector<8x8xf32>
    %cst_53 = arith.constant dense<0.000000e+00> : vector<8xf32>
    %107 = vector.multi_reduction <add>, %106, %cst_53 [1] : vector<8x8xf32> to vector<8xf32>
    %108 = vector.shape_cast %107 : vector<8xf32> to vector<8x1xf32>
    %109 = tpu.reciprocal %108 {approx = true} : vector<8x1xf32> -> vector<8x1xf32>
    %110 = vector.broadcast %109 : vector<8x1xf32> to vector<8x8xf32>
    %111 = arith.mulf %106, %110 : vector<8x8xf32>
    %112 = arith.truncf %111 : vector<8x8xf32> to vector<8x8xbf16>
    %cst_54 = arith.constant dense<0.000000e+00> : vector<8x8xf32>
    %113 = tpu.matmul %112, %98, %cst_54 {dimension_numbers = #tpu.dot_dimension_numbers<[1], [0], [0], [1], [0, 0, 1, 1], [], []>} : vector<8x8xbf16>, vector<8x8xbf16>, vector<8x8xf32> -> vector<8x8xf32>
    %114 = tpu.concatenate %50, %71, %92, %113 in 1 : vector<8x8xf32>, vector<8x8xf32>, vector<8x8xf32>, vector<8x8xf32> -> vector<8x32xf32>
    %115 = vector.extract_strided_slice %20 {offsets = [8, 0], sizes = [8, 32], strides = [1, 1]} : vector<16x32xf32> to vector<8x32xf32>
    %116 = vector.extract_strided_slice %21 {offsets = [8, 0], sizes = [8, 32], strides = [1, 1]} : vector<16x32xf32> to vector<8x32xf32>
    %117 = vector.extract_strided_slice %22 {offsets = [8, 0], sizes = [8, 32], strides = [1, 1]} : vector<16x32xf32> to vector<8x32xf32>
    %118 = vector.extract_strided_slice %4 {offsets = [1, 0, 0], sizes = [1, 8, 8], strides = [1, 1, 1]} : vector<2x8x8xbf16> to vector<1x8x8xbf16>
    %119 = vector.shape_cast %118 : vector<1x8x8xbf16> to vector<8x8xbf16>
    %cst_55 = arith.constant 0.000000e+00 : bf16
    %120 = vector.broadcast %cst_55 : bf16 to vector<8x8xbf16>
    %121 = arith.cmpf one, %119, %120 : vector<8x8xbf16>
    %122 = vector.extract_strided_slice %115 {offsets = [0, 0], sizes = [8, 8], strides = [1, 1]} : vector<8x32xf32> to vector<8x8xf32>
    %123 = arith.truncf %122 : vector<8x8xf32> to vector<8x8xbf16>
    %124 = vector.extract_strided_slice %116 {offsets = [0, 0], sizes = [8, 8], strides = [1, 1]} : vector<8x32xf32> to vector<8x8xf32>
    %125 = arith.truncf %124 : vector<8x8xf32> to vector<8x8xbf16>
    %126 = vector.extract_strided_slice %117 {offsets = [0, 0], sizes = [8, 8], strides = [1, 1]} : vector<8x32xf32> to vector<8x8xf32>
    %127 = arith.truncf %126 : vector<8x8xf32> to vector<8x8xbf16>
    %cst_56 = arith.constant dense<0.000000e+00> : vector<8x8xf32>
    %128 = tpu.matmul %123, %125, %cst_56 {dimension_numbers = #tpu.dot_dimension_numbers<[1], [1], [0], [0], [0, 0, 1, 0], [], []>} : vector<8x8xbf16>, vector<8x8xbf16>, vector<8x8xf32> -> vector<8x8xf32>
    %cst_57 = arith.constant -1.000000e+09 : f32
    %129 = vector.broadcast %cst_57 : f32 to vector<8x8xf32>
    %130 = arith.select %121, %128, %129 : vector<8x8xi1>, vector<8x8xf32>
    %cst_58 = arith.constant dense<0xFF800000> : vector<8xf32>
    %131 = vector.multi_reduction <maximumf>, %130, %cst_58 [1] : vector<8x8xf32> to vector<8xf32>
    %132 = vector.shape_cast %131 : vector<8xf32> to vector<8x1xf32>
    %133 = vector.broadcast %132 : vector<8x1xf32> to vector<8x8xf32>
    %134 = arith.subf %130, %133 : vector<8x8xf32>
    %135 = math.exp %134 : vector<8x8xf32>
    %cst_59 = arith.constant dense<0.000000e+00> : vector<8xf32>
    %136 = vector.multi_reduction <add>, %135, %cst_59 [1] : vector<8x8xf32> to vector<8xf32>
    %137 = vector.shape_cast %136 : vector<8xf32> to vector<8x1xf32>
    %138 = tpu.reciprocal %137 {approx = true} : vector<8x1xf32> -> vector<8x1xf32>
    %139 = vector.broadcast %138 : vector<8x1xf32> to vector<8x8xf32>
    %140 = arith.mulf %135, %139 : vector<8x8xf32>
    %141 = arith.truncf %140 : vector<8x8xf32> to vector<8x8xbf16>
    %cst_60 = arith.constant dense<0.000000e+00> : vector<8x8xf32>
    %142 = tpu.matmul %141, %127, %cst_60 {dimension_numbers = #tpu.dot_dimension_numbers<[1], [0], [0], [1], [0, 0, 1, 1], [], []>} : vector<8x8xbf16>, vector<8x8xbf16>, vector<8x8xf32> -> vector<8x8xf32>
    %143 = vector.extract_strided_slice %115 {offsets = [0, 8], sizes = [8, 8], strides = [1, 1]} : vector<8x32xf32> to vector<8x8xf32>
    %144 = arith.truncf %143 : vector<8x8xf32> to vector<8x8xbf16>
    %145 = vector.extract_strided_slice %116 {offsets = [0, 8], sizes = [8, 8], strides = [1, 1]} : vector<8x32xf32> to vector<8x8xf32>
    %146 = arith.truncf %145 : vector<8x8xf32> to vector<8x8xbf16>
    %147 = vector.extract_strided_slice %117 {offsets = [0, 8], sizes = [8, 8], strides = [1, 1]} : vector<8x32xf32> to vector<8x8xf32>
    %148 = arith.truncf %147 : vector<8x8xf32> to vector<8x8xbf16>
    %cst_61 = arith.constant dense<0.000000e+00> : vector<8x8xf32>
    %149 = tpu.matmul %144, %146, %cst_61 {dimension_numbers = #tpu.dot_dimension_numbers<[1], [1], [0], [0], [0, 0, 1, 0], [], []>} : vector<8x8xbf16>, vector<8x8xbf16>, vector<8x8xf32> -> vector<8x8xf32>
    %cst_62 = arith.constant -1.000000e+09 : f32
    %150 = vector.broadcast %cst_62 : f32 to vector<8x8xf32>
    %151 = arith.select %121, %149, %150 : vector<8x8xi1>, vector<8x8xf32>
    %cst_63 = arith.constant dense<0xFF800000> : vector<8xf32>
    %152 = vector.multi_reduction <maximumf>, %151, %cst_63 [1] : vector<8x8xf32> to vector<8xf32>
    %153 = vector.shape_cast %152 : vector<8xf32> to vector<8x1xf32>
    %154 = vector.broadcast %153 : vector<8x1xf32> to vector<8x8xf32>
    %155 = arith.subf %151, %154 : vector<8x8xf32>
    %156 = math.exp %155 : vector<8x8xf32>
    %cst_64 = arith.constant dense<0.000000e+00> : vector<8xf32>
    %157 = vector.multi_reduction <add>, %156, %cst_64 [1] : vector<8x8xf32> to vector<8xf32>
    %158 = vector.shape_cast %157 : vector<8xf32> to vector<8x1xf32>
    %159 = tpu.reciprocal %158 {approx = true} : vector<8x1xf32> -> vector<8x1xf32>
    %160 = vector.broadcast %159 : vector<8x1xf32> to vector<8x8xf32>
    %161 = arith.mulf %156, %160 : vector<8x8xf32>
    %162 = arith.truncf %161 : vector<8x8xf32> to vector<8x8xbf16>
    %cst_65 = arith.constant dense<0.000000e+00> : vector<8x8xf32>
    %163 = tpu.matmul %162, %148, %cst_65 {dimension_numbers = #tpu.dot_dimension_numbers<[1], [0], [0], [1], [0, 0, 1, 1], [], []>} : vector<8x8xbf16>, vector<8x8xbf16>, vector<8x8xf32> -> vector<8x8xf32>
    %164 = vector.extract_strided_slice %115 {offsets = [0, 16], sizes = [8, 8], strides = [1, 1]} : vector<8x32xf32> to vector<8x8xf32>
    %165 = arith.truncf %164 : vector<8x8xf32> to vector<8x8xbf16>
    %166 = vector.extract_strided_slice %116 {offsets = [0, 16], sizes = [8, 8], strides = [1, 1]} : vector<8x32xf32> to vector<8x8xf32>
    %167 = arith.truncf %166 : vector<8x8xf32> to vector<8x8xbf16>
    %168 = vector.extract_strided_slice %117 {offsets = [0, 16], sizes = [8, 8], strides = [1, 1]} : vector<8x32xf32> to vector<8x8xf32>
    %169 = arith.truncf %168 : vector<8x8xf32> to vector<8x8xbf16>
    %cst_66 = arith.constant dense<0.000000e+00> : vector<8x8xf32>
    %170 = tpu.matmul %165, %167, %cst_66 {dimension_numbers = #tpu.dot_dimension_numbers<[1], [1], [0], [0], [0, 0, 1, 0], [], []>} : vector<8x8xbf16>, vector<8x8xbf16>, vector<8x8xf32> -> vector<8x8xf32>
    %cst_67 = arith.constant -1.000000e+09 : f32
    %171 = vector.broadcast %cst_67 : f32 to vector<8x8xf32>
    %172 = arith.select %121, %170, %171 : vector<8x8xi1>, vector<8x8xf32>
    %cst_68 = arith.constant dense<0xFF800000> : vector<8xf32>
    %173 = vector.multi_reduction <maximumf>, %172, %cst_68 [1] : vector<8x8xf32> to vector<8xf32>
    %174 = vector.shape_cast %173 : vector<8xf32> to vector<8x1xf32>
    %175 = vector.broadcast %174 : vector<8x1xf32> to vector<8x8xf32>
    %176 = arith.subf %172, %175 : vector<8x8xf32>
    %177 = math.exp %176 : vector<8x8xf32>
    %cst_69 = arith.constant dense<0.000000e+00> : vector<8xf32>
    %178 = vector.multi_reduction <add>, %177, %cst_69 [1] : vector<8x8xf32> to vector<8xf32>
    %179 = vector.shape_cast %178 : vector<8xf32> to vector<8x1xf32>
    %180 = tpu.reciprocal %179 {approx = true} : vector<8x1xf32> -> vector<8x1xf32>
    %181 = vector.broadcast %180 : vector<8x1xf32> to vector<8x8xf32>
    %182 = arith.mulf %177, %181 : vector<8x8xf32>
    %183 = arith.truncf %182 : vector<8x8xf32> to vector<8x8xbf16>
    %cst_70 = arith.constant dense<0.000000e+00> : vector<8x8xf32>
    %184 = tpu.matmul %183, %169, %cst_70 {dimension_numbers = #tpu.dot_dimension_numbers<[1], [0], [0], [1], [0, 0, 1, 1], [], []>} : vector<8x8xbf16>, vector<8x8xbf16>, vector<8x8xf32> -> vector<8x8xf32>
    %185 = vector.extract_strided_slice %115 {offsets = [0, 24], sizes = [8, 8], strides = [1, 1]} : vector<8x32xf32> to vector<8x8xf32>
    %186 = arith.truncf %185 : vector<8x8xf32> to vector<8x8xbf16>
    %187 = vector.extract_strided_slice %116 {offsets = [0, 24], sizes = [8, 8], strides = [1, 1]} : vector<8x32xf32> to vector<8x8xf32>
    %188 = arith.truncf %187 : vector<8x8xf32> to vector<8x8xbf16>
    %189 = vector.extract_strided_slice %117 {offsets = [0, 24], sizes = [8, 8], strides = [1, 1]} : vector<8x32xf32> to vector<8x8xf32>
    %190 = arith.truncf %189 : vector<8x8xf32> to vector<8x8xbf16>
    %cst_71 = arith.constant dense<0.000000e+00> : vector<8x8xf32>
    %191 = tpu.matmul %186, %188, %cst_71 {dimension_numbers = #tpu.dot_dimension_numbers<[1], [1], [0], [0], [0, 0, 1, 0], [], []>} : vector<8x8xbf16>, vector<8x8xbf16>, vector<8x8xf32> -> vector<8x8xf32>
    %cst_72 = arith.constant -1.000000e+09 : f32
    %192 = vector.broadcast %cst_72 : f32 to vector<8x8xf32>
    %193 = arith.select %121, %191, %192 : vector<8x8xi1>, vector<8x8xf32>
    %cst_73 = arith.constant dense<0xFF800000> : vector<8xf32>
    %194 = vector.multi_reduction <maximumf>, %193, %cst_73 [1] : vector<8x8xf32> to vector<8xf32>
    %195 = vector.shape_cast %194 : vector<8xf32> to vector<8x1xf32>
    %196 = vector.broadcast %195 : vector<8x1xf32> to vector<8x8xf32>
    %197 = arith.subf %193, %196 : vector<8x8xf32>
    %198 = math.exp %197 : vector<8x8xf32>
    %cst_74 = arith.constant dense<0.000000e+00> : vector<8xf32>
    %199 = vector.multi_reduction <add>, %198, %cst_74 [1] : vector<8x8xf32> to vector<8xf32>
    %200 = vector.shape_cast %199 : vector<8xf32> to vector<8x1xf32>
    %201 = tpu.reciprocal %200 {approx = true} : vector<8x1xf32> -> vector<8x1xf32>
    %202 = vector.broadcast %201 : vector<8x1xf32> to vector<8x8xf32>
    %203 = arith.mulf %198, %202 : vector<8x8xf32>
    %204 = arith.truncf %203 : vector<8x8xf32> to vector<8x8xbf16>
    %cst_75 = arith.constant dense<0.000000e+00> : vector<8x8xf32>
    %205 = tpu.matmul %204, %190, %cst_75 {dimension_numbers = #tpu.dot_dimension_numbers<[1], [0], [0], [1], [0, 0, 1, 1], [], []>} : vector<8x8xbf16>, vector<8x8xbf16>, vector<8x8xf32> -> vector<8x8xf32>
    %206 = tpu.concatenate %142, %163, %184, %205 in 1 : vector<8x8xf32>, vector<8x8xf32>, vector<8x8xf32>, vector<8x8xf32> -> vector<8x32xf32>
    %207 = tpu.concatenate %114, %206 in 0 : vector<8x32xf32>, vector<8x32xf32> -> vector<16x32xf32>
    %208 = arith.truncf %207 : vector<16x32xf32> to vector<16x32xbf16>
    %cst_76 = arith.constant dense<0.000000e+00> : vector<16x32xf32>
    %209 = tpu.matmul %208, %15, %cst_76 {dimension_numbers = #tpu.dot_dimension_numbers<[1], [0], [0], [1], [0, 0, 1, 1], [], []>} : vector<16x32xbf16>, vector<32x32xbf16>, vector<16x32xf32> -> vector<16x32xf32>
    %210 = arith.addf %209, %3 : vector<16x32xf32>
    %cst_77 = arith.constant dense<0.000000e+00> : vector<16xf32>
    %211 = vector.multi_reduction <add>, %210, %cst_77 [1] : vector<16x32xf32> to vector<16xf32>
    %212 = vector.shape_cast %211 : vector<16xf32> to vector<16x1xf32>
    %cst_78 = arith.constant 3.200000e+01 : f32
    %213 = vector.broadcast %cst_78 : f32 to vector<16x1xf32>
    %214 = arith.divf %212, %213 : vector<16x1xf32>
    %215 = vector.broadcast %214 : vector<16x1xf32> to vector<16x32xf32>
    %216 = arith.subf %210, %215 : vector<16x32xf32>
    %217 = arith.mulf %216, %216 : vector<16x32xf32>
    %cst_79 = arith.constant dense<0.000000e+00> : vector<16xf32>
    %218 = vector.multi_reduction <add>, %217, %cst_79 [1] : vector<16x32xf32> to vector<16xf32>
    %219 = vector.shape_cast %218 : vector<16xf32> to vector<16x1xf32>
    %cst_80 = arith.constant 3.200000e+01 : f32
    %220 = vector.broadcast %cst_80 : f32 to vector<16x1xf32>
    %221 = arith.divf %219, %220 : vector<16x1xf32>
    %222 = vector.broadcast %214 : vector<16x1xf32> to vector<16x32xf32>
    %223 = arith.subf %210, %222 : vector<16x32xf32>
    %cst_81 = arith.constant 9.99999997E-7 : f32
    %224 = vector.broadcast %cst_81 : f32 to vector<16x1xf32>
    %225 = arith.addf %221, %224 : vector<16x1xf32>
    %226 = math.rsqrt %225 : vector<16x1xf32>
    %227 = vector.broadcast %226 : vector<16x1xf32> to vector<16x32xf32>
    %228 = arith.mulf %223, %227 : vector<16x32xf32>
    %229 = vector.shape_cast %17 : vector<32xf32> to vector<1x32xf32>
    %230 = vector.broadcast %229 : vector<1x32xf32> to vector<16x32xf32>
    %231 = arith.mulf %228, %230 : vector<16x32xf32>
    %232 = vector.shape_cast %19 : vector<32xf32> to vector<1x32xf32>
    %233 = vector.broadcast %232 : vector<1x32xf32> to vector<16x32xf32>
    %234 = arith.addf %231, %233 : vector<16x32xf32>
    %235 = arith.truncf %234 : vector<16x32xf32> to vector<16x32xbf16>
    %c0_82 = arith.constant 0 : index
    %c1 = arith.constant 1 : index
    %c0_83 = arith.constant 0 : index
    %c0_84 = arith.constant 0 : index
    %236 = vector.load %arg5[%c0_82, %c1, %c0_83, %c0_84] : memref<1x2x32x32xbf16, #tpu.memory_space<vmem>>, vector<1x1x32x32xbf16>
    %237 = vector.shape_cast %236 : vector<1x1x32x32xbf16> to vector<32x32xbf16>
    %c0_85 = arith.constant 0 : index
    %c1_86 = arith.constant 1 : index
    %c0_87 = arith.constant 0 : index
    %c0_88 = arith.constant 0 : index
    %238 = vector.load %arg6[%c0_85, %c1_86, %c0_87, %c0_88] : memref<1x2x32x32xbf16, #tpu.memory_space<vmem>>, vector<1x1x32x32xbf16>
    %239 = vector.shape_cast %238 : vector<1x1x32x32xbf16> to vector<32x32xbf16>
    %c0_89 = arith.constant 0 : index
    %c1_90 = arith.constant 1 : index
    %c0_91 = arith.constant 0 : index
    %c0_92 = arith.constant 0 : index
    %240 = vector.load %arg7[%c0_89, %c1_90, %c0_91, %c0_92] : memref<1x2x32x32xbf16, #tpu.memory_space<vmem>>, vector<1x1x32x32xbf16>
    %241 = vector.shape_cast %240 : vector<1x1x32x32xbf16> to vector<32x32xbf16>
    %c0_93 = arith.constant 0 : index
    %c1_94 = arith.constant 1 : index
    %c0_95 = arith.constant 0 : index
    %c0_96 = arith.constant 0 : index
    %242 = vector.load %arg8[%c0_93, %c1_94, %c0_95, %c0_96] : memref<1x2x32x32xbf16, #tpu.memory_space<vmem>>, vector<1x1x32x32xbf16>
    %243 = vector.shape_cast %242 : vector<1x1x32x32xbf16> to vector<32x32xbf16>
    %c0_97 = arith.constant 0 : index
    %c1_98 = arith.constant 1 : index
    %c0_99 = arith.constant 0 : index
    %244 = vector.load %arg9[%c0_97, %c1_98, %c0_99] : memref<1x2x32xf32, #tpu.memory_space<vmem>>, vector<1x1x32xf32>
    %245 = vector.shape_cast %244 : vector<1x1x32xf32> to vector<32xf32>
    %c0_100 = arith.constant 0 : index
    %c1_101 = arith.constant 1 : index
    %c0_102 = arith.constant 0 : index
    %246 = vector.load %arg10[%c0_100, %c1_101, %c0_102] : memref<1x2x32xf32, #tpu.memory_space<vmem>>, vector<1x1x32xf32>
    %247 = vector.shape_cast %246 : vector<1x1x32xf32> to vector<32xf32>
    %cst_103 = arith.constant dense<0.000000e+00> : vector<16x32xf32>
    %248 = tpu.matmul %235, %237, %cst_103 {dimension_numbers = #tpu.dot_dimension_numbers<[1], [0], [0], [1], [0, 0, 1, 1], [], []>} : vector<16x32xbf16>, vector<32x32xbf16>, vector<16x32xf32> -> vector<16x32xf32>
    %cst_104 = arith.constant dense<0.000000e+00> : vector<16x32xf32>
    %249 = tpu.matmul %6, %239, %cst_104 {dimension_numbers = #tpu.dot_dimension_numbers<[1], [0], [0], [1], [0, 0, 1, 1], [], []>} : vector<16x32xbf16>, vector<32x32xbf16>, vector<16x32xf32> -> vector<16x32xf32>
    %cst_105 = arith.constant dense<0.000000e+00> : vector<16x32xf32>
    %250 = tpu.matmul %6, %241, %cst_105 {dimension_numbers = #tpu.dot_dimension_numbers<[1], [0], [0], [1], [0, 0, 1, 1], [], []>} : vector<16x32xbf16>, vector<32x32xbf16>, vector<16x32xf32> -> vector<16x32xf32>
    %251 = vector.extract_strided_slice %248 {offsets = [0, 0], sizes = [8, 32], strides = [1, 1]} : vector<16x32xf32> to vector<8x32xf32>
    %252 = vector.extract_strided_slice %249 {offsets = [0, 0], sizes = [8, 32], strides = [1, 1]} : vector<16x32xf32> to vector<8x32xf32>
    %253 = vector.extract_strided_slice %250 {offsets = [0, 0], sizes = [8, 32], strides = [1, 1]} : vector<16x32xf32> to vector<8x32xf32>
    %254 = vector.extract_strided_slice %5 {offsets = [0, 0, 0], sizes = [1, 8, 8], strides = [1, 1, 1]} : vector<2x8x8xbf16> to vector<1x8x8xbf16>
    %255 = vector.shape_cast %254 : vector<1x8x8xbf16> to vector<8x8xbf16>
    %cst_106 = arith.constant 0.000000e+00 : bf16
    %256 = vector.broadcast %cst_106 : bf16 to vector<8x8xbf16>
    %257 = arith.cmpf one, %255, %256 : vector<8x8xbf16>
    %258 = vector.extract_strided_slice %251 {offsets = [0, 0], sizes = [8, 8], strides = [1, 1]} : vector<8x32xf32> to vector<8x8xf32>
    %259 = arith.truncf %258 : vector<8x8xf32> to vector<8x8xbf16>
    %260 = vector.extract_strided_slice %252 {offsets = [0, 0], sizes = [8, 8], strides = [1, 1]} : vector<8x32xf32> to vector<8x8xf32>
    %261 = arith.truncf %260 : vector<8x8xf32> to vector<8x8xbf16>
    %262 = vector.extract_strided_slice %253 {offsets = [0, 0], sizes = [8, 8], strides = [1, 1]} : vector<8x32xf32> to vector<8x8xf32>
    %263 = arith.truncf %262 : vector<8x8xf32> to vector<8x8xbf16>
    %cst_107 = arith.constant dense<0.000000e+00> : vector<8x8xf32>
    %264 = tpu.matmul %259, %261, %cst_107 {dimension_numbers = #tpu.dot_dimension_numbers<[1], [1], [0], [0], [0, 0, 1, 0], [], []>} : vector<8x8xbf16>, vector<8x8xbf16>, vector<8x8xf32> -> vector<8x8xf32>
    %cst_108 = arith.constant -1.000000e+09 : f32
    %265 = vector.broadcast %cst_108 : f32 to vector<8x8xf32>
    %266 = arith.select %257, %264, %265 : vector<8x8xi1>, vector<8x8xf32>
    %cst_109 = arith.constant dense<0xFF800000> : vector<8xf32>
    %267 = vector.multi_reduction <maximumf>, %266, %cst_109 [1] : vector<8x8xf32> to vector<8xf32>
    %268 = vector.shape_cast %267 : vector<8xf32> to vector<8x1xf32>
    %269 = vector.broadcast %268 : vector<8x1xf32> to vector<8x8xf32>
    %270 = arith.subf %266, %269 : vector<8x8xf32>
    %271 = math.exp %270 : vector<8x8xf32>
    %cst_110 = arith.constant dense<0.000000e+00> : vector<8xf32>
    %272 = vector.multi_reduction <add>, %271, %cst_110 [1] : vector<8x8xf32> to vector<8xf32>
    %273 = vector.shape_cast %272 : vector<8xf32> to vector<8x1xf32>
    %274 = tpu.reciprocal %273 {approx = true} : vector<8x1xf32> -> vector<8x1xf32>
    %275 = vector.broadcast %274 : vector<8x1xf32> to vector<8x8xf32>
    %276 = arith.mulf %271, %275 : vector<8x8xf32>
    %277 = arith.truncf %276 : vector<8x8xf32> to vector<8x8xbf16>
    %cst_111 = arith.constant dense<0.000000e+00> : vector<8x8xf32>
    %278 = tpu.matmul %277, %263, %cst_111 {dimension_numbers = #tpu.dot_dimension_numbers<[1], [0], [0], [1], [0, 0, 1, 1], [], []>} : vector<8x8xbf16>, vector<8x8xbf16>, vector<8x8xf32> -> vector<8x8xf32>
    %279 = vector.extract_strided_slice %251 {offsets = [0, 8], sizes = [8, 8], strides = [1, 1]} : vector<8x32xf32> to vector<8x8xf32>
    %280 = arith.truncf %279 : vector<8x8xf32> to vector<8x8xbf16>
    %281 = vector.extract_strided_slice %252 {offsets = [0, 8], sizes = [8, 8], strides = [1, 1]} : vector<8x32xf32> to vector<8x8xf32>
    %282 = arith.truncf %281 : vector<8x8xf32> to vector<8x8xbf16>
    %283 = vector.extract_strided_slice %253 {offsets = [0, 8], sizes = [8, 8], strides = [1, 1]} : vector<8x32xf32> to vector<8x8xf32>
    %284 = arith.truncf %283 : vector<8x8xf32> to vector<8x8xbf16>
    %cst_112 = arith.constant dense<0.000000e+00> : vector<8x8xf32>
    %285 = tpu.matmul %280, %282, %cst_112 {dimension_numbers = #tpu.dot_dimension_numbers<[1], [1], [0], [0], [0, 0, 1, 0], [], []>} : vector<8x8xbf16>, vector<8x8xbf16>, vector<8x8xf32> -> vector<8x8xf32>
    %cst_113 = arith.constant -1.000000e+09 : f32
    %286 = vector.broadcast %cst_113 : f32 to vector<8x8xf32>
    %287 = arith.select %257, %285, %286 : vector<8x8xi1>, vector<8x8xf32>
    %cst_114 = arith.constant dense<0xFF800000> : vector<8xf32>
    %288 = vector.multi_reduction <maximumf>, %287, %cst_114 [1] : vector<8x8xf32> to vector<8xf32>
    %289 = vector.shape_cast %288 : vector<8xf32> to vector<8x1xf32>
    %290 = vector.broadcast %289 : vector<8x1xf32> to vector<8x8xf32>
    %291 = arith.subf %287, %290 : vector<8x8xf32>
    %292 = math.exp %291 : vector<8x8xf32>
    %cst_115 = arith.constant dense<0.000000e+00> : vector<8xf32>
    %293 = vector.multi_reduction <add>, %292, %cst_115 [1] : vector<8x8xf32> to vector<8xf32>
    %294 = vector.shape_cast %293 : vector<8xf32> to vector<8x1xf32>
    %295 = tpu.reciprocal %294 {approx = true} : vector<8x1xf32> -> vector<8x1xf32>
    %296 = vector.broadcast %295 : vector<8x1xf32> to vector<8x8xf32>
    %297 = arith.mulf %292, %296 : vector<8x8xf32>
    %298 = arith.truncf %297 : vector<8x8xf32> to vector<8x8xbf16>
    %cst_116 = arith.constant dense<0.000000e+00> : vector<8x8xf32>
    %299 = tpu.matmul %298, %284, %cst_116 {dimension_numbers = #tpu.dot_dimension_numbers<[1], [0], [0], [1], [0, 0, 1, 1], [], []>} : vector<8x8xbf16>, vector<8x8xbf16>, vector<8x8xf32> -> vector<8x8xf32>
    %300 = vector.extract_strided_slice %251 {offsets = [0, 16], sizes = [8, 8], strides = [1, 1]} : vector<8x32xf32> to vector<8x8xf32>
    %301 = arith.truncf %300 : vector<8x8xf32> to vector<8x8xbf16>
    %302 = vector.extract_strided_slice %252 {offsets = [0, 16], sizes = [8, 8], strides = [1, 1]} : vector<8x32xf32> to vector<8x8xf32>
    %303 = arith.truncf %302 : vector<8x8xf32> to vector<8x8xbf16>
    %304 = vector.extract_strided_slice %253 {offsets = [0, 16], sizes = [8, 8], strides = [1, 1]} : vector<8x32xf32> to vector<8x8xf32>
    %305 = arith.truncf %304 : vector<8x8xf32> to vector<8x8xbf16>
    %cst_117 = arith.constant dense<0.000000e+00> : vector<8x8xf32>
    %306 = tpu.matmul %301, %303, %cst_117 {dimension_numbers = #tpu.dot_dimension_numbers<[1], [1], [0], [0], [0, 0, 1, 0], [], []>} : vector<8x8xbf16>, vector<8x8xbf16>, vector<8x8xf32> -> vector<8x8xf32>
    %cst_118 = arith.constant -1.000000e+09 : f32
    %307 = vector.broadcast %cst_118 : f32 to vector<8x8xf32>
    %308 = arith.select %257, %306, %307 : vector<8x8xi1>, vector<8x8xf32>
    %cst_119 = arith.constant dense<0xFF800000> : vector<8xf32>
    %309 = vector.multi_reduction <maximumf>, %308, %cst_119 [1] : vector<8x8xf32> to vector<8xf32>
    %310 = vector.shape_cast %309 : vector<8xf32> to vector<8x1xf32>
    %311 = vector.broadcast %310 : vector<8x1xf32> to vector<8x8xf32>
    %312 = arith.subf %308, %311 : vector<8x8xf32>
    %313 = math.exp %312 : vector<8x8xf32>
    %cst_120 = arith.constant dense<0.000000e+00> : vector<8xf32>
    %314 = vector.multi_reduction <add>, %313, %cst_120 [1] : vector<8x8xf32> to vector<8xf32>
    %315 = vector.shape_cast %314 : vector<8xf32> to vector<8x1xf32>
    %316 = tpu.reciprocal %315 {approx = true} : vector<8x1xf32> -> vector<8x1xf32>
    %317 = vector.broadcast %316 : vector<8x1xf32> to vector<8x8xf32>
    %318 = arith.mulf %313, %317 : vector<8x8xf32>
    %319 = arith.truncf %318 : vector<8x8xf32> to vector<8x8xbf16>
    %cst_121 = arith.constant dense<0.000000e+00> : vector<8x8xf32>
    %320 = tpu.matmul %319, %305, %cst_121 {dimension_numbers = #tpu.dot_dimension_numbers<[1], [0], [0], [1], [0, 0, 1, 1], [], []>} : vector<8x8xbf16>, vector<8x8xbf16>, vector<8x8xf32> -> vector<8x8xf32>
    %321 = vector.extract_strided_slice %251 {offsets = [0, 24], sizes = [8, 8], strides = [1, 1]} : vector<8x32xf32> to vector<8x8xf32>
    %322 = arith.truncf %321 : vector<8x8xf32> to vector<8x8xbf16>
    %323 = vector.extract_strided_slice %252 {offsets = [0, 24], sizes = [8, 8], strides = [1, 1]} : vector<8x32xf32> to vector<8x8xf32>
    %324 = arith.truncf %323 : vector<8x8xf32> to vector<8x8xbf16>
    %325 = vector.extract_strided_slice %253 {offsets = [0, 24], sizes = [8, 8], strides = [1, 1]} : vector<8x32xf32> to vector<8x8xf32>
    %326 = arith.truncf %325 : vector<8x8xf32> to vector<8x8xbf16>
    %cst_122 = arith.constant dense<0.000000e+00> : vector<8x8xf32>
    %327 = tpu.matmul %322, %324, %cst_122 {dimension_numbers = #tpu.dot_dimension_numbers<[1], [1], [0], [0], [0, 0, 1, 0], [], []>} : vector<8x8xbf16>, vector<8x8xbf16>, vector<8x8xf32> -> vector<8x8xf32>
    %cst_123 = arith.constant -1.000000e+09 : f32
    %328 = vector.broadcast %cst_123 : f32 to vector<8x8xf32>
    %329 = arith.select %257, %327, %328 : vector<8x8xi1>, vector<8x8xf32>
    %cst_124 = arith.constant dense<0xFF800000> : vector<8xf32>
    %330 = vector.multi_reduction <maximumf>, %329, %cst_124 [1] : vector<8x8xf32> to vector<8xf32>
    %331 = vector.shape_cast %330 : vector<8xf32> to vector<8x1xf32>
    %332 = vector.broadcast %331 : vector<8x1xf32> to vector<8x8xf32>
    %333 = arith.subf %329, %332 : vector<8x8xf32>
    %334 = math.exp %333 : vector<8x8xf32>
    %cst_125 = arith.constant dense<0.000000e+00> : vector<8xf32>
    %335 = vector.multi_reduction <add>, %334, %cst_125 [1] : vector<8x8xf32> to vector<8xf32>
    %336 = vector.shape_cast %335 : vector<8xf32> to vector<8x1xf32>
    %337 = tpu.reciprocal %336 {approx = true} : vector<8x1xf32> -> vector<8x1xf32>
    %338 = vector.broadcast %337 : vector<8x1xf32> to vector<8x8xf32>
    %339 = arith.mulf %334, %338 : vector<8x8xf32>
    %340 = arith.truncf %339 : vector<8x8xf32> to vector<8x8xbf16>
    %cst_126 = arith.constant dense<0.000000e+00> : vector<8x8xf32>
    %341 = tpu.matmul %340, %326, %cst_126 {dimension_numbers = #tpu.dot_dimension_numbers<[1], [0], [0], [1], [0, 0, 1, 1], [], []>} : vector<8x8xbf16>, vector<8x8xbf16>, vector<8x8xf32> -> vector<8x8xf32>
    %342 = tpu.concatenate %278, %299, %320, %341 in 1 : vector<8x8xf32>, vector<8x8xf32>, vector<8x8xf32>, vector<8x8xf32> -> vector<8x32xf32>
    %343 = vector.extract_strided_slice %248 {offsets = [8, 0], sizes = [8, 32], strides = [1, 1]} : vector<16x32xf32> to vector<8x32xf32>
    %344 = vector.extract_strided_slice %249 {offsets = [8, 0], sizes = [8, 32], strides = [1, 1]} : vector<16x32xf32> to vector<8x32xf32>
    %345 = vector.extract_strided_slice %250 {offsets = [8, 0], sizes = [8, 32], strides = [1, 1]} : vector<16x32xf32> to vector<8x32xf32>
    %346 = vector.extract_strided_slice %5 {offsets = [1, 0, 0], sizes = [1, 8, 8], strides = [1, 1, 1]} : vector<2x8x8xbf16> to vector<1x8x8xbf16>
    %347 = vector.shape_cast %346 : vector<1x8x8xbf16> to vector<8x8xbf16>
    %cst_127 = arith.constant 0.000000e+00 : bf16
    %348 = vector.broadcast %cst_127 : bf16 to vector<8x8xbf16>
    %349 = arith.cmpf one, %347, %348 : vector<8x8xbf16>
    %350 = vector.extract_strided_slice %343 {offsets = [0, 0], sizes = [8, 8], strides = [1, 1]} : vector<8x32xf32> to vector<8x8xf32>
    %351 = arith.truncf %350 : vector<8x8xf32> to vector<8x8xbf16>
    %352 = vector.extract_strided_slice %344 {offsets = [0, 0], sizes = [8, 8], strides = [1, 1]} : vector<8x32xf32> to vector<8x8xf32>
    %353 = arith.truncf %352 : vector<8x8xf32> to vector<8x8xbf16>
    %354 = vector.extract_strided_slice %345 {offsets = [0, 0], sizes = [8, 8], strides = [1, 1]} : vector<8x32xf32> to vector<8x8xf32>
    %355 = arith.truncf %354 : vector<8x8xf32> to vector<8x8xbf16>
    %cst_128 = arith.constant dense<0.000000e+00> : vector<8x8xf32>
    %356 = tpu.matmul %351, %353, %cst_128 {dimension_numbers = #tpu.dot_dimension_numbers<[1], [1], [0], [0], [0, 0, 1, 0], [], []>} : vector<8x8xbf16>, vector<8x8xbf16>, vector<8x8xf32> -> vector<8x8xf32>
    %cst_129 = arith.constant -1.000000e+09 : f32
    %357 = vector.broadcast %cst_129 : f32 to vector<8x8xf32>
    %358 = arith.select %349, %356, %357 : vector<8x8xi1>, vector<8x8xf32>
    %cst_130 = arith.constant dense<0xFF800000> : vector<8xf32>
    %359 = vector.multi_reduction <maximumf>, %358, %cst_130 [1] : vector<8x8xf32> to vector<8xf32>
    %360 = vector.shape_cast %359 : vector<8xf32> to vector<8x1xf32>
    %361 = vector.broadcast %360 : vector<8x1xf32> to vector<8x8xf32>
    %362 = arith.subf %358, %361 : vector<8x8xf32>
    %363 = math.exp %362 : vector<8x8xf32>
    %cst_131 = arith.constant dense<0.000000e+00> : vector<8xf32>
    %364 = vector.multi_reduction <add>, %363, %cst_131 [1] : vector<8x8xf32> to vector<8xf32>
    %365 = vector.shape_cast %364 : vector<8xf32> to vector<8x1xf32>
    %366 = tpu.reciprocal %365 {approx = true} : vector<8x1xf32> -> vector<8x1xf32>
    %367 = vector.broadcast %366 : vector<8x1xf32> to vector<8x8xf32>
    %368 = arith.mulf %363, %367 : vector<8x8xf32>
    %369 = arith.truncf %368 : vector<8x8xf32> to vector<8x8xbf16>
    %cst_132 = arith.constant dense<0.000000e+00> : vector<8x8xf32>
    %370 = tpu.matmul %369, %355, %cst_132 {dimension_numbers = #tpu.dot_dimension_numbers<[1], [0], [0], [1], [0, 0, 1, 1], [], []>} : vector<8x8xbf16>, vector<8x8xbf16>, vector<8x8xf32> -> vector<8x8xf32>
    %371 = vector.extract_strided_slice %343 {offsets = [0, 8], sizes = [8, 8], strides = [1, 1]} : vector<8x32xf32> to vector<8x8xf32>
    %372 = arith.truncf %371 : vector<8x8xf32> to vector<8x8xbf16>
    %373 = vector.extract_strided_slice %344 {offsets = [0, 8], sizes = [8, 8], strides = [1, 1]} : vector<8x32xf32> to vector<8x8xf32>
    %374 = arith.truncf %373 : vector<8x8xf32> to vector<8x8xbf16>
    %375 = vector.extract_strided_slice %345 {offsets = [0, 8], sizes = [8, 8], strides = [1, 1]} : vector<8x32xf32> to vector<8x8xf32>
    %376 = arith.truncf %375 : vector<8x8xf32> to vector<8x8xbf16>
    %cst_133 = arith.constant dense<0.000000e+00> : vector<8x8xf32>
    %377 = tpu.matmul %372, %374, %cst_133 {dimension_numbers = #tpu.dot_dimension_numbers<[1], [1], [0], [0], [0, 0, 1, 0], [], []>} : vector<8x8xbf16>, vector<8x8xbf16>, vector<8x8xf32> -> vector<8x8xf32>
    %cst_134 = arith.constant -1.000000e+09 : f32
    %378 = vector.broadcast %cst_134 : f32 to vector<8x8xf32>
    %379 = arith.select %349, %377, %378 : vector<8x8xi1>, vector<8x8xf32>
    %cst_135 = arith.constant dense<0xFF800000> : vector<8xf32>
    %380 = vector.multi_reduction <maximumf>, %379, %cst_135 [1] : vector<8x8xf32> to vector<8xf32>
    %381 = vector.shape_cast %380 : vector<8xf32> to vector<8x1xf32>
    %382 = vector.broadcast %381 : vector<8x1xf32> to vector<8x8xf32>
    %383 = arith.subf %379, %382 : vector<8x8xf32>
    %384 = math.exp %383 : vector<8x8xf32>
    %cst_136 = arith.constant dense<0.000000e+00> : vector<8xf32>
    %385 = vector.multi_reduction <add>, %384, %cst_136 [1] : vector<8x8xf32> to vector<8xf32>
    %386 = vector.shape_cast %385 : vector<8xf32> to vector<8x1xf32>
    %387 = tpu.reciprocal %386 {approx = true} : vector<8x1xf32> -> vector<8x1xf32>
    %388 = vector.broadcast %387 : vector<8x1xf32> to vector<8x8xf32>
    %389 = arith.mulf %384, %388 : vector<8x8xf32>
    %390 = arith.truncf %389 : vector<8x8xf32> to vector<8x8xbf16>
    %cst_137 = arith.constant dense<0.000000e+00> : vector<8x8xf32>
    %391 = tpu.matmul %390, %376, %cst_137 {dimension_numbers = #tpu.dot_dimension_numbers<[1], [0], [0], [1], [0, 0, 1, 1], [], []>} : vector<8x8xbf16>, vector<8x8xbf16>, vector<8x8xf32> -> vector<8x8xf32>
    %392 = vector.extract_strided_slice %343 {offsets = [0, 16], sizes = [8, 8], strides = [1, 1]} : vector<8x32xf32> to vector<8x8xf32>
    %393 = arith.truncf %392 : vector<8x8xf32> to vector<8x8xbf16>
    %394 = vector.extract_strided_slice %344 {offsets = [0, 16], sizes = [8, 8], strides = [1, 1]} : vector<8x32xf32> to vector<8x8xf32>
    %395 = arith.truncf %394 : vector<8x8xf32> to vector<8x8xbf16>
    %396 = vector.extract_strided_slice %345 {offsets = [0, 16], sizes = [8, 8], strides = [1, 1]} : vector<8x32xf32> to vector<8x8xf32>
    %397 = arith.truncf %396 : vector<8x8xf32> to vector<8x8xbf16>
    %cst_138 = arith.constant dense<0.000000e+00> : vector<8x8xf32>
    %398 = tpu.matmul %393, %395, %cst_138 {dimension_numbers = #tpu.dot_dimension_numbers<[1], [1], [0], [0], [0, 0, 1, 0], [], []>} : vector<8x8xbf16>, vector<8x8xbf16>, vector<8x8xf32> -> vector<8x8xf32>
    %cst_139 = arith.constant -1.000000e+09 : f32
    %399 = vector.broadcast %cst_139 : f32 to vector<8x8xf32>
    %400 = arith.select %349, %398, %399 : vector<8x8xi1>, vector<8x8xf32>
    %cst_140 = arith.constant dense<0xFF800000> : vector<8xf32>
    %401 = vector.multi_reduction <maximumf>, %400, %cst_140 [1] : vector<8x8xf32> to vector<8xf32>
    %402 = vector.shape_cast %401 : vector<8xf32> to vector<8x1xf32>
    %403 = vector.broadcast %402 : vector<8x1xf32> to vector<8x8xf32>
    %404 = arith.subf %400, %403 : vector<8x8xf32>
    %405 = math.exp %404 : vector<8x8xf32>
    %cst_141 = arith.constant dense<0.000000e+00> : vector<8xf32>
    %406 = vector.multi_reduction <add>, %405, %cst_141 [1] : vector<8x8xf32> to vector<8xf32>
    %407 = vector.shape_cast %406 : vector<8xf32> to vector<8x1xf32>
    %408 = tpu.reciprocal %407 {approx = true} : vector<8x1xf32> -> vector<8x1xf32>
    %409 = vector.broadcast %408 : vector<8x1xf32> to vector<8x8xf32>
    %410 = arith.mulf %405, %409 : vector<8x8xf32>
    %411 = arith.truncf %410 : vector<8x8xf32> to vector<8x8xbf16>
    %cst_142 = arith.constant dense<0.000000e+00> : vector<8x8xf32>
    %412 = tpu.matmul %411, %397, %cst_142 {dimension_numbers = #tpu.dot_dimension_numbers<[1], [0], [0], [1], [0, 0, 1, 1], [], []>} : vector<8x8xbf16>, vector<8x8xbf16>, vector<8x8xf32> -> vector<8x8xf32>
    %413 = vector.extract_strided_slice %343 {offsets = [0, 24], sizes = [8, 8], strides = [1, 1]} : vector<8x32xf32> to vector<8x8xf32>
    %414 = arith.truncf %413 : vector<8x8xf32> to vector<8x8xbf16>
    %415 = vector.extract_strided_slice %344 {offsets = [0, 24], sizes = [8, 8], strides = [1, 1]} : vector<8x32xf32> to vector<8x8xf32>
    %416 = arith.truncf %415 : vector<8x8xf32> to vector<8x8xbf16>
    %417 = vector.extract_strided_slice %345 {offsets = [0, 24], sizes = [8, 8], strides = [1, 1]} : vector<8x32xf32> to vector<8x8xf32>
    %418 = arith.truncf %417 : vector<8x8xf32> to vector<8x8xbf16>
    %cst_143 = arith.constant dense<0.000000e+00> : vector<8x8xf32>
    %419 = tpu.matmul %414, %416, %cst_143 {dimension_numbers = #tpu.dot_dimension_numbers<[1], [1], [0], [0], [0, 0, 1, 0], [], []>} : vector<8x8xbf16>, vector<8x8xbf16>, vector<8x8xf32> -> vector<8x8xf32>
    %cst_144 = arith.constant -1.000000e+09 : f32
    %420 = vector.broadcast %cst_144 : f32 to vector<8x8xf32>
    %421 = arith.select %349, %419, %420 : vector<8x8xi1>, vector<8x8xf32>
    %cst_145 = arith.constant dense<0xFF800000> : vector<8xf32>
    %422 = vector.multi_reduction <maximumf>, %421, %cst_145 [1] : vector<8x8xf32> to vector<8xf32>
    %423 = vector.shape_cast %422 : vector<8xf32> to vector<8x1xf32>
    %424 = vector.broadcast %423 : vector<8x1xf32> to vector<8x8xf32>
    %425 = arith.subf %421, %424 : vector<8x8xf32>
    %426 = math.exp %425 : vector<8x8xf32>
    %cst_146 = arith.constant dense<0.000000e+00> : vector<8xf32>
    %427 = vector.multi_reduction <add>, %426, %cst_146 [1] : vector<8x8xf32> to vector<8xf32>
    %428 = vector.shape_cast %427 : vector<8xf32> to vector<8x1xf32>
    %429 = tpu.reciprocal %428 {approx = true} : vector<8x1xf32> -> vector<8x1xf32>
    %430 = vector.broadcast %429 : vector<8x1xf32> to vector<8x8xf32>
    %431 = arith.mulf %426, %430 : vector<8x8xf32>
    %432 = arith.truncf %431 : vector<8x8xf32> to vector<8x8xbf16>
    %cst_147 = arith.constant dense<0.000000e+00> : vector<8x8xf32>
    %433 = tpu.matmul %432, %418, %cst_147 {dimension_numbers = #tpu.dot_dimension_numbers<[1], [0], [0], [1], [0, 0, 1, 1], [], []>} : vector<8x8xbf16>, vector<8x8xbf16>, vector<8x8xf32> -> vector<8x8xf32>
    %434 = tpu.concatenate %370, %391, %412, %433 in 1 : vector<8x8xf32>, vector<8x8xf32>, vector<8x8xf32>, vector<8x8xf32> -> vector<8x32xf32>
    %435 = tpu.concatenate %342, %434 in 0 : vector<8x32xf32>, vector<8x32xf32> -> vector<16x32xf32>
    %436 = arith.truncf %435 : vector<16x32xf32> to vector<16x32xbf16>
    %cst_148 = arith.constant dense<0.000000e+00> : vector<16x32xf32>
    %437 = tpu.matmul %436, %243, %cst_148 {dimension_numbers = #tpu.dot_dimension_numbers<[1], [0], [0], [1], [0, 0, 1, 1], [], []>} : vector<16x32xbf16>, vector<32x32xbf16>, vector<16x32xf32> -> vector<16x32xf32>
    %438 = arith.addf %437, %234 : vector<16x32xf32>
    %cst_149 = arith.constant dense<0.000000e+00> : vector<16xf32>
    %439 = vector.multi_reduction <add>, %438, %cst_149 [1] : vector<16x32xf32> to vector<16xf32>
    %440 = vector.shape_cast %439 : vector<16xf32> to vector<16x1xf32>
    %cst_150 = arith.constant 3.200000e+01 : f32
    %441 = vector.broadcast %cst_150 : f32 to vector<16x1xf32>
    %442 = arith.divf %440, %441 : vector<16x1xf32>
    %443 = vector.broadcast %442 : vector<16x1xf32> to vector<16x32xf32>
    %444 = arith.subf %438, %443 : vector<16x32xf32>
    %445 = arith.mulf %444, %444 : vector<16x32xf32>
    %cst_151 = arith.constant dense<0.000000e+00> : vector<16xf32>
    %446 = vector.multi_reduction <add>, %445, %cst_151 [1] : vector<16x32xf32> to vector<16xf32>
    %447 = vector.shape_cast %446 : vector<16xf32> to vector<16x1xf32>
    %cst_152 = arith.constant 3.200000e+01 : f32
    %448 = vector.broadcast %cst_152 : f32 to vector<16x1xf32>
    %449 = arith.divf %447, %448 : vector<16x1xf32>
    %450 = vector.broadcast %442 : vector<16x1xf32> to vector<16x32xf32>
    %451 = arith.subf %438, %450 : vector<16x32xf32>
    %cst_153 = arith.constant 9.99999997E-7 : f32
    %452 = vector.broadcast %cst_153 : f32 to vector<16x1xf32>
    %453 = arith.addf %449, %452 : vector<16x1xf32>
    %454 = math.rsqrt %453 : vector<16x1xf32>
    %455 = vector.broadcast %454 : vector<16x1xf32> to vector<16x32xf32>
    %456 = arith.mulf %451, %455 : vector<16x32xf32>
    %457 = vector.shape_cast %245 : vector<32xf32> to vector<1x32xf32>
    %458 = vector.broadcast %457 : vector<1x32xf32> to vector<16x32xf32>
    %459 = arith.mulf %456, %458 : vector<16x32xf32>
    %460 = vector.shape_cast %247 : vector<32xf32> to vector<1x32xf32>
    %461 = vector.broadcast %460 : vector<1x32xf32> to vector<16x32xf32>
    %462 = arith.addf %459, %461 : vector<16x32xf32>
    %c0_154 = arith.constant 0 : index
    %c0_155 = arith.constant 0 : index
    %c0_156 = arith.constant 0 : index
    %463 = vector.load %arg11[%c0_154, %c0_155, %c0_156] : memref<1x32x64xbf16, #tpu.memory_space<vmem>>, vector<1x32x64xbf16>
    %464 = vector.shape_cast %463 : vector<1x32x64xbf16> to vector<32x64xbf16>
    %c0_157 = arith.constant 0 : index
    %c0_158 = arith.constant 0 : index
    %c0_159 = arith.constant 0 : index
    %465 = vector.load %arg12[%c0_157, %c0_158, %c0_159] : memref<1x1x64xf32, #tpu.memory_space<vmem>>, vector<1x1x64xf32>
    %466 = vector.shape_cast %465 : vector<1x1x64xf32> to vector<1x64xf32>
    %c0_160 = arith.constant 0 : index
    %c0_161 = arith.constant 0 : index
    %c0_162 = arith.constant 0 : index
    %467 = vector.load %arg13[%c0_160, %c0_161, %c0_162] : memref<1x64x32xbf16, #tpu.memory_space<vmem>>, vector<1x64x32xbf16>
    %468 = vector.shape_cast %467 : vector<1x64x32xbf16> to vector<64x32xbf16>
    %c0_163 = arith.constant 0 : index
    %c0_164 = arith.constant 0 : index
    %c0_165 = arith.constant 0 : index
    %469 = vector.load %arg14[%c0_163, %c0_164, %c0_165] : memref<1x1x32xf32, #tpu.memory_space<vmem>>, vector<1x1x32xf32>
    %470 = vector.shape_cast %469 : vector<1x1x32xf32> to vector<1x32xf32>
    %c0_166 = arith.constant 0 : index
    %c0_167 = arith.constant 0 : index
    %c0_168 = arith.constant 0 : index
    %471 = vector.load %arg15[%c0_166, %c0_167, %c0_168] : memref<1x1x32xf32, #tpu.memory_space<vmem>>, vector<1x1x32xf32>
    %472 = vector.shape_cast %471 : vector<1x1x32xf32> to vector<1x32xf32>
    %c0_169 = arith.constant 0 : index
    %c0_170 = arith.constant 0 : index
    %c0_171 = arith.constant 0 : index
    %473 = vector.load %arg16[%c0_169, %c0_170, %c0_171] : memref<1x1x32xf32, #tpu.memory_space<vmem>>, vector<1x1x32xf32>
    %474 = vector.shape_cast %473 : vector<1x1x32xf32> to vector<1x32xf32>
    %475 = arith.truncf %462 : vector<16x32xf32> to vector<16x32xbf16>
    %cst_172 = arith.constant dense<0.000000e+00> : vector<16x64xf32>
    %476 = tpu.matmul %475, %464, %cst_172 {dimension_numbers = #tpu.dot_dimension_numbers<[1], [0], [0], [1], [0, 0, 1, 1], [], []>} : vector<16x32xbf16>, vector<32x64xbf16>, vector<16x64xf32> -> vector<16x64xf32>
    %477 = vector.broadcast %466 : vector<1x64xf32> to vector<16x64xf32>
    %478 = arith.addf %476, %477 : vector<16x64xf32>
    %cst_173 = arith.constant 0.000000e+00 : f32
    %479 = vector.broadcast %cst_173 : f32 to vector<16x64xf32>
    %480 = arith.maximumf %478, %479 : vector<16x64xf32>
    %481 = arith.truncf %480 : vector<16x64xf32> to vector<16x64xbf16>
    %cst_174 = arith.constant dense<0.000000e+00> : vector<16x32xf32>
    %482 = tpu.matmul %481, %468, %cst_174 {dimension_numbers = #tpu.dot_dimension_numbers<[1], [0], [0], [1], [0, 0, 1, 1], [], []>} : vector<16x64xbf16>, vector<64x32xbf16>, vector<16x32xf32> -> vector<16x32xf32>
    %483 = vector.broadcast %470 : vector<1x32xf32> to vector<16x32xf32>
    %484 = arith.addf %482, %483 : vector<16x32xf32>
    %485 = arith.addf %484, %462 : vector<16x32xf32>
    %cst_175 = arith.constant dense<0.000000e+00> : vector<16xf32>
    %486 = vector.multi_reduction <add>, %485, %cst_175 [1] : vector<16x32xf32> to vector<16xf32>
    %487 = vector.shape_cast %486 : vector<16xf32> to vector<16x1xf32>
    %cst_176 = arith.constant 3.200000e+01 : f32
    %488 = vector.broadcast %cst_176 : f32 to vector<16x1xf32>
    %489 = arith.divf %487, %488 : vector<16x1xf32>
    %490 = vector.broadcast %489 : vector<16x1xf32> to vector<16x32xf32>
    %491 = arith.subf %485, %490 : vector<16x32xf32>
    %492 = arith.mulf %491, %491 : vector<16x32xf32>
    %cst_177 = arith.constant dense<0.000000e+00> : vector<16xf32>
    %493 = vector.multi_reduction <add>, %492, %cst_177 [1] : vector<16x32xf32> to vector<16xf32>
    %494 = vector.shape_cast %493 : vector<16xf32> to vector<16x1xf32>
    %cst_178 = arith.constant 3.200000e+01 : f32
    %495 = vector.broadcast %cst_178 : f32 to vector<16x1xf32>
    %496 = arith.divf %494, %495 : vector<16x1xf32>
    %497 = vector.broadcast %489 : vector<16x1xf32> to vector<16x32xf32>
    %498 = arith.subf %485, %497 : vector<16x32xf32>
    %cst_179 = arith.constant 9.99999997E-7 : f32
    %499 = vector.broadcast %cst_179 : f32 to vector<16x1xf32>
    %500 = arith.addf %496, %499 : vector<16x1xf32>
    %501 = math.rsqrt %500 : vector<16x1xf32>
    %502 = vector.broadcast %501 : vector<16x1xf32> to vector<16x32xf32>
    %503 = arith.mulf %498, %502 : vector<16x32xf32>
    %504 = vector.broadcast %472 : vector<1x32xf32> to vector<16x32xf32>
    %505 = arith.mulf %503, %504 : vector<16x32xf32>
    %506 = vector.broadcast %474 : vector<1x32xf32> to vector<16x32xf32>
    %507 = arith.addf %505, %506 : vector<16x32xf32>
    %c0_180 = arith.constant 0 : index
    %c0_181 = arith.constant 0 : index
    %508 = vector.load %arg17[%c0_180, %c0_181] : memref<16x32xf32, #tpu.memory_space<vmem>>, vector<16x32xf32>
    tpu.vector_store %arg17[%c0_180, %c0_181], %507 {strides = array<i32>} : memref<16x32xf32, #tpu.memory_space<vmem>>, vector<16x32xf32>,
    return
  }
  func.func @transform_0(%arg0: i32) -> (i32, i32) {
    %c0_i32 = arith.constant 0 : i32
    %c0_i32_0 = arith.constant 0 : i32
    %c0_i32_1 = arith.constant 0 : i32
    return %c0_i32, %c0_i32_0 : i32, i32
  }
  func.func @transform_1(%arg0: i32) -> (i32, i32, i32) {
    %c0_i32 = arith.constant 0 : i32
    %c0_i32_0 = arith.constant 0 : i32
    %c0_i32_1 = arith.constant 0 : i32
    %c0_i32_2 = arith.constant 0 : i32
    return %c0_i32, %c0_i32_0, %c0_i32_1 : i32, i32, i32
  }
  func.func @transform_2(%arg0: i32) -> (i32, i32, i32) {
    %c0_i32 = arith.constant 0 : i32
    %c0_i32_0 = arith.constant 0 : i32
    %c0_i32_1 = arith.constant 0 : i32
    %c0_i32_2 = arith.constant 0 : i32
    return %c0_i32, %c0_i32_0, %c0_i32_1 : i32, i32, i32
  }
  func.func @transform_3(%arg0: i32) -> (i32, i32) {
    %c0_i32 = arith.constant 0 : i32
    %c0_i32_0 = arith.constant 0 : i32
    %c0_i32_1 = arith.constant 0 : i32
    return %c0_i32, %c0_i32_0 : i32, i32
  }
  func.func @transform_4(%arg0: i32) -> (i32, i32, i32, i32) {
    %c0_i32 = arith.constant 0 : i32
    %c0_i32_0 = arith.constant 0 : i32
    %c0_i32_1 = arith.constant 0 : i32
    %c0_i32_2 = arith.constant 0 : i32
    return %arg0, %c0_i32, %c0_i32_0, %c0_i32_1 : i32, i32, i32, i32
  }
  func.func @transform_5(%arg0: i32) -> (i32, i32, i32, i32) {
    %c0_i32 = arith.constant 0 : i32
    %c0_i32_0 = arith.constant 0 : i32
    %c0_i32_1 = arith.constant 0 : i32
    %c0_i32_2 = arith.constant 0 : i32
    return %arg0, %c0_i32, %c0_i32_0, %c0_i32_1 : i32, i32, i32, i32
  }
  func.func @transform_6(%arg0: i32) -> (i32, i32, i32, i32) {
    %c0_i32 = arith.constant 0 : i32
    %c0_i32_0 = arith.constant 0 : i32
    %c0_i32_1 = arith.constant 0 : i32
    %c0_i32_2 = arith.constant 0 : i32
    return %arg0, %c0_i32, %c0_i32_0, %c0_i32_1 : i32, i32, i32, i32
  }
  func.func @transform_7(%arg0: i32) -> (i32, i32, i32, i32) {
    %c0_i32 = arith.constant 0 : i32
    %c0_i32_0 = arith.constant 0 : i32
    %c0_i32_1 = arith.constant 0 : i32
    %c0_i32_2 = arith.constant 0 : i32
    return %arg0, %c0_i32, %c0_i32_0, %c0_i32_1 : i32, i32, i32, i32
  }
  func.func @transform_8(%arg0: i32) -> (i32, i32, i32) {
    %c0_i32 = arith.constant 0 : i32
    %c0_i32_0 = arith.constant 0 : i32
    %c0_i32_1 = arith.constant 0 : i32
    return %arg0, %c0_i32, %c0_i32_0 : i32, i32, i32
  }
  func.func @transform_9(%arg0: i32) -> (i32, i32, i32) {
    %c0_i32 = arith.constant 0 : i32
    %c0_i32_0 = arith.constant 0 : i32
    %c0_i32_1 = arith.constant 0 : i32
    return %arg0, %c0_i32, %c0_i32_0 : i32, i32, i32
  }
  func.func @transform_10(%arg0: i32) -> (i32, i32, i32) {
    %c0_i32 = arith.constant 0 : i32
    %c0_i32_0 = arith.constant 0 : i32
    %c0_i32_1 = arith.constant 0 : i32
    return %arg0, %c0_i32, %c0_i32_0 : i32, i32, i32
  }
  func.func @transform_11(%arg0: i32) -> (i32, i32, i32) {
    %c0_i32 = arith.constant 0 : i32
    %c0_i32_0 = arith.constant 0 : i32
    %c0_i32_1 = arith.constant 0 : i32
    return %arg0, %c0_i32, %c0_i32_0 : i32, i32, i32
  }
  func.func @transform_12(%arg0: i32) -> (i32, i32, i32) {
    %c0_i32 = arith.constant 0 : i32
    %c0_i32_0 = arith.constant 0 : i32
    %c0_i32_1 = arith.constant 0 : i32
    return %arg0, %c0_i32, %c0_i32_0 : i32, i32, i32
  }
  func.func @transform_13(%arg0: i32) -> (i32, i32, i32) {
    %c0_i32 = arith.constant 0 : i32
    %c0_i32_0 = arith.constant 0 : i32
    %c0_i32_1 = arith.constant 0 : i32
    return %arg0, %c0_i32, %c0_i32_0 : i32, i32, i32
  }
  func.func @transform_14(%arg0: i32) -> (i32, i32, i32) {
    %c0_i32 = arith.constant 0 : i32
    %c0_i32_0 = arith.constant 0 : i32
    %c0_i32_1 = arith.constant 0 : i32
    return %arg0, %c0_i32, %c0_i32_0 : i32, i32, i32
  }
  func.func @transform_15(%arg0: i32) -> (i32, i32, i32) {
    %c0_i32 = arith.constant 0 : i32
    %c0_i32_0 = arith.constant 0 : i32
    %c0_i32_1 = arith.constant 0 : i32
    return %arg0, %c0_i32, %c0_i32_0 : i32, i32, i32
  }
  func.func @transform_16(%arg0: i32) -> (i32, i32) {
    %c0_i32 = arith.constant 0 : i32
    %c0_i32_0 = arith.constant 0 : i32
    %c0_i32_1 = arith.constant 0 : i32
    return %c0_i32, %c0_i32_0 : i32, i32
  }
}

</mosaic_0001>

<llo_original>
// kernel: tpu_custom_call.1
$region0: #{tpu_custom_call.1}
  #allocation0 [shape = 'u32[]', space=smem, size = 0x4, offset = 0x4, fixed_abs, tag = 'smem constant byte address 0x4 - core index']
  #allocation1 [shape = 'u32[72,128]{1,0:T(1,128)}', space=vmem, size = 0x9000, scoped, tag = 'internal scratch']
  %s0 = inlined_call_operand.hbm [shape: f32[16,32], index: 0, kind: input, shape index: {}]
  %s1 = inlined_call_operand.hbm [shape: bf16[2,8,8], index: 1, kind: input, shape index: {}]
  %s2 = inlined_call_operand.hbm [shape: bf16[2,8,8], index: 2, kind: input, shape index: {}]
  %s3 = inlined_call_operand.hbm [shape: bf16[16,32], index: 3, kind: input, shape index: {}]
  %s4 = inlined_call_operand.vmem [shape: bf16[2,2,32,32], index: 4, kind: input, shape index: {}]
  %s5 = inlined_call_operand.hbm [shape: bf16[2,2,32,32], index: 5, kind: input, shape index: {}]
  %s6 = inlined_call_operand.hbm [shape: bf16[2,2,32,32], index: 6, kind: input, shape index: {}]
  %s7 = inlined_call_operand.hbm [shape: bf16[2,2,32,32], index: 7, kind: input, shape index: {}]
  %s8 = inlined_call_operand.vmem [shape: f32[2,2,32], index: 8, kind: input, shape index: {}]
  %s9 = inlined_call_operand.hbm [shape: f32[2,2,32], index: 9, kind: input, shape index: {}]
  %s10 = inlined_call_operand.vmem [shape: bf16[2,32,64], index: 10, kind: input, shape index: {}]
  %s11 = inlined_call_operand.vmem [shape: f32[2,1,64], index: 11, kind: input, shape index: {}]
  %s12 = inlined_call_operand.vmem [shape: bf16[2,64,32], index: 12, kind: input, shape index: {}]
  %s13 = inlined_call_operand.vmem [shape: f32[2,1,32], index: 13, kind: input, shape index: {}]
  %s14 = inlined_call_operand.vmem [shape: f32[2,1,32], index: 14, kind: input, shape index: {}]
  %s15 = inlined_call_operand.vmem [shape: f32[2,1,32], index: 15, kind: input, shape index: {}]
  %s16 = inlined_call_operand.hbm [shape: f32[16,32], index: 16, kind: output, shape index: {}]
  %s17 = sld [smem:[#allocation0]]
  $region133: #{tpu_custom_call.1} parent=0
    _
  %s19 = ssub.s32 1, %s17
  %s20 = scalar_select 0, %s19, %s17
  $region1: #{tpu_custom_call.1} parent=0
    #allocation2 [shape = 'u8[8192]{0}', space=vmem, size = 0x2000, scoped, tag = 'input window, operand 0, single buffered']
    #allocation3 [shape = 's32[2]{0}', space=sflag, size = 0x8, scoped, tag = 'scoped memory for tpu_custom_call.1']
    #allocation4 [shape = 's32[2]{0}', space=sflag, size = 0x8, scoped, tag = 'scoped memory for tpu_custom_call.1']
    #allocation5 [shape = 'u8[4096]{0}', space=vmem, size = 0x1000, scoped, tag = 'input window, operand 1, single buffered']
    #allocation6 [shape = 's32[1]{0}', space=sflag, size = 0x4, scoped, tag = 'scoped memory for tpu_custom_call.1']
    #allocation7 [shape = 'u8[4096]{0}', space=vmem, size = 0x1000, scoped, tag = 'input window, operand 2, single buffered']
    #allocation8 [shape = 'u8[4096]{0}', space=vmem, size = 0x1000, scoped, tag = 'input window, operand 3, single buffered']
    #allocation9 [shape = 's32[1]{0}', space=sflag, size = 0x4, scoped, tag = 'scoped memory for tpu_custom_call.1']
    #allocation10 [shape = 'u8[32768]{0}', space=vmem, size = 0x8000, scoped, tag = 'input window, operand 5']
    #allocation11 [shape = 'u8[32768]{0}', space=vmem, size = 0x8000, scoped, tag = 'input window, operand 6']
    #allocation12 [shape = 'u8[32768]{0}', space=vmem, size = 0x8000, scoped, tag = 'input window, operand 7']
    #allocation13 [shape = 'u8[2048]{0}', space=vmem, size = 0x800, scoped, tag = 'input window, operand 9']
    #allocation14 [shape = 'u8[8192]{0}', space=vmem, size = 0x2000, scoped, tag = 'output window, operand 0, single buffered']
    %21 = vsyncpa [#allocation3], 0
    %22 = vsyncpa [#allocation6], 0
    %23 = vsyncpa [#allocation9], 0
    %24 = vsyncpa [#allocation4], 0
    loop: start=0, step=1, limit=4
    $region2: #{tpu_custom_call.1} parent=1 // loop_pre_header
      _
    $region3: #{tpu_custom_call.1} parent=1 // loop_header
      %s26 = sphi 0, %s30
      %p27 = scmp.ge.s32.totalorder %s26, 4
      %s34 = sphi 0, %s34
      %s36 = sphi 0, %s34
      %s37 = sphi 0, %s36
      %s51 = sphi 0, %s37
      %s55 = sphi 0, %s55
      %s57 = sphi 0, %s55
      %s58 = sphi 0, %s57
      %s72 = sphi 0, %s58
      %s76 = sphi 0, %s76
      %s78 = sphi 0, %s76
      %s79 = sphi 0, %s78
      %s93 = sphi 0, %s79
      %s97 = sphi 0, %s97
      %s99 = sphi 0, %s97
      %s100 = sphi 0, %s99
      %s114 = sphi 0, %s100
      %s120 = sphi 0, %s122
      %s123 = sphi 0, %s120
      %s124 = sphi 0, %s123
      %s140 = sphi 0, %s124
      %s146 = sphi 0, %s148
      %s149 = sphi 0, %s146
      %s150 = sphi 0, %s149
      %s166 = sphi 0, %s150
      %s172 = sphi 0, %s174
      %s175 = sphi 0, %s172
      %s176 = sphi 0, %s175
      %s192 = sphi 0, %s176
      %s198 = sphi 0, %s200
      %s201 = sphi 0, %s198
      %s202 = sphi 0, %s201
      %s218 = sphi 0, %s202
      %s224 = sphi 0, %s226
      %s227 = sphi 0, %s224
      %s228 = sphi 0, %s227
      %s244 = sphi 0, %s228
      %s250 = sphi 0, %s252
      %s253 = sphi 0, %s250
      %s254 = sphi 0, %s253
      %s270 = sphi 0, %s254
      %s276 = sphi 0, %s278
      %s279 = sphi 0, %s276
      %s280 = sphi 0, %s279
      %s296 = sphi 0, %s280
      %s302 = sphi 0, %s304
      %s305 = sphi 0, %s302
      %s306 = sphi 0, %s305
      %s322 = sphi 0, %s306
      %s328 = sphi 0, %s330
      %s331 = sphi 0, %s328
      %s332 = sphi 0, %s331
      %s348 = sphi 0, %s332
      %s354 = sphi 0, %s356
      %s357 = sphi 0, %s354
      %s358 = sphi 0, %s357
      %s374 = sphi 0, %s358
      %s380 = sphi 0, %s382
      %s383 = sphi 0, %s380
      %s384 = sphi 0, %s383
      %s400 = sphi 0, %s384
      %s406 = sphi 0, %s408
      %s409 = sphi 0, %s406
      %s410 = sphi 0, %s409
      %s426 = sphi 0, %s410
      %s430 = sphi 0, %s430
      %s432 = sphi 0, %s430
      %s433 = sphi 0, %s432
      %s447 = sphi 0, %s433
    $region4: #{tpu_custom_call.1} parent=1 // loop_header_branch
      %29 = sbr.rel (%p27) target = $region8
    $region5: #{tpu_custom_call.1} parent=1 // loop_body
      %s31 = ssub.s32 %s26, 1
      %s32 = ssub.s32 %s26, 2
      %s33 = sadd.s32 %s26, 1
      %s35 = sadd.s32 %s34, 1
      %p38 = scmp.eq.s32.totalorder %s26, 1
      %p39 = scmp.ne.s32.totalorder %s34, %s36
      %p40 = scmp.eq.s32.totalorder %s26, 0
      %p41 = por %p39, %p40
      %p42 = scmp.ne.s32.totalorder %s34, %s36
      %p43 = scmp.eq.s32.totalorder %s31, 1
      %p44 = por %p42, %p43
      %p45 = scmp.ne.s32.totalorder %s36, %s37
      %p46 = scmp.eq.s32.totalorder %s31, 0
      %p47 = por %p45, %p46
      %p48 = scmp.ne.s32.totalorder %s36, %s37
      %p49 = scmp.eq.s32.totalorder %s32, 1
      %p50 = por %p48, %p49
      %p52 = scmp.ne.s32.totalorder %s37, %s51
      %p53 = scmp.eq.s32.totalorder %s32, 0
      %p54 = por %p52, %p53
      %s56 = sadd.s32 %s55, 1
      %p59 = scmp.eq.s32.totalorder %s26, 1
      %p60 = scmp.ne.s32.totalorder %s55, %s57
      %p61 = scmp.eq.s32.totalorder %s26, 0
      %p62 = por %p60, %p61
      %p63 = scmp.ne.s32.totalorder %s55, %s57
      %p64 = scmp.eq.s32.totalorder %s31, 1
      %p65 = por %p63, %p64
      %p66 = scmp.ne.s32.totalorder %s57, %s58
      %p67 = scmp.eq.s32.totalorder %s31, 0
      %p68 = por %p66, %p67
      %p69 = scmp.ne.s32.totalorder %s57, %s58
      %p70 = scmp.eq.s32.totalorder %s32, 1
      %p71 = por %p69, %p70
      %p73 = scmp.ne.s32.totalorder %s58, %s72
      %p74 = scmp.eq.s32.totalorder %s32, 0
      %p75 = por %p73, %p74
      %s77 = sadd.s32 %s76, 1
      %p80 = scmp.eq.s32.totalorder %s26, 1
      %p81 = scmp.ne.s32.totalorder %s76, %s78
      %p82 = scmp.eq.s32.totalorder %s26, 0
      %p83 = por %p81, %p82
      %p84 = scmp.ne.s32.totalorder %s76, %s78
      %p85 = scmp.eq.s32.totalorder %s31, 1
      %p86 = por %p84, %p85
      %p87 = scmp.ne.s32.totalorder %s78, %s79
      %p88 = scmp.eq.s32.totalorder %s31, 0
      %p89 = por %p87, %p88
      %p90 = scmp.ne.s32.totalorder %s78, %s79
      %p91 = scmp.eq.s32.totalorder %s32, 1
      %p92 = por %p90, %p91
      %p94 = scmp.ne.s32.totalorder %s79, %s93
      %p95 = scmp.eq.s32.totalorder %s32, 0
      %p96 = por %p94, %p95
      %s98 = sadd.s32 %s97, 1
      %p101 = scmp.eq.s32.totalorder %s26, 1
      %p102 = scmp.ne.s32.totalorder %s97, %s99
      %p103 = scmp.eq.s32.totalorder %s26, 0
      %p104 = por %p102, %p103
      %p105 = scmp.ne.s32.totalorder %s97, %s99
      %p106 = scmp.eq.s32.totalorder %s31, 1
      %p107 = por %p105, %p106
      %p108 = scmp.ne.s32.totalorder %s99, %s100
      %p109 = scmp.eq.s32.totalorder %s31, 0
      %p110 = por %p108, %p109
      %p111 = scmp.ne.s32.totalorder %s99, %s100
      %p112 = scmp.eq.s32.totalorder %s32, 1
      %p113 = por %p111, %p112
      %p115 = scmp.ne.s32.totalorder %s100, %s114
      %p116 = scmp.eq.s32.totalorder %s32, 0
      %p117 = por %p115, %p116
      %s118 = ssub.s32 %s26, %s33
      %p119 = scmp.eq.s32.totalorder %s118, 0
      %s121 = sadd.s32 %s120, 1
      %s122 = scalar_select %p119, %s120, %s121
      %p125 = pneg %p119
      %p126 = scmp.eq.s32.totalorder %s26, 1
      %p127 = por %p125, %p126
      %p128 = scmp.ne.s32.totalorder %s120, %s123
      %p129 = scmp.eq.s32.totalorder %s26, 0
      %p130 = por %p128, %p129
      %p131 = scmp.ne.s32.totalorder %s120, %s123
      %p132 = scmp.eq.s32.totalorder %s31, 1
      %p133 = por %p131, %p132
      %p134 = scmp.ne.s32.totalorder %s123, %s124
      %p135 = scmp.eq.s32.totalorder %s31, 0
      %p136 = por %p134, %p135
      %p137 = scmp.ne.s32.totalorder %s123, %s124
      %p138 = scmp.eq.s32.totalorder %s32, 1
      %p139 = por %p137, %p138
      %p141 = scmp.ne.s32.totalorder %s124, %s140
      %p142 = scmp.eq.s32.totalorder %s32, 0
      %p143 = por %p141, %p142
      %s144 = ssub.s32 %s26, %s33
      %p145 = scmp.eq.s32.totalorder %s144, 0
      %s147 = sadd.s32 %s146, 1
      %s148 = scalar_select %p145, %s146, %s147
      %p151 = pneg %p145
      %p152 = scmp.eq.s32.totalorder %s26, 1
      %p153 = por %p151, %p152
      %p154 = scmp.ne.s32.totalorder %s146, %s149
      %p155 = scmp.eq.s32.totalorder %s26, 0
      %p156 = por %p154, %p155
      %p157 = scmp.ne.s32.totalorder %s146, %s149
      %p158 = scmp.eq.s32.totalorder %s31, 1
      %p159 = por %p157, %p158
      %p160 = scmp.ne.s32.totalorder %s149, %s150
      %p161 = scmp.eq.s32.totalorder %s31, 0
      %p162 = por %p160, %p161
      %p163 = scmp.ne.s32.totalorder %s149, %s150
      %p164 = scmp.eq.s32.totalorder %s32, 1
      %p165 = por %p163, %p164
      %p167 = scmp.ne.s32.totalorder %s150, %s166
      %p168 = scmp.eq.s32.totalorder %s32, 0
      %p169 = por %p167, %p168
      %s170 = ssub.s32 %s26, %s33
      %p171 = scmp.eq.s32.totalorder %s170, 0
      %s173 = sadd.s32 %s172, 1
      %s174 = scalar_select %p171, %s172, %s173
      %p177 = pneg %p171
      %p178 = scmp.eq.s32.totalorder %s26, 1
      %p179 = por %p177, %p178
      %p180 = scmp.ne.s32.totalorder %s172, %s175
      %p181 = scmp.eq.s32.totalorder %s26, 0
      %p182 = por %p180, %p181
      %p183 = scmp.ne.s32.totalorder %s172, %s175
      %p184 = scmp.eq.s32.totalorder %s31, 1
      %p185 = por %p183, %p184
      %p186 = scmp.ne.s32.totalorder %s175, %s176
      %p187 = scmp.eq.s32.totalorder %s31, 0
      %p188 = por %p186, %p187
      %p189 = scmp.ne.s32.totalorder %s175, %s176
      %p190 = scmp.eq.s32.totalorder %s32, 1
      %p191 = por %p189, %p190
      %p193 = scmp.ne.s32.totalorder %s176, %s192
      %p194 = scmp.eq.s32.totalorder %s32, 0
      %p195 = por %p193, %p194
      %s196 = ssub.s32 %s26, %s33
      %p197 = scmp.eq.s32.totalorder %s196, 0
      %s199 = sadd.s32 %s198, 1
      %s200 = scalar_select %p197, %s198, %s199
      %p203 = pneg %p197
      %p204 = scmp.eq.s32.totalorder %s26, 1
      %p205 = por %p203, %p204
      %p206 = scmp.ne.s32.totalorder %s198, %s201
      %p207 = scmp.eq.s32.totalorder %s26, 0
      %p208 = por %p206, %p207
      %p209 = scmp.ne.s32.totalorder %s198, %s201
      %p210 = scmp.eq.s32.totalorder %s31, 1
      %p211 = por %p209, %p210
      %p212 = scmp.ne.s32.totalorder %s201, %s202
      %p213 = scmp.eq.s32.totalorder %s31, 0
      %p214 = por %p212, %p213
      %p215 = scmp.ne.s32.totalorder %s201, %s202
      %p216 = scmp.eq.s32.totalorder %s32, 1
      %p217 = por %p215, %p216
      %p219 = scmp.ne.s32.totalorder %s202, %s218
      %p220 = scmp.eq.s32.totalorder %s32, 0
      %p221 = por %p219, %p220
      %s222 = ssub.s32 %s26, %s33
      %p223 = scmp.eq.s32.totalorder %s222, 0
      %s225 = sadd.s32 %s224, 1
      %s226 = scalar_select %p223, %s224, %s225
      %p229 = pneg %p223
      %p230 = scmp.eq.s32.totalorder %s26, 1
      %p231 = por %p229, %p230
      %p232 = scmp.ne.s32.totalorder %s224, %s227
      %p233 = scmp.eq.s32.totalorder %s26, 0
      %p234 = por %p232, %p233
      %p235 = scmp.ne.s32.totalorder %s224, %s227
      %p236 = scmp.eq.s32.totalorder %s31, 1
      %p237 = por %p235, %p236
      %p238 = scmp.ne.s32.totalorder %s227, %s228
      %p239 = scmp.eq.s32.totalorder %s31, 0
      %p240 = por %p238, %p239
      %p241 = scmp.ne.s32.totalorder %s227, %s228
      %p242 = scmp.eq.s32.totalorder %s32, 1
      %p243 = por %p241, %p242
      %p245 = scmp.ne.s32.totalorder %s228, %s244
      %p246 = scmp.eq.s32.totalorder %s32, 0
      %p247 = por %p245, %p246
      %s248 = ssub.s32 %s26, %s33
      %p249 = scmp.eq.s32.totalorder %s248, 0
      %s251 = sadd.s32 %s250, 1
      %s252 = scalar_select %p249, %s250, %s251
      %p255 = pneg %p249
      %p256 = scmp.eq.s32.totalorder %s26, 1
      %p257 = por %p255, %p256
      %p258 = scmp.ne.s32.totalorder %s250, %s253
      %p259 = scmp.eq.s32.totalorder %s26, 0
      %p260 = por %p258, %p259
      %p261 = scmp.ne.s32.totalorder %s250, %s253
      %p262 = scmp.eq.s32.totalorder %s31, 1
      %p263 = por %p261, %p262
      %p264 = scmp.ne.s32.totalorder %s253, %s254
      %p265 = scmp.eq.s32.totalorder %s31, 0
      %p266 = por %p264, %p265
      %p267 = scmp.ne.s32.totalorder %s253, %s254
      %p268 = scmp.eq.s32.totalorder %s32, 1
      %p269 = por %p267, %p268
      %p271 = scmp.ne.s32.totalorder %s254, %s270
      %p272 = scmp.eq.s32.totalorder %s32, 0
      %p273 = por %p271, %p272
      %s274 = ssub.s32 %s26, %s33
      %p275 = scmp.eq.s32.totalorder %s274, 0
      %s277 = sadd.s32 %s276, 1
      %s278 = scalar_select %p275, %s276, %s277
      %p281 = pneg %p275
      %p282 = scmp.eq.s32.totalorder %s26, 1
      %p283 = por %p281, %p282
      %p284 = scmp.ne.s32.totalorder %s276, %s279
      %p285 = scmp.eq.s32.totalorder %s26, 0
      %p286 = por %p284, %p285
      %p287 = scmp.ne.s32.totalorder %s276, %s279
      %p288 = scmp.eq.s32.totalorder %s31, 1
      %p289 = por %p287, %p288
      %p290 = scmp.ne.s32.totalorder %s279, %s280
      %p291 = scmp.eq.s32.totalorder %s31, 0
      %p292 = por %p290, %p291
      %p293 = scmp.ne.s32.totalorder %s279, %s280
      %p294 = scmp.eq.s32.totalorder %s32, 1
      %p295 = por %p293, %p294
      %p297 = scmp.ne.s32.totalorder %s280, %s296
      %p298 = scmp.eq.s32.totalorder %s32, 0
      %p299 = por %p297, %p298
      %s300 = ssub.s32 %s26, %s33
      %p301 = scmp.eq.s32.totalorder %s300, 0
      %s303 = sadd.s32 %s302, 1
      %s304 = scalar_select %p301, %s302, %s303
      %p307 = pneg %p301
      %p308 = scmp.eq.s32.totalorder %s26, 1
      %p309 = por %p307, %p308
      %p310 = scmp.ne.s32.totalorder %s302, %s305
      %p311 = scmp.eq.s32.totalorder %s26, 0
      %p312 = por %p310, %p311
      %p313 = scmp.ne.s32.totalorder %s302, %s305
      %p314 = scmp.eq.s32.totalorder %s31, 1
      %p315 = por %p313, %p314
      %p316 = scmp.ne.s32.totalorder %s305, %s306
      %p317 = scmp.eq.s32.totalorder %s31, 0
      %p318 = por %p316, %p317
      %p319 = scmp.ne.s32.totalorder %s305, %s306
      %p320 = scmp.eq.s32.totalorder %s32, 1
      %p321 = por %p319, %p320
      %p323 = scmp.ne.s32.totalorder %s306, %s322
      %p324 = scmp.eq.s32.totalorder %s32, 0
      %p325 = por %p323, %p324
      %s326 = ssub.s32 %s26, %s33
      %p327 = scmp.eq.s32.totalorder %s326, 0
      %s329 = sadd.s32 %s328, 1
      %s330 = scalar_select %p327, %s328, %s329
      %p333 = pneg %p327
      %p334 = scmp.eq.s32.totalorder %s26, 1
      %p335 = por %p333, %p334
      %p336 = scmp.ne.s32.totalorder %s328, %s331
      %p337 = scmp.eq.s32.totalorder %s26, 0
      %p338 = por %p336, %p337
      %p339 = scmp.ne.s32.totalorder %s328, %s331
      %p340 = scmp.eq.s32.totalorder %s31, 1
      %p341 = por %p339, %p340
      %p342 = scmp.ne.s32.totalorder %s331, %s332
      %p343 = scmp.eq.s32.totalorder %s31, 0
      %p344 = por %p342, %p343
      %p345 = scmp.ne.s32.totalorder %s331, %s332
      %p346 = scmp.eq.s32.totalorder %s32, 1
      %p347 = por %p345, %p346
      %p349 = scmp.ne.s32.totalorder %s332, %s348
      %p350 = scmp.eq.s32.totalorder %s32, 0
      %p351 = por %p349, %p350
      %s352 = ssub.s32 %s26, %s33
      %p353 = scmp.eq.s32.totalorder %s352, 0
      %s355 = sadd.s32 %s354, 1
      %s356 = scalar_select %p353, %s354, %s355
      %p359 = pneg %p353
      %p360 = scmp.eq.s32.totalorder %s26, 1
      %p361 = por %p359, %p360
      %p362 = scmp.ne.s32.totalorder %s354, %s357
      %p363 = scmp.eq.s32.totalorder %s26, 0
      %p364 = por %p362, %p363
      %p365 = scmp.ne.s32.totalorder %s354, %s357
      %p366 = scmp.eq.s32.totalorder %s31, 1
      %p367 = por %p365, %p366
      %p368 = scmp.ne.s32.totalorder %s357, %s358
      %p369 = scmp.eq.s32.totalorder %s31, 0
      %p370 = por %p368, %p369
      %p371 = scmp.ne.s32.totalorder %s357, %s358
      %p372 = scmp.eq.s32.totalorder %s32, 1
      %p373 = por %p371, %p372
      %p375 = scmp.ne.s32.totalorder %s358, %s374
      %p376 = scmp.eq.s32.totalorder %s32, 0
      %p377 = por %p375, %p376
      %s378 = ssub.s32 %s26, %s33
      %p379 = scmp.eq.s32.totalorder %s378, 0
      %s381 = sadd.s32 %s380, 1
      %s382 = scalar_select %p379, %s380, %s381
      %p385 = pneg %p379
      %p386 = scmp.eq.s32.totalorder %s26, 1
      %p387 = por %p385, %p386
      %p388 = scmp.ne.s32.totalorder %s380, %s383
      %p389 = scmp.eq.s32.totalorder %s26, 0
      %p390 = por %p388, %p389
      %p391 = scmp.ne.s32.totalorder %s380, %s383
      %p392 = scmp.eq.s32.totalorder %s31, 1
      %p393 = por %p391, %p392
      %p394 = scmp.ne.s32.totalorder %s383, %s384
      %p395 = scmp.eq.s32.totalorder %s31, 0
      %p396 = por %p394, %p395
      %p397 = scmp.ne.s32.totalorder %s383, %s384
      %p398 = scmp.eq.s32.totalorder %s32, 1
      %p399 = por %p397, %p398
      %p401 = scmp.ne.s32.totalorder %s384, %s400
      %p402 = scmp.eq.s32.totalorder %s32, 0
      %p403 = por %p401, %p402
      %s404 = ssub.s32 %s26, %s33
      %p405 = scmp.eq.s32.totalorder %s404, 0
      %s407 = sadd.s32 %s406, 1
      %s408 = scalar_select %p405, %s406, %s407
      %p411 = pneg %p405
      %p412 = scmp.eq.s32.totalorder %s26, 1
      %p413 = por %p411, %p412
      %p414 = scmp.ne.s32.totalorder %s406, %s409
      %p415 = scmp.eq.s32.totalorder %s26, 0
      %p416 = por %p414, %p415
      %p417 = scmp.ne.s32.totalorder %s406, %s409
      %p418 = scmp.eq.s32.totalorder %s31, 1
      %p419 = por %p417, %p418
      %p420 = scmp.ne.s32.totalorder %s409, %s410
      %p421 = scmp.eq.s32.totalorder %s31, 0
      %p422 = por %p420, %p421
      %p423 = scmp.ne.s32.totalorder %s409, %s410
      %p424 = scmp.eq.s32.totalorder %s32, 1
      %p425 = por %p423, %p424
      %p427 = scmp.ne.s32.totalorder %s410, %s426
      %p428 = scmp.eq.s32.totalorder %s32, 0
      %p429 = por %p427, %p428
      %s431 = sadd.s32 %s430, 1
      %p434 = scmp.eq.s32.totalorder %s26, 1
      %p435 = scmp.ne.s32.totalorder %s430, %s432
      %p436 = scmp.eq.s32.totalorder %s26, 0
      %p437 = por %p435, %p436
      %p438 = scmp.ne.s32.totalorder %s430, %s432
      %p439 = scmp.eq.s32.totalorder %s31, 1
      %p440 = por %p438, %p439
      %p441 = scmp.ne.s32.totalorder %s432, %s433
      %p442 = scmp.eq.s32.totalorder %s31, 0
      %p443 = por %p441, %p442
      %p444 = scmp.ne.s32.totalorder %s432, %s433
      %p445 = scmp.eq.s32.totalorder %s32, 1
      %p446 = por %p444, %p445
      %p448 = scmp.ne.s32.totalorder %s433, %s447
      %p449 = scmp.eq.s32.totalorder %s32, 0
      %p450 = por %p448, %p449
      %p451 = scmp.le.s32.totalorder 1, %s26
      %p452 = scmp.lt.s32.totalorder %s26, 3
      %p453 = pnand %p451, %p452
      %p454 = pneg %p453
      // Predicated region
      $region9: #{tpu_custom_call.1} parent=5 // pred_check
        _
      $region10: #{tpu_custom_call.1} parent=5 // pred_check_branch
        %456 = sbr.rel (%p453) target = $region12
      $region11: #{tpu_custom_call.1} parent=5 // pred_region
        %s457 = ssub.s32 %s26, 1
        // Predicated region
        $region13: #{tpu_custom_call.1} parent=11 // pred_check
          %p458 = pneg %p47
        $region14: #{tpu_custom_call.1} parent=11 // pred_check_branch
          %460 = sbr.rel (%p458) target = $region16
        $region15: #{tpu_custom_call.1} parent=11 // pred_region
          %462 = vsyncadd [#allocation3], 0
          %s463 = sshll.u32 %s0, 4
          %s464 = int_to_ptr.hbm [resolvable:$true] %s463
          %s465 = sshll.u32 [#allocation2], 4
          %s466 = int_to_ptr.vmem [resolvable:$true] %s465
          %471 = dma.hbm_to_vmem [thread:$0]  %s464, 256, %s466, [#allocation3], 128, 128, 8
        $region16: #{tpu_custom_call.1} parent=11 // pred_fallthru
          _
        // Predicated region
        $region17: #{tpu_custom_call.1} parent=11 // pred_check
          %p472 = pneg %p68
        $region18: #{tpu_custom_call.1} parent=11 // pred_check_branch
          %474 = sbr.rel (%p472) target = $region20
        $region19: #{tpu_custom_call.1} parent=11 // pred_region
          %476 = vsyncadd [#allocation6], 0
          %s477 = sshll.u32 %s1, 4
          %s478 = int_to_ptr.hbm [resolvable:$true] %s477
          %s479 = sshll.u32 [#allocation5], 4
          %s480 = int_to_ptr.vmem [resolvable:$true] %s479
          %485 = dma.hbm_to_vmem [thread:$0]  %s478, 128, %s480, [#allocation6], 64, 64, 4
        $region20: #{tpu_custom_call.1} parent=11 // pred_fallthru
          _
        // Predicated region
        $region21: #{tpu_custom_call.1} parent=11 // pred_check
          %p486 = pneg %p89
        $region22: #{tpu_custom_call.1} parent=11 // pred_check_branch
          %488 = sbr.rel (%p486) target = $region24
        $region23: #{tpu_custom_call.1} parent=11 // pred_region
          %490 = vsyncadd [#allocation6], 0
          %s491 = sshll.u32 %s2, 4
          %s492 = int_to_ptr.hbm [resolvable:$true] %s491
          %s493 = sshll.u32 [#allocation7], 4
          %s494 = int_to_ptr.vmem [resolvable:$true] %s493
          %499 = dma.hbm_to_vmem [thread:$0]  %s492, 128, %s494, [#allocation6], 64, 64, 4
        $region24: #{tpu_custom_call.1} parent=11 // pred_fallthru
          _
        // Predicated region
        $region25: #{tpu_custom_call.1} parent=11 // pred_check
          %p500 = pneg %p110
        $region26: #{tpu_custom_call.1} parent=11 // pred_check_branch
          %502 = sbr.rel (%p500) target = $region28
        $region27: #{tpu_custom_call.1} parent=11 // pred_region
          %504 = vsyncadd [#allocation9], 0
          %s505 = sshll.u32 %s3, 4
          %s506 = int_to_ptr.hbm [resolvable:$true] %s505
          %s507 = sshll.u32 [#allocation8], 4
          %s508 = int_to_ptr.vmem [resolvable:$true] %s507
          %513 = dma.hbm_to_vmem [thread:$0]  %s506, 128, %s508, [#allocation9], 64, 64, 4
        $region28: #{tpu_custom_call.1} parent=11 // pred_fallthru
          _
      $region12: #{tpu_custom_call.1} parent=5 // pred_fallthru
        _
      %p514 = scmp.lt.s32.totalorder %s26, 2
      // Predicated region
      $region29: #{tpu_custom_call.1} parent=5 // pred_check
        %p515 = pneg %p514
      $region30: #{tpu_custom_call.1} parent=5 // pred_check_branch
        %517 = sbr.rel (%p515) target = $region32
      $region31: #{tpu_custom_call.1} parent=5 // pred_region
        // Predicated region
        $region33: #{tpu_custom_call.1} parent=31 // pred_check
          %p518 = pneg %p130
        $region34: #{tpu_custom_call.1} parent=31 // pred_check_branch
          %520 = sbr.rel (%p518) target = $region36
        $region35: #{tpu_custom_call.1} parent=31 // pred_region
          %p521 = scmp.lt.s32.totalorder %s26, 1
          %s522 = scalar_select %p521, %s26, 1
          %s523 = smul.addr %s522, 8
          %s524 = smul.addr %s523, 4
          %s525 = scalar_lea.vmem %s4, %s524
        $region36: #{tpu_custom_call.1} parent=31 // pred_fallthru
          _
        // Predicated region
        $region37: #{tpu_custom_call.1} parent=31 // pred_check
          %p526 = pneg %p156
        $region38: #{tpu_custom_call.1} parent=31 // pred_check_branch
          %528 = sbr.rel (%p526) target = $region40
        $region39: #{tpu_custom_call.1} parent=31 // pred_region
          %s529 = sand.u32 %s26, 1
          %s530 = scalar_lea.sflag [#allocation3], %s529
          %s531 = sand.u32 %s146, 1
          %s532 = smul.addr %s531, 32
          %s533 = scalar_lea.vmem [#allocation10], %s532
          %535 = vsyncadd %s530, 0
          %s536 = smul.addr %s26, 8
          %s537 = smul.addr %s536, 4
          %s538 = scalar_lea.hbm %s5, %s537
          %s539 = sshll.u32 %s538, 4
          %s540 = int_to_ptr.hbm [resolvable:$true] %s539
          %s541 = sshll.u32 %s533, 4
          %s542 = int_to_ptr.vmem [resolvable:$true] %s541
          %547 = dma.hbm_to_vmem [thread:$0]  %s540, 512, %s542, %s530, 64, 64, 4
        $region40: #{tpu_custom_call.1} parent=31 // pred_fallthru
          _
        // Predicated region
        $region41: #{tpu_custom_call.1} parent=31 // pred_check
          %p548 = pneg %p182
        $region42: #{tpu_custom_call.1} parent=31 // pred_check_branch
          %550 = sbr.rel (%p548) target = $region44
        $region43: #{tpu_custom_call.1} parent=31 // pred_region
          %s551 = sand.u32 %s26, 1
          %s552 = scalar_lea.sflag [#allocation3], %s551
          %s553 = sand.u32 %s172, 1
          %s554 = smul.addr %s553, 32
          %s555 = scalar_lea.vmem [#allocation11], %s554
          %557 = vsyncadd %s552, 0
          %s558 = smul.addr %s26, 8
          %s559 = smul.addr %s558, 4
          %s560 = scalar_lea.hbm %s6, %s559
          %s561 = sshll.u32 %s560, 4
          %s562 = int_to_ptr.hbm [resolvable:$true] %s561
          %s563 = sshll.u32 %s555, 4
          %s564 = int_to_ptr.vmem [resolvable:$true] %s563
          %569 = dma.hbm_to_vmem [thread:$0]  %s562, 512, %s564, %s552, 64, 64, 4
        $region44: #{tpu_custom_call.1} parent=31 // pred_fallthru
          _
        // Predicated region
        $region45: #{tpu_custom_call.1} parent=31 // pred_check
          %p570 = pneg %p208
        $region46: #{tpu_custom_call.1} parent=31 // pred_check_branch
          %572 = sbr.rel (%p570) target = $region48
        $region47: #{tpu_custom_call.1} parent=31 // pred_region
          %s573 = sand.u32 %s26, 1
          %s574 = scalar_lea.sflag [#allocation3], %s573
          %s575 = sand.u32 %s198, 1
          %s576 = smul.addr %s575, 32
          %s577 = scalar_lea.vmem [#allocation12], %s576
          %579 = vsyncadd %s574, 0
          %s580 = smul.addr %s26, 8
          %s581 = smul.addr %s580, 4
          %s582 = scalar_lea.hbm %s7, %s581
          %s583 = sshll.u32 %s582, 4
          %s584 = int_to_ptr.hbm [resolvable:$true] %s583
          %s585 = sshll.u32 %s577, 4
          %s586 = int_to_ptr.vmem [resolvable:$true] %s585
          %591 = dma.hbm_to_vmem [thread:$0]  %s584, 512, %s586, %s574, 64, 64, 4
        $region48: #{tpu_custom_call.1} parent=31 // pred_fallthru
          _
        // Predicated region
        $region49: #{tpu_custom_call.1} parent=31 // pred_check
          %p592 = pneg %p234
        $region50: #{tpu_custom_call.1} parent=31 // pred_check_branch
          %594 = sbr.rel (%p592) target = $region52
        $region51: #{tpu_custom_call.1} parent=31 // pred_region
          %p595 = scmp.lt.s32.totalorder %s26, 1
          %s596 = scalar_select %p595, %s26, 1
          %s597 = smul.addr %s596, 2
          %s598 = scalar_lea.vmem %s8, %s597
        $region52: #{tpu_custom_call.1} parent=31 // pred_fallthru
          _
        // Predicated region
        $region53: #{tpu_custom_call.1} parent=31 // pred_check
          %p599 = pneg %p260
        $region54: #{tpu_custom_call.1} parent=31 // pred_check_branch
          %601 = sbr.rel (%p599) target = $region56
        $region55: #{tpu_custom_call.1} parent=31 // pred_region
          %s602 = sand.u32 %s26, 1
          %s603 = scalar_lea.sflag [#allocation3], %s602
          %s604 = sand.u32 %s250, 1
          %s605 = smul.addr %s604, 2
          %s606 = scalar_lea.vmem [#allocation13], %s605
          %608 = vsyncadd %s603, 0
          %s609 = smul.addr %s26, 2
          %s610 = scalar_lea.hbm %s9, %s609
          %s612 = sshll.u32 %s610, 4
          %s613 = int_to_ptr.hbm [resolvable:$true] %s612
          %s614 = sshll.u32 %s606, 4
          %s615 = int_to_ptr.vmem [resolvable:$true] %s614
          %617 = dma.hbm_to_vmem [thread:$0]  %s613, 32, %s615, %s603
        $region56: #{tpu_custom_call.1} parent=31 // pred_fallthru
          _
        // Predicated region
        $region57: #{tpu_custom_call.1} parent=31 // pred_check
          %p618 = pneg %p286
        $region58: #{tpu_custom_call.1} parent=31 // pred_check_branch
          %620 = sbr.rel (%p618) target = $region60
        $region59: #{tpu_custom_call.1} parent=31 // pred_region
          %p621 = scmp.lt.s32.totalorder %s26, 1
          %s622 = scalar_select %p621, %s26, 1
          %s623 = smul.addr %s622, 4
          %s624 = smul.addr %s623, 4
          %s625 = scalar_lea.vmem %s10, %s624
        $region60: #{tpu_custom_call.1} parent=31 // pred_fallthru
          _
        // Predicated region
        $region61: #{tpu_custom_call.1} parent=31 // pred_check
          %p626 = pneg %p312
        $region62: #{tpu_custom_call.1} parent=31 // pred_check_branch
          %628 = sbr.rel (%p626) target = $region64
        $region63: #{tpu_custom_call.1} parent=31 // pred_region
          %p629 = scmp.lt.s32.totalorder %s26, 1
          %s630 = scalar_select %p629, %s26, 1
          %s631 = scalar_lea.vmem %s11, %s630
        $region64: #{tpu_custom_call.1} parent=31 // pred_fallthru
          _
        // Predicated region
        $region65: #{tpu_custom_call.1} parent=31 // pred_check
          %p632 = pneg %p338
        $region66: #{tpu_custom_call.1} parent=31 // pred_check_branch
          %634 = sbr.rel (%p632) target = $region68
        $region67: #{tpu_custom_call.1} parent=31 // pred_region
          %p635 = scmp.lt.s32.totalorder %s26, 1
          %s636 = scalar_select %p635, %s26, 1
          %s637 = smul.addr %s636, 8
          %s638 = smul.addr %s637, 4
          %s639 = scalar_lea.vmem %s12, %s638
        $region68: #{tpu_custom_call.1} parent=31 // pred_fallthru
          _
        // Predicated region
        $region69: #{tpu_custom_call.1} parent=31 // pred_check
          %p640 = pneg %p364
        $region70: #{tpu_custom_call.1} parent=31 // pred_check_branch
          %642 = sbr.rel (%p640) target = $region72
        $region71: #{tpu_custom_call.1} parent=31 // pred_region
          %p643 = scmp.lt.s32.totalorder %s26, 1
          %s644 = scalar_select %p643, %s26, 1
          %s645 = scalar_lea.vmem %s13, %s644
        $region72: #{tpu_custom_call.1} parent=31 // pred_fallthru
          _
        // Predicated region
        $region73: #{tpu_custom_call.1} parent=31 // pred_check
          %p646 = pneg %p390
        $region74: #{tpu_custom_call.1} parent=31 // pred_check_branch
          %648 = sbr.rel (%p646) target = $region76
        $region75: #{tpu_custom_call.1} parent=31 // pred_region
          %p649 = scmp.lt.s32.totalorder %s26, 1
          %s650 = scalar_select %p649, %s26, 1
          %s651 = scalar_lea.vmem %s14, %s650
        $region76: #{tpu_custom_call.1} parent=31 // pred_fallthru
          _
        // Predicated region
        $region77: #{tpu_custom_call.1} parent=31 // pred_check
          %p652 = pneg %p416
        $region78: #{tpu_custom_call.1} parent=31 // pred_check_branch
          %654 = sbr.rel (%p652) target = $region80
        $region79: #{tpu_custom_call.1} parent=31 // pred_region
          %p655 = scmp.lt.s32.totalorder %s26, 1
          %s656 = scalar_select %p655, %s26, 1
          %s657 = scalar_lea.vmem %s15, %s656
        $region80: #{tpu_custom_call.1} parent=31 // pred_fallthru
          _
      $region32: #{tpu_custom_call.1} parent=5 // pred_fallthru
        _
      %p658 = scmp.le.s32.totalorder 1, %s26
      %p659 = scmp.lt.s32.totalorder %s26, 3
      %p660 = pnand %p658, %p659
      %p661 = pneg %p660
      // Predicated region
      $region81: #{tpu_custom_call.1} parent=5 // pred_check
        _
      $region82: #{tpu_custom_call.1} parent=5 // pred_check_branch
        %663 = sbr.rel (%p660) target = $region84
      $region83: #{tpu_custom_call.1} parent=5 // pred_region
        %s664 = ssub.s32 %s26, 1
        // Predicated region
        $region85: #{tpu_custom_call.1} parent=83 // pred_check
          %p665 = pneg %p47
        $region86: #{tpu_custom_call.1} parent=83 // pred_check_branch
          %667 = sbr.rel (%p665) target = $region88
        $region87: #{tpu_custom_call.1} parent=83 // pred_region
          %669 = dma.done [#allocation3], 256
        $region88: #{tpu_custom_call.1} parent=83 // pred_fallthru
          _
        // Predicated region
        $region89: #{tpu_custom_call.1} parent=83 // pred_check
          %p670 = pneg %p68
        $region90: #{tpu_custom_call.1} parent=83 // pred_check_branch
          %672 = sbr.rel (%p670) target = $region92
        $region91: #{tpu_custom_call.1} parent=83 // pred_region
          %674 = dma.done [#allocation6], 128
        $region92: #{tpu_custom_call.1} parent=83 // pred_fallthru
          _
        // Predicated region
        $region93: #{tpu_custom_call.1} parent=83 // pred_check
          %p675 = pneg %p89
        $region94: #{tpu_custom_call.1} parent=83 // pred_check_branch
          %677 = sbr.rel (%p675) target = $region96
        $region95: #{tpu_custom_call.1} parent=83 // pred_region
          %679 = dma.done [#allocation6], 128
        $region96: #{tpu_custom_call.1} parent=83 // pred_fallthru
          _
        // Predicated region
        $region97: #{tpu_custom_call.1} parent=83 // pred_check
          %p680 = pneg %p110
        $region98: #{tpu_custom_call.1} parent=83 // pred_check_branch
          %682 = sbr.rel (%p680) target = $region100
        $region99: #{tpu_custom_call.1} parent=83 // pred_region
          %684 = dma.done [#allocation9], 128
        $region100: #{tpu_custom_call.1} parent=83 // pred_fallthru
          _
        %s685 = sand.u32 %s31, 1
        %s686 = scalar_lea.sflag [#allocation3], %s685
        %s687 = sand.u32 %s149, 1
        %s688 = smul.addr %s687, 32
        %s689 = scalar_lea.vmem [#allocation10], %s688
        // Predicated region
        $region101: #{tpu_custom_call.1} parent=83 // pred_check
          %p690 = pneg %p162
        $region102: #{tpu_custom_call.1} parent=83 // pred_check_branch
          %692 = sbr.rel (%p690) target = $region104
        $region103: #{tpu_custom_call.1} parent=83 // pred_region
          %694 = dma.done %s686, 512
        $region104: #{tpu_custom_call.1} parent=83 // pred_fallthru
          _
        %s695 = sand.u32 %s31, 1
        %s696 = scalar_lea.sflag [#allocation3], %s695
        %s697 = sand.u32 %s175, 1
        %s698 = smul.addr %s697, 32
        %s699 = scalar_lea.vmem [#allocation11], %s698
        // Predicated region
        $region105: #{tpu_custom_call.1} parent=83 // pred_check
          %p700 = pneg %p188
        $region106: #{tpu_custom_call.1} parent=83 // pred_check_branch
          %702 = sbr.rel (%p700) target = $region108
        $region107: #{tpu_custom_call.1} parent=83 // pred_region
          %704 = dma.done %s696, 512
        $region108: #{tpu_custom_call.1} parent=83 // pred_fallthru
          _
        %s705 = sand.u32 %s31, 1
        %s706 = scalar_lea.sflag [#allocation3], %s705
        %s707 = sand.u32 %s201, 1
        %s708 = smul.addr %s707, 32
        %s709 = scalar_lea.vmem [#allocation12], %s708
        // Predicated region
        $region109: #{tpu_custom_call.1} parent=83 // pred_check
          %p710 = pneg %p214
        $region110: #{tpu_custom_call.1} parent=83 // pred_check_branch
          %712 = sbr.rel (%p710) target = $region112
        $region111: #{tpu_custom_call.1} parent=83 // pred_region
          %714 = dma.done %s706, 512
        $region112: #{tpu_custom_call.1} parent=83 // pred_fallthru
          _
        %s715 = sand.u32 %s31, 1
        %s716 = scalar_lea.sflag [#allocation3], %s715
        %s717 = sand.u32 %s253, 1
        %s718 = smul.addr %s717, 2
        %s719 = scalar_lea.vmem [#allocation13], %s718
        // Predicated region
        $region113: #{tpu_custom_call.1} parent=83 // pred_check
          %p720 = pneg %p266
        $region114: #{tpu_custom_call.1} parent=83 // pred_check_branch
          %722 = sbr.rel (%p720) target = $region116
        $region115: #{tpu_custom_call.1} parent=83 // pred_region
          %724 = dma.done %s716, 32
        $region116: #{tpu_custom_call.1} parent=83 // pred_fallthru
          _
        %p725 = pneg %p47
        %p726 = pneg %p44
        %p727 = pneg %p68
        %p728 = pneg %p65
        %p729 = pneg %p89
        %p730 = pneg %p86
        %p731 = pneg %p110
        %p732 = pneg %p107
        %p733 = scmp.lt.s32.totalorder %s31, 1
        %s734 = scalar_select %p733, %s31, 1
        %s735 = smul.addr %s734, 8
        %s736 = smul.addr %s735, 4
        %s737 = scalar_lea.vmem %s4, %s736
        %p738 = pneg %p136
        %p739 = pneg %p133
        %s740 = sand.u32 %s31, 1
        %s741 = scalar_lea.sflag [#allocation3], %s740
        %s742 = sand.u32 %s149, 1
        %s743 = smul.addr %s742, 32
        %s744 = scalar_lea.vmem [#allocation10], %s743
        %p745 = pneg %p162
        %p746 = pneg %p159
        %s747 = sand.u32 %s31, 1
        %s748 = scalar_lea.sflag [#allocation3], %s747
        %s749 = sand.u32 %s175, 1
        %s750 = smul.addr %s749, 32
        %s751 = scalar_lea.vmem [#allocation11], %s750
        %p752 = pneg %p188
        %p753 = pneg %p185
        %s754 = sand.u32 %s31, 1
        %s755 = scalar_lea.sflag [#allocation3], %s754
        %s756 = sand.u32 %s201, 1
        %s757 = smul.addr %s756, 32
        %s758 = scalar_lea.vmem [#allocation12], %s757
        %p759 = pneg %p214
        %p760 = pneg %p211
        %p761 = scmp.lt.s32.totalorder %s31, 1
        %s762 = scalar_select %p761, %s31, 1
        %s763 = smul.addr %s762, 2
        %s764 = scalar_lea.vmem %s8, %s763
        %p765 = pneg %p240
        %p766 = pneg %p237
        %s767 = sand.u32 %s31, 1
        %s768 = scalar_lea.sflag [#allocation3], %s767
        %s769 = sand.u32 %s253, 1
        %s770 = smul.addr %s769, 2
        %s771 = scalar_lea.vmem [#allocation13], %s770
        %p772 = pneg %p266
        %p773 = pneg %p263
        %p774 = scmp.lt.s32.totalorder %s31, 1
        %s775 = scalar_select %p774, %s31, 1
        %s776 = smul.addr %s775, 4
        %s777 = smul.addr %s776, 4
        %s778 = scalar_lea.vmem %s10, %s777
        %p779 = pneg %p292
        %p780 = pneg %p289
        %p781 = scmp.lt.s32.totalorder %s31, 1
        %s782 = scalar_select %p781, %s31, 1
        %s783 = scalar_lea.vmem %s11, %s782
        %p784 = pneg %p318
        %p785 = pneg %p315
        %p786 = scmp.lt.s32.totalorder %s31, 1
        %s787 = scalar_select %p786, %s31, 1
        %s788 = smul.addr %s787, 8
        %s789 = smul.addr %s788, 4
        %s790 = scalar_lea.vmem %s12, %s789
        %p791 = pneg %p344
        %p792 = pneg %p341
        %p793 = scmp.lt.s32.totalorder %s31, 1
        %s794 = scalar_select %p793, %s31, 1
        %s795 = scalar_lea.vmem %s13, %s794
        %p796 = pneg %p370
        %p797 = pneg %p367
        %p798 = scmp.lt.s32.totalorder %s31, 1
        %s799 = scalar_select %p798, %s31, 1
        %s800 = scalar_lea.vmem %s14, %s799
        %p801 = pneg %p396
        %p802 = pneg %p393
        %p803 = scmp.lt.s32.totalorder %s31, 1
        %s804 = scalar_select %p803, %s31, 1
        %s805 = scalar_lea.vmem %s15, %s804
        %p806 = pneg %p422
        %p807 = pneg %p419
        %p808 = pneg %p443
        %p809 = pneg %p440
        %p810 = scmp.lt.s32.totalorder %s31, 1
        %s811 = scalar_select %p810, %s31, 1
        %s812 = smul.addr %s811, 8
        %s813 = smul.addr %s812, 4
        %s814 = scalar_lea.vmem %s4, %s813
        %p815 = scmp.lt.s32.totalorder %s31, 1
        %s816 = scalar_select %p815, %s31, 1
        %s817 = smul.addr %s816, 2
        %s818 = scalar_lea.vmem %s8, %s817
        %p819 = scmp.lt.s32.totalorder %s31, 1
        %s820 = scalar_select %p819, %s31, 1
        %s821 = smul.addr %s820, 4
        %s822 = smul.addr %s821, 4
        %s823 = scalar_lea.vmem %s10, %s822
        %p824 = scmp.lt.s32.totalorder %s31, 1
        %s825 = scalar_select %p824, %s31, 1
        %s826 = scalar_lea.vmem %s11, %s825
        %p827 = scmp.lt.s32.totalorder %s31, 1
        %s828 = scalar_select %p827, %s31, 1
        %s829 = smul.addr %s828, 8
        %s830 = smul.addr %s829, 4
        %s831 = scalar_lea.vmem %s12, %s830
        %p832 = scmp.lt.s32.totalorder %s31, 1
        %s833 = scalar_select %p832, %s31, 1
        %s834 = scalar_lea.vmem %s13, %s833
        %p835 = scmp.lt.s32.totalorder %s31, 1
        %s836 = scalar_select %p835, %s31, 1
        %s837 = scalar_lea.vmem %s14, %s836
        %p838 = scmp.lt.s32.totalorder %s31, 1
        %s839 = scalar_select %p838, %s31, 1
        %s840 = scalar_lea.vmem %s15, %s839
        %p842 = scmp.eq.s32.totalorder %s31, 0
        // Predicated region
        $region117: #{tpu_custom_call.1} parent=83 // pred_check
          %p843 = pneg %p842
        $region118: #{tpu_custom_call.1} parent=83 // pred_check_branch
          %845 = sbr.rel (%p843) target = $region120
        $region119: #{tpu_custom_call.1} parent=83 // pred_region
          %v846 = vld [vmem:[#allocation2] sm:$0xff]
          %v847 = vld [vmem:[#allocation2 + $0x8] sm:$0xff]
          %vm848 = vcmask 261120
          %849 = vst.msk [vmem:[#allocation14] sm:$0xff] %vm848, %v846
          %850 = vst.msk [vmem:[#allocation14 + $0x8] sm:$0xff] %vm848, %v847
        $region120: #{tpu_custom_call.1} parent=83 // pred_fallthru
          _
        %v851 = vld [vmem:[#allocation14] sm:$0xff]
        %v852 = vld [vmem:[#allocation14 + $0x8] sm:$0xff]
        %v853 = vld [vmem:[#allocation5] sm:$0xf]
        %v854 = vld [vmem:[#allocation5 + $0x4] sm:$0xf]
        %v855 = vld [vmem:[#allocation7] sm:$0xf]
        %v856 = vld [vmem:[#allocation7 + $0x4] sm:$0xf]
        %v857 = vld [vmem:[#allocation8] sm:$0xf]
        %v858 = vld [vmem:[#allocation8 + $0x4] sm:$0xf]
        %v859 = vpack.c.bf16 %v852, %v851
        %v860 = vld [vmem:[%s814] sm:$0xf]
        %v861 = vld [vmem:[%s814 + $0x4] sm:$0xf]
        %v862 = vld [vmem:[%s814 + $0x8] sm:$0xf]
        %v863 = vld [vmem:[%s814 + $0xc] sm:$0xf]
        %v864 = vld [vmem:[%s689] sm:$0xf]
        %v865 = vld [vmem:[%s689 + $0x4] sm:$0xf]
        %v866 = vld [vmem:[%s689 + $0x8] sm:$0xf]
        %v867 = vld [vmem:[%s689 + $0xc] sm:$0xf]
        %v868 = vld [vmem:[%s699] sm:$0xf]
        %v869 = vld [vmem:[%s699 + $0x4] sm:$0xf]
        %v870 = vld [vmem:[%s699 + $0x8] sm:$0xf]
        %v871 = vld [vmem:[%s699 + $0xc] sm:$0xf]
        %v872 = vld [vmem:[%s709] sm:$0xf]
        %v873 = vld [vmem:[%s709 + $0x4] sm:$0xf]
        %v874 = vld [vmem:[%s709 + $0x8] sm:$0xf]
        %v875 = vld [vmem:[%s709 + $0xc] sm:$0xf]
        %v876 = vld [vmem:[%s818] sm:$0x1]
        %v877 = vld [vmem:[%s719] sm:$0x1]
        %v882 = vunpack.c.l.b16 %v860
        %v883 = vunpack.c.l.b16 %v861
        %v884 = vunpack.c.l.b16 %v862
        %v885 = vunpack.c.l.b16 %v863
        %v886 = vpack.c.b16 %v883, %v882
        %v887 = vpack.c.b16 %v885, %v884
        %vm890 = vcmask 261120
        %v892 = vsel %vm890, %v859, 0
        %894 = vmatpush.bf16.msra.mxu0 0
        %895 = vmatpush.bf16.msra.mxu0 0
        %896 = vmatpush.bf16.msra.mxu0 0
        %897 = vmatpush.bf16.msra.mxu0 0
        %898 = vmatpush.bf16.msra.mxu0 0
        %899 = vmatpush.bf16.msra.mxu0 0
        %900 = vmatpush.bf16.msra.mxu0 %v887
        %901 = vmatpush.bf16.msra.mxu0 %v886
        %902 = vmatmul.bf16.gmra.mxu0 %v892
        %v903 = vpop.f32.mrf.mxu0
        %v904 = vadd.f32 0.0, %v903
        %v905 = vpop.f32.mrf.mxu0
        %v906 = vadd.f32 0.0, %v905
        %907 = vdwg.mxu0
        %v912 = vunpack.c.l.b16 %v864
        %v913 = vunpack.c.l.b16 %v865
        %v914 = vunpack.c.l.b16 %v866
        %v915 = vunpack.c.l.b16 %v867
        %v916 = vpack.c.b16 %v913, %v912
        %v917 = vpack.c.b16 %v915, %v914
        %920 = vmatpush.bf16.msra.mxu0 0
        %921 = vmatpush.bf16.msra.mxu0 0
        %922 = vmatpush.bf16.msra.mxu0 0
        %923 = vmatpush.bf16.msra.mxu0 0
        %924 = vmatpush.bf16.msra.mxu0 0
        %925 = vmatpush.bf16.msra.mxu0 0
        %926 = vmatpush.bf16.msra.mxu0 %v917
        %927 = vmatpush.bf16.msra.mxu0 %v916
        %928 = vmatmul.bf16.gmra.mxu0 %v892
        %v929 = vpop.f32.mrf.mxu0
        %v930 = vadd.f32 0.0, %v929
        %v931 = vpop.f32.mrf.mxu0
        %v932 = vadd.f32 0.0, %v931
        %933 = vdwg.mxu0
        %v938 = vunpack.c.l.b16 %v868
        %v939 = vunpack.c.l.b16 %v869
        %v940 = vunpack.c.l.b16 %v870
        %v941 = vunpack.c.l.b16 %v871
        %v942 = vpack.c.b16 %v939, %v938
        %v943 = vpack.c.b16 %v941, %v940
        %946 = vmatpush.bf16.msra.mxu0 0
        %947 = vmatpush.bf16.msra.mxu0 0
        %948 = vmatpush.bf16.msra.mxu0 0
        %949 = vmatpush.bf16.msra.mxu0 0
        %950 = vmatpush.bf16.msra.mxu0 0
        %951 = vmatpush.bf16.msra.mxu0 0
        %952 = vmatpush.bf16.msra.mxu0 %v943
        %953 = vmatpush.bf16.msra.mxu0 %v942
        %954 = vmatmul.bf16.gmra.mxu0 %v892
        %v955 = vpop.f32.mrf.mxu0
        %v956 = vadd.f32 0.0, %v955
        %v957 = vpop.f32.mrf.mxu0
        %v958 = vadd.f32 0.0, %v957
        %959 = vdwg.mxu0
        %v960 = vunpack.c.l.bf16 %v853
        %vm961 = vcmp.ne.f32.partialorder %v960, 0.0
        %v962 = vpack.c.bf16 %v904, %v904
        %v963 = vpack.c.bf16 %v930, %v930
        %v964 = vpack.c.bf16 %v956, %v956
        %vm965 = vcmask 64512
        %v967 = vsel %vm965, %v962, 0
        %v970 = vsel %vm965, %v963, 0
        %972 = vmatpush.bf16.xpose.msra.mxu0 0
        %973 = vmatpush.bf16.xpose.msra.mxu0 0
        %974 = vmatpush.bf16.xpose.msra.mxu0 0
        %975 = vmatpush.bf16.xpose.msra.mxu0 0
        %976 = vmatpush.bf16.xpose.msra.mxu0 0
        %977 = vmatpush.bf16.xpose.msra.mxu0 0
        %978 = vmatpush.bf16.xpose.msra.mxu0 0
        %979 = vmatpush.bf16.xpose.msra.mxu0 %v970
        %980 = vmatmul.bf16.gmra.mxu0 %v967
        %v981 = vpop.f32.mrf.mxu0
        %v982 = vadd.f32 0.0, %v981
        %v983 = vpop.f32.mrf.mxu0
        %984 = vdwg.mxu0
        %v985 = vsel %vm961, %v982, -1e+09
        %v986 = vsel %vm965, %v985, -inf
        %987 = vmax.xlane.f32.xlu0 %v986
        %v988 = vpop.xlane.xlu0 %987
        %v989 = vsub.f32 %v985, %v988
        %v990 = vmul.f32 %v989, 1.442695
        %v991 = vpow.pop %v990
        %v992 = vsel %vm965, %v991, 0.0
        %993 = vadd.xlane.f32.xlu0 %v992
        %v994 = vpop.xlane.xlu0 %993
        %v995 = vrcp.pop %v994
        %v996 = vmul.f32 %v991, %v995
        %v997 = vpack.c.bf16 %v996, %v996
        %v999 = vsel %vm965, %v997, 0
        %vm1001 = vcmask 1043456
        %v1003 = vsel %vm1001, %v964, 0
        %1005 = vmatpush.bf16.msra.mxu0 0
        %1006 = vmatpush.bf16.msra.mxu0 0
        %1007 = vmatpush.bf16.msra.mxu0 0
        %1008 = vmatpush.bf16.msra.mxu0 0
        %1009 = vmatpush.bf16.msra.mxu0 0
        %1010 = vmatpush.bf16.msra.mxu0 0
        %1011 = vmatpush.bf16.msra.mxu0 0
        %1012 = vmatpush.bf16.msra.mxu0 %v1003
        %1013 = vmatmul.bf16.gmra.mxu0 %v999
        %v1014 = vpop.f32.mrf.mxu0
        %v1015 = vadd.f32 0.0, %v1014
        %v1016 = vpop.f32.mrf.mxu0
        %1017 = vdwg.mxu0
        %1019 = vrot.lane.b32.xlu0 %v962, 120
        %v1020 = vpop.permute.xlu0 %1019
        %1022 = vrot.lane.b32.xlu0 %v963, 120
        %v1023 = vpop.permute.xlu0 %1022
        %v1025 = vsel %vm965, %v1020, 0
        %v1028 = vsel %vm965, %v1023, 0
        %1030 = vmatpush.bf16.xpose.msra.mxu0 0
        %1031 = vmatpush.bf16.xpose.msra.mxu0 0
        %1032 = vmatpush.bf16.xpose.msra.mxu0 0
        %1033 = vmatpush.bf16.xpose.msra.mxu0 0
        %1034 = vmatpush.bf16.xpose.msra.mxu0 0
        %1035 = vmatpush.bf16.xpose.msra.mxu0 0
        %1036 = vmatpush.bf16.xpose.msra.mxu0 0
        %1037 = vmatpush.bf16.xpose.msra.mxu0 %v1028
        %1038 = vmatmul.bf16.gmra.mxu0 %v1025
        %v1039 = vpop.f32.mrf.mxu0
        %v1040 = vadd.f32 0.0, %v1039
        %v1041 = vpop.f32.mrf.mxu0
        %1042 = vdwg.mxu0
        %v1043 = vsel %vm961, %v1040, -1e+09
        %v1044 = vsel %vm965, %v1043, -inf
        %1045 = vmax.xlane.f32.xlu0 %v1044
        %v1046 = vpop.xlane.xlu0 %1045
        %v1047 = vsub.f32 %v1043, %v1046
        %v1048 = vmul.f32 %v1047, 1.442695
        %v1049 = vpow.pop %v1048
        %v1050 = vsel %vm965, %v1049, 0.0
        %1051 = vadd.xlane.f32.xlu0 %v1050
        %v1052 = vpop.xlane.xlu0 %1051
        %v1053 = vrcp.pop %v1052
        %v1054 = vmul.f32 %v1049, %v1053
        %v1055 = vpack.c.bf16 %v1054, %v1054
        %1057 = vrot.lane.b32.xlu0 %v964, 120
        %v1058 = vpop.permute.xlu0 %1057
        %v1060 = vsel %vm965, %v1055, 0
        %v1063 = vsel %vm1001, %v1058, 0
        %1065 = vmatpush.bf16.msra.mxu0 0
        %1066 = vmatpush.bf16.msra.mxu0 0
        %1067 = vmatpush.bf16.msra.mxu0 0
        %1068 = vmatpush.bf16.msra.mxu0 0
        %1069 = vmatpush.bf16.msra.mxu0 0
        %1070 = vmatpush.bf16.msra.mxu0 0
        %1071 = vmatpush.bf16.msra.mxu0 0
        %1072 = vmatpush.bf16.msra.mxu0 %v1063
        %1073 = vmatmul.bf16.gmra.mxu0 %v1060
        %v1074 = vpop.f32.mrf.mxu0
        %v1075 = vadd.f32 0.0, %v1074
        %v1076 = vpop.f32.mrf.mxu0
        %1077 = vdwg.mxu0
        %1078 = vrot.lane.b32.xlu0 %v962, 112
        %v1079 = vpop.permute.xlu0 %1078
        %1080 = vrot.lane.b32.xlu0 %v963, 112
        %v1081 = vpop.permute.xlu0 %1080
        %v1083 = vsel %vm965, %v1079, 0
        %v1086 = vsel %vm965, %v1081, 0
        %1088 = vmatpush.bf16.xpose.msra.mxu0 0
        %1089 = vmatpush.bf16.xpose.msra.mxu0 0
        %1090 = vmatpush.bf16.xpose.msra.mxu0 0
        %1091 = vmatpush.bf16.xpose.msra.mxu0 0
        %1092 = vmatpush.bf16.xpose.msra.mxu0 0
        %1093 = vmatpush.bf16.xpose.msra.mxu0 0
        %1094 = vmatpush.bf16.xpose.msra.mxu0 0
        %1095 = vmatpush.bf16.xpose.msra.mxu0 %v1086
        %1096 = vmatmul.bf16.gmra.mxu0 %v1083
        %v1097 = vpop.f32.mrf.mxu0
        %v1098 = vadd.f32 0.0, %v1097
        %v1099 = vpop.f32.mrf.mxu0
        %1100 = vdwg.mxu0
        %v1101 = vsel %vm961, %v1098, -1e+09
        %v1102 = vsel %vm965, %v1101, -inf
        %1103 = vmax.xlane.f32.xlu0 %v1102
        %v1104 = vpop.xlane.xlu0 %1103
        %v1105 = vsub.f32 %v1101, %v1104
        %v1106 = vmul.f32 %v1105, 1.442695
        %v1107 = vpow.pop %v1106
        %v1108 = vsel %vm965, %v1107, 0.0
        %1109 = vadd.xlane.f32.xlu0 %v1108
        %v1110 = vpop.xlane.xlu0 %1109
        %v1111 = vrcp.pop %v1110
        %v1112 = vmul.f32 %v1107, %v1111
        %v1113 = vpack.c.bf16 %v1112, %v1112
        %1114 = vrot.lane.b32.xlu0 %v964, 112
        %v1115 = vpop.permute.xlu0 %1114
        %v1117 = vsel %vm965, %v1113, 0
        %v1120 = vsel %vm1001, %v1115, 0
        %1122 = vmatpush.bf16.msra.mxu0 0
        %1123 = vmatpush.bf16.msra.mxu0 0
        %1124 = vmatpush.bf16.msra.mxu0 0
        %1125 = vmatpush.bf16.msra.mxu0 0
        %1126 = vmatpush.bf16.msra.mxu0 0
        %1127 = vmatpush.bf16.msra.mxu0 0
        %1128 = vmatpush.bf16.msra.mxu0 0
        %1129 = vmatpush.bf16.msra.mxu0 %v1120
        %1130 = vmatmul.bf16.gmra.mxu0 %v1117
        %v1131 = vpop.f32.mrf.mxu0
        %v1132 = vadd.f32 0.0, %v1131
        %v1133 = vpop.f32.mrf.mxu0
        %1134 = vdwg.mxu0
        %1135 = vrot.lane.b32.xlu0 %v962, 104
        %v1136 = vpop.permute.xlu0 %1135
        %1137 = vrot.lane.b32.xlu0 %v963, 104
        %v1138 = vpop.permute.xlu0 %1137
        %v1140 = vsel %vm965, %v1136, 0
        %v1143 = vsel %vm965, %v1138, 0
        %1145 = vmatpush.bf16.xpose.msra.mxu0 0
        %1146 = vmatpush.bf16.xpose.msra.mxu0 0
        %1147 = vmatpush.bf16.xpose.msra.mxu0 0
        %1148 = vmatpush.bf16.xpose.msra.mxu0 0
        %1149 = vmatpush.bf16.xpose.msra.mxu0 0
        %1150 = vmatpush.bf16.xpose.msra.mxu0 0
        %1151 = vmatpush.bf16.xpose.msra.mxu0 0
        %1152 = vmatpush.bf16.xpose.msra.mxu0 %v1143
        %1153 = vmatmul.bf16.gmra.mxu0 %v1140
        %v1154 = vpop.f32.mrf.mxu0
        %v1155 = vadd.f32 0.0, %v1154
        %v1156 = vpop.f32.mrf.mxu0
        %1157 = vdwg.mxu0
        %v1158 = vsel %vm961, %v1155, -1e+09
        %v1159 = vsel %vm965, %v1158, -inf
        %1160 = vmax.xlane.f32.xlu0 %v1159
        %v1161 = vpop.xlane.xlu0 %1160
        %v1162 = vsub.f32 %v1158, %v1161
        %v1163 = vmul.f32 %v1162, 1.442695
        %v1164 = vpow.pop %v1163
        %v1165 = vsel %vm965, %v1164, 0.0
        %1166 = vadd.xlane.f32.xlu0 %v1165
        %v1167 = vpop.xlane.xlu0 %1166
        %v1168 = vrcp.pop %v1167
        %v1169 = vmul.f32 %v1164, %v1168
        %v1170 = vpack.c.bf16 %v1169, %v1169
        %1171 = vrot.lane.b32.xlu0 %v964, 104
        %v1172 = vpop.permute.xlu0 %1171
        %v1174 = vsel %vm965, %v1170, 0
        %v1177 = vsel %vm1001, %v1172, 0
        %1179 = vmatpush.bf16.msra.mxu0 0
        %1180 = vmatpush.bf16.msra.mxu0 0
        %1181 = vmatpush.bf16.msra.mxu0 0
        %1182 = vmatpush.bf16.msra.mxu0 0
        %1183 = vmatpush.bf16.msra.mxu0 0
        %1184 = vmatpush.bf16.msra.mxu0 0
        %1185 = vmatpush.bf16.msra.mxu0 0
        %1186 = vmatpush.bf16.msra.mxu0 %v1177
        %1187 = vmatmul.bf16.gmra.mxu0 %v1174
        %v1188 = vpop.f32.mrf.mxu0
        %v1189 = vadd.f32 0.0, %v1188
        %v1190 = vpop.f32.mrf.mxu0
        %1191 = vdwg.mxu0
        %1193 = vrot.lane.b32.xlu0 %v1075, 8
        %v1194 = vpop.permute.xlu0 %1193
        %1197 = vrot.lane.b32.xlu0 %v1132, 16
        %v1198 = vpop.permute.xlu0 %1197
        %1201 = vrot.lane.b32.xlu0 %v1189, 24
        %v1202 = vpop.permute.xlu0 %1201
        %v1204 = vsel %vm965, %v1015, %v1194
        %vm1205 = vcmask 130048
        %v1206 = vsel %vm1205, %v1204, %v1198
        %vm1207 = vcmask 195584
        %v1208 = vsel %vm1207, %v1206, %v1202
        %v1209 = vunpack.c.l.bf16 %v854
        %vm1210 = vcmp.ne.f32.partialorder %v1209, 0.0
        %v1211 = vpack.c.bf16 %v906, %v906
        %v1212 = vpack.c.bf16 %v932, %v932
        %v1213 = vpack.c.bf16 %v958, %v958
        %v1215 = vsel %vm965, %v1211, 0
        %v1218 = vsel %vm965, %v1212, 0
        %1220 = vmatpush.bf16.xpose.msra.mxu0 0
        %1221 = vmatpush.bf16.xpose.msra.mxu0 0
        %1222 = vmatpush.bf16.xpose.msra.mxu0 0
        %1223 = vmatpush.bf16.xpose.msra.mxu0 0
        %1224 = vmatpush.bf16.xpose.msra.mxu0 0
        %1225 = vmatpush.bf16.xpose.msra.mxu0 0
        %1226 = vmatpush.bf16.xpose.msra.mxu0 0
        %1227 = vmatpush.bf16.xpose.msra.mxu0 %v1218
        %1228 = vmatmul.bf16.gmra.mxu0 %v1215
        %v1229 = vpop.f32.mrf.mxu0
        %v1230 = vadd.f32 0.0, %v1229
        %v1231 = vpop.f32.mrf.mxu0
        %1232 = vdwg.mxu0
        %v1233 = vsel %vm1210, %v1230, -1e+09
        %v1234 = vsel %vm965, %v1233, -inf
        %1235 = vmax.xlane.f32.xlu0 %v1234
        %v1236 = vpop.xlane.xlu0 %1235
        %v1237 = vsub.f32 %v1233, %v1236
        %v1238 = vmul.f32 %v1237, 1.442695
        %v1239 = vpow.pop %v1238
        %v1240 = vsel %vm965, %v1239, 0.0
        %1241 = vadd.xlane.f32.xlu0 %v1240
        %v1242 = vpop.xlane.xlu0 %1241
        %v1243 = vrcp.pop %v1242
        %v1244 = vmul.f32 %v1239, %v1243
        %v1245 = vpack.c.bf16 %v1244, %v1244
        %v1247 = vsel %vm965, %v1245, 0
        %v1250 = vsel %vm1001, %v1213, 0
        %1252 = vmatpush.bf16.msra.mxu0 0
        %1253 = vmatpush.bf16.msra.mxu0 0
        %1254 = vmatpush.bf16.msra.mxu0 0
        %1255 = vmatpush.bf16.msra.mxu0 0
        %1256 = vmatpush.bf16.msra.mxu0 0
        %1257 = vmatpush.bf16.msra.mxu0 0
        %1258 = vmatpush.bf16.msra.mxu0 0
        %1259 = vmatpush.bf16.msra.mxu0 %v1250
        %1260 = vmatmul.bf16.gmra.mxu0 %v1247
        %v1261 = vpop.f32.mrf.mxu0
        %v1262 = vadd.f32 0.0, %v1261
        %v1263 = vpop.f32.mrf.mxu0
        %1264 = vdwg.mxu0
        %1266 = vrot.lane.b32.xlu0 %v1211, 120
        %v1267 = vpop.permute.xlu0 %1266
        %1269 = vrot.lane.b32.xlu0 %v1212, 120
        %v1270 = vpop.permute.xlu0 %1269
        %v1272 = vsel %vm965, %v1267, 0
        %v1275 = vsel %vm965, %v1270, 0
        %1277 = vmatpush.bf16.xpose.msra.mxu0 0
        %1278 = vmatpush.bf16.xpose.msra.mxu0 0
        %1279 = vmatpush.bf16.xpose.msra.mxu0 0
        %1280 = vmatpush.bf16.xpose.msra.mxu0 0
        %1281 = vmatpush.bf16.xpose.msra.mxu0 0
        %1282 = vmatpush.bf16.xpose.msra.mxu0 0
        %1283 = vmatpush.bf16.xpose.msra.mxu0 0
        %1284 = vmatpush.bf16.xpose.msra.mxu0 %v1275
        %1285 = vmatmul.bf16.gmra.mxu0 %v1272
        %v1286 = vpop.f32.mrf.mxu0
        %v1287 = vadd.f32 0.0, %v1286
        %v1288 = vpop.f32.mrf.mxu0
        %1289 = vdwg.mxu0
        %v1290 = vsel %vm1210, %v1287, -1e+09
        %v1291 = vsel %vm965, %v1290, -inf
        %1292 = vmax.xlane.f32.xlu0 %v1291
        %v1293 = vpop.xlane.xlu0 %1292
        %v1294 = vsub.f32 %v1290, %v1293
        %v1295 = vmul.f32 %v1294, 1.442695
        %v1296 = vpow.pop %v1295
        %v1297 = vsel %vm965, %v1296, 0.0
        %1298 = vadd.xlane.f32.xlu0 %v1297
        %v1299 = vpop.xlane.xlu0 %1298
        %v1300 = vrcp.pop %v1299
        %v1301 = vmul.f32 %v1296, %v1300
        %v1302 = vpack.c.bf16 %v1301, %v1301
        %1304 = vrot.lane.b32.xlu0 %v1213, 120
        %v1305 = vpop.permute.xlu0 %1304
        %v1307 = vsel %vm965, %v1302, 0
        %v1310 = vsel %vm1001, %v1305, 0
        %1312 = vmatpush.bf16.msra.mxu0 0
        %1313 = vmatpush.bf16.msra.mxu0 0
        %1314 = vmatpush.bf16.msra.mxu0 0
        %1315 = vmatpush.bf16.msra.mxu0 0
        %1316 = vmatpush.bf16.msra.mxu0 0
        %1317 = vmatpush.bf16.msra.mxu0 0
        %1318 = vmatpush.bf16.msra.mxu0 0
        %1319 = vmatpush.bf16.msra.mxu0 %v1310
        %1320 = vmatmul.bf16.gmra.mxu0 %v1307
        %v1321 = vpop.f32.mrf.mxu0
        %v1322 = vadd.f32 0.0, %v1321
        %v1323 = vpop.f32.mrf.mxu0
        %1324 = vdwg.mxu0
        %1325 = vrot.lane.b32.xlu0 %v1211, 112
        %v1326 = vpop.permute.xlu0 %1325
        %1327 = vrot.lane.b32.xlu0 %v1212, 112
        %v1328 = vpop.permute.xlu0 %1327
        %v1330 = vsel %vm965, %v1326, 0
        %v1333 = vsel %vm965, %v1328, 0
        %1335 = vmatpush.bf16.xpose.msra.mxu0 0
        %1336 = vmatpush.bf16.xpose.msra.mxu0 0
        %1337 = vmatpush.bf16.xpose.msra.mxu0 0
        %1338 = vmatpush.bf16.xpose.msra.mxu0 0
        %1339 = vmatpush.bf16.xpose.msra.mxu0 0
        %1340 = vmatpush.bf16.xpose.msra.mxu0 0
        %1341 = vmatpush.bf16.xpose.msra.mxu0 0
        %1342 = vmatpush.bf16.xpose.msra.mxu0 %v1333
        %1343 = vmatmul.bf16.gmra.mxu0 %v1330
        %v1344 = vpop.f32.mrf.mxu0
        %v1345 = vadd.f32 0.0, %v1344
        %v1346 = vpop.f32.mrf.mxu0
        %1347 = vdwg.mxu0
        %v1348 = vsel %vm1210, %v1345, -1e+09
        %v1349 = vsel %vm965, %v1348, -inf
        %1350 = vmax.xlane.f32.xlu0 %v1349
        %v1351 = vpop.xlane.xlu0 %1350
        %v1352 = vsub.f32 %v1348, %v1351
        %v1353 = vmul.f32 %v1352, 1.442695
        %v1354 = vpow.pop %v1353
        %v1355 = vsel %vm965, %v1354, 0.0
        %1356 = vadd.xlane.f32.xlu0 %v1355
        %v1357 = vpop.xlane.xlu0 %1356
        %v1358 = vrcp.pop %v1357
        %v1359 = vmul.f32 %v1354, %v1358
        %v1360 = vpack.c.bf16 %v1359, %v1359
        %1361 = vrot.lane.b32.xlu0 %v1213, 112
        %v1362 = vpop.permute.xlu0 %1361
        %v1364 = vsel %vm965, %v1360, 0
        %v1367 = vsel %vm1001, %v1362, 0
        %1369 = vmatpush.bf16.msra.mxu0 0
        %1370 = vmatpush.bf16.msra.mxu0 0
        %1371 = vmatpush.bf16.msra.mxu0 0
        %1372 = vmatpush.bf16.msra.mxu0 0
        %1373 = vmatpush.bf16.msra.mxu0 0
        %1374 = vmatpush.bf16.msra.mxu0 0
        %1375 = vmatpush.bf16.msra.mxu0 0
        %1376 = vmatpush.bf16.msra.mxu0 %v1367
        %1377 = vmatmul.bf16.gmra.mxu0 %v1364
        %v1378 = vpop.f32.mrf.mxu0
        %v1379 = vadd.f32 0.0, %v1378
        %v1380 = vpop.f32.mrf.mxu0
        %1381 = vdwg.mxu0
        %1382 = vrot.lane.b32.xlu0 %v1211, 104
        %v1383 = vpop.permute.xlu0 %1382
        %1384 = vrot.lane.b32.xlu0 %v1212, 104
        %v1385 = vpop.permute.xlu0 %1384
        %v1387 = vsel %vm965, %v1383, 0
        %v1390 = vsel %vm965, %v1385, 0
        %1392 = vmatpush.bf16.xpose.msra.mxu0 0
        %1393 = vmatpush.bf16.xpose.msra.mxu0 0
        %1394 = vmatpush.bf16.xpose.msra.mxu0 0
        %1395 = vmatpush.bf16.xpose.msra.mxu0 0
        %1396 = vmatpush.bf16.xpose.msra.mxu0 0
        %1397 = vmatpush.bf16.xpose.msra.mxu0 0
        %1398 = vmatpush.bf16.xpose.msra.mxu0 0
        %1399 = vmatpush.bf16.xpose.msra.mxu0 %v1390
        %1400 = vmatmul.bf16.gmra.mxu0 %v1387
        %v1401 = vpop.f32.mrf.mxu0
        %v1402 = vadd.f32 0.0, %v1401
        %v1403 = vpop.f32.mrf.mxu0
        %1404 = vdwg.mxu0
        %v1405 = vsel %vm1210, %v1402, -1e+09
        %v1406 = vsel %vm965, %v1405, -inf
        %1407 = vmax.xlane.f32.xlu0 %v1406
        %v1408 = vpop.xlane.xlu0 %1407
        %v1409 = vsub.f32 %v1405, %v1408
        %v1410 = vmul.f32 %v1409, 1.442695
        %v1411 = vpow.pop %v1410
        %v1412 = vsel %vm965, %v1411, 0.0
        %1413 = vadd.xlane.f32.xlu0 %v1412
        %v1414 = vpop.xlane.xlu0 %1413
        %v1415 = vrcp.pop %v1414
        %v1416 = vmul.f32 %v1411, %v1415
        %v1417 = vpack.c.bf16 %v1416, %v1416
        %1418 = vrot.lane.b32.xlu0 %v1213, 104
        %v1419 = vpop.permute.xlu0 %1418
        %v1421 = vsel %vm965, %v1417, 0
        %v1424 = vsel %vm1001, %v1419, 0
        %1426 = vmatpush.bf16.msra.mxu0 0
        %1427 = vmatpush.bf16.msra.mxu0 0
        %1428 = vmatpush.bf16.msra.mxu0 0
        %1429 = vmatpush.bf16.msra.mxu0 0
        %1430 = vmatpush.bf16.msra.mxu0 0
        %1431 = vmatpush.bf16.msra.mxu0 0
        %1432 = vmatpush.bf16.msra.mxu0 0
        %1433 = vmatpush.bf16.msra.mxu0 %v1424
        %1434 = vmatmul.bf16.gmra.mxu0 %v1421
        %v1435 = vpop.f32.mrf.mxu0
        %v1436 = vadd.f32 0.0, %v1435
        %v1437 = vpop.f32.mrf.mxu0
        %1438 = vdwg.mxu0
        %1440 = vrot.lane.b32.xlu0 %v1322, 8
        %v1441 = vpop.permute.xlu0 %1440
        %1444 = vrot.lane.b32.xlu0 %v1379, 16
        %v1445 = vpop.permute.xlu0 %1444
        %1448 = vrot.lane.b32.xlu0 %v1436, 24
        %v1449 = vpop.permute.xlu0 %1448
        %v1451 = vsel %vm965, %v1262, %v1441
        %v1452 = vsel %vm1205, %v1451, %v1445
        %v1453 = vsel %vm1207, %v1452, %v1449
        %v1454 = vpack.c.bf16 %v1453, %v1208
        %v1459 = vunpack.c.l.b16 %v872
        %v1460 = vunpack.c.l.b16 %v873
        %v1461 = vunpack.c.l.b16 %v874
        %v1462 = vunpack.c.l.b16 %v875
        %v1463 = vpack.c.b16 %v1460, %v1459
        %v1464 = vpack.c.b16 %v1462, %v1461
        %v1468 = vsel %vm890, %v1454, 0
        %1470 = vmatpush.bf16.msra.mxu0 0
        %1471 = vmatpush.bf16.msra.mxu0 0
        %1472 = vmatpush.bf16.msra.mxu0 0
        %1473 = vmatpush.bf16.msra.mxu0 0
        %1474 = vmatpush.bf16.msra.mxu0 0
        %1475 = vmatpush.bf16.msra.mxu0 0
        %1476 = vmatpush.bf16.msra.mxu0 %v1464
        %1477 = vmatpush.bf16.msra.mxu0 %v1463
        %1478 = vmatmul.bf16.gmra.mxu0 %v1468
        %v1479 = vpop.f32.mrf.mxu0
        %v1480 = vadd.f32 %v851, %v1479
        %v1481 = vpop.f32.mrf.mxu0
        %v1482 = vadd.f32 %v852, %v1481
        %1483 = vdwg.mxu0
        %v1484 = vsel %vm890, %v1480, 0.0
        %1485 = vadd.xlane.f32.xlu0 %v1484
        %v1486 = vpop.xlane.xlu0 %1485
        %v1487 = vsel %vm890, %v1482, 0.0
        %1488 = vadd.xlane.f32.xlu0 %v1487
        %v1489 = vpop.xlane.xlu0 %1488
        %v1490 = vrcp.pop 32.0
        %v1491 = vmul.f32 32.0, %v1490
        %v1492 = vsub.f32 1.0, %v1491
        %v1493 = vmul.f32 %v1490, %v1492
        %v1494 = vadd.f32 %v1490, %v1493
        %vm1495 = vweird.f32 %v1490
        %v1496 = vsel %vm1495, %v1490, %v1494
        %v1497 = vmul.f32 %v1486, %v1496
        %v1498 = vmul.f32 %v1489, %v1496
        %v1499 = vsub.f32 %v1480, %v1497
        %v1500 = vsub.f32 %v1482, %v1498
        %v1501 = vmul.f32 %v1499, %v1499
        %v1502 = vmul.f32 %v1500, %v1500
        %v1503 = vsel %vm890, %v1501, 0.0
        %1504 = vadd.xlane.f32.xlu0 %v1503
        %v1505 = vpop.xlane.xlu0 %1504
        %v1506 = vsel %vm890, %v1502, 0.0
        %1507 = vadd.xlane.f32.xlu0 %v1506
        %v1508 = vpop.xlane.xlu0 %1507
        %v1509 = vmul.f32 %v1505, %v1496
        %v1510 = vmul.f32 %v1508, %v1496
        %v1511 = vadd.f32 %v1509, 1e-06
        %v1512 = vadd.f32 %v1510, 1e-06
        %v1513 = vrsqrt.pop %v1511
        %v1514 = vmul.f32 %v1513, %v1511
        %v1515 = vmul.f32 %v1514, %v1513
        %v1516 = vmul.f32 0.5, %v1515
        %v1517 = vsub.f32 1.5, %v1516
        %v1518 = vmul.f32 %v1513, %v1517
        %vm1519 = vweird.f32 %v1511
        %vm1520 = vweird.f32 %v1513
        %vm1521 = vmor %vm1519, %vm1520
        %v1522 = vsel %vm1521, %v1513, %v1518
        %v1523 = vrsqrt.pop %v1512
        %v1524 = vmul.f32 %v1523, %v1512
        %v1525 = vmul.f32 %v1524, %v1523
        %v1526 = vmul.f32 0.5, %v1525
        %v1527 = vsub.f32 1.5, %v1526
        %v1528 = vmul.f32 %v1523, %v1527
        %vm1529 = vweird.f32 %v1512
        %vm1530 = vweird.f32 %v1523
        %vm1531 = vmor %vm1529, %vm1530
        %v1532 = vsel %vm1531, %v1523, %v1528
        %v1533 = vmul.f32 %v1499, %v1522
        %v1534 = vmul.f32 %v1500, %v1532
        %v1535 = vperm.slane %v876, 0
        %v1536 = vmul.f32 %v1533, %v1535
        %v1537 = vmul.f32 %v1534, %v1535
        %v1538 = vperm.slane %v877, 0
        %v1539 = vadd.f32 %v1536, %v1538
        %v1540 = vadd.f32 %v1537, %v1538
        %v1541 = vpack.c.bf16 %v1540, %v1539
        %s1542 = scalar_lea.vmem %s814, 16
        %v1543 = vld [vmem:[%s1542] sm:$0xf]
        %v1544 = vld [vmem:[%s1542 + $0x4] sm:$0xf]
        %v1545 = vld [vmem:[%s1542 + $0x8] sm:$0xf]
        %v1546 = vld [vmem:[%s1542 + $0xc] sm:$0xf]
        %s1547 = scalar_lea.vmem %s689, 16 [#allocation10]
        %v1548 = vld [vmem:[%s1547] sm:$0xf]
        %v1549 = vld [vmem:[%s1547 + $0x4] sm:$0xf]
        %v1550 = vld [vmem:[%s1547 + $0x8] sm:$0xf]
        %v1551 = vld [vmem:[%s1547 + $0xc] sm:$0xf]
        %s1552 = scalar_lea.vmem %s699, 16 [#allocation11]
        %v1553 = vld [vmem:[%s1552] sm:$0xf]
        %v1554 = vld [vmem:[%s1552 + $0x4] sm:$0xf]
        %v1555 = vld [vmem:[%s1552 + $0x8] sm:$0xf]
        %v1556 = vld [vmem:[%s1552 + $0xc] sm:$0xf]
        %s1557 = scalar_lea.vmem %s709, 16 [#allocation12]
        %v1558 = vld [vmem:[%s1557] sm:$0xf]
        %v1559 = vld [vmem:[%s1557 + $0x4] sm:$0xf]
        %v1560 = vld [vmem:[%s1557 + $0x8] sm:$0xf]
        %v1561 = vld [vmem:[%s1557 + $0xc] sm:$0xf]
        %v1562 = vld [vmem:[%s818 + $0x1] sm:$0x1]
        %v1563 = vld [vmem:[%s719 + $0x1] sm:$0x1]
        %v1568 = vunpack.c.l.b16 %v1543
        %v1569 = vunpack.c.l.b16 %v1544
        %v1570 = vunpack.c.l.b16 %v1545
        %v1571 = vunpack.c.l.b16 %v1546
        %v1572 = vpack.c.b16 %v1569, %v1568
        %v1573 = vpack.c.b16 %v1571, %v1570
        %v1577 = vsel %vm890, %v1541, 0
        %1579 = vmatpush.bf16.msra.mxu0 0
        %1580 = vmatpush.bf16.msra.mxu0 0
        %1581 = vmatpush.bf16.msra.mxu0 0
        %1582 = vmatpush.bf16.msra.mxu0 0
        %1583 = vmatpush.bf16.msra.mxu0 0
        %1584 = vmatpush.bf16.msra.mxu0 0
        %1585 = vmatpush.bf16.msra.mxu0 %v1573
        %1586 = vmatpush.bf16.msra.mxu0 %v1572
        %1587 = vmatmul.bf16.gmra.mxu0 %v1577
        %v1588 = vpop.f32.mrf.mxu0
        %v1589 = vadd.f32 0.0, %v1588
        %v1590 = vpop.f32.mrf.mxu0
        %v1591 = vadd.f32 0.0, %v1590
        %1592 = vdwg.mxu0
        %v1595 = vunpack.c.l.b16 %v857
        %v1596 = vunpack.c.l.b16 %v858
        %v1597 = vpack.c.b16 %v1596, %v1595
        %v1602 = vunpack.c.l.b16 %v1548
        %v1603 = vunpack.c.l.b16 %v1549
        %v1604 = vunpack.c.l.b16 %v1550
        %v1605 = vunpack.c.l.b16 %v1551
        %v1606 = vpack.c.b16 %v1603, %v1602
        %v1607 = vpack.c.b16 %v1605, %v1604
        %v1611 = vsel %vm890, %v1597, 0
        %1613 = vmatpush.bf16.msra.mxu0 0
        %1614 = vmatpush.bf16.msra.mxu0 0
        %1615 = vmatpush.bf16.msra.mxu0 0
        %1616 = vmatpush.bf16.msra.mxu0 0
        %1617 = vmatpush.bf16.msra.mxu0 0
        %1618 = vmatpush.bf16.msra.mxu0 0
        %1619 = vmatpush.bf16.msra.mxu0 %v1607
        %1620 = vmatpush.bf16.msra.mxu0 %v1606
        %1621 = vmatmul.bf16.gmra.mxu0 %v1611
        %v1622 = vpop.f32.mrf.mxu0
        %v1623 = vadd.f32 0.0, %v1622
        %v1624 = vpop.f32.mrf.mxu0
        %v1625 = vadd.f32 0.0, %v1624
        %1626 = vdwg.mxu0
        %v1631 = vunpack.c.l.b16 %v1553
        %v1632 = vunpack.c.l.b16 %v1554
        %v1633 = vunpack.c.l.b16 %v1555
        %v1634 = vunpack.c.l.b16 %v1556
        %v1635 = vpack.c.b16 %v1632, %v1631
        %v1636 = vpack.c.b16 %v1634, %v1633
        %1639 = vmatpush.bf16.msra.mxu0 0
        %1640 = vmatpush.bf16.msra.mxu0 0
        %1641 = vmatpush.bf16.msra.mxu0 0
        %1642 = vmatpush.bf16.msra.mxu0 0
        %1643 = vmatpush.bf16.msra.mxu0 0
        %1644 = vmatpush.bf16.msra.mxu0 0
        %1645 = vmatpush.bf16.msra.mxu0 %v1636
        %1646 = vmatpush.bf16.msra.mxu0 %v1635
        %1647 = vmatmul.bf16.gmra.mxu0 %v1611
        %v1648 = vpop.f32.mrf.mxu0
        %v1649 = vadd.f32 0.0, %v1648
        %v1650 = vpop.f32.mrf.mxu0
        %v1651 = vadd.f32 0.0, %v1650
        %1652 = vdwg.mxu0
        %v1653 = vunpack.c.l.bf16 %v855
        %vm1654 = vcmp.ne.f32.partialorder %v1653, 0.0
        %v1655 = vpack.c.bf16 %v1589, %v1589
        %v1656 = vpack.c.bf16 %v1623, %v1623
        %v1657 = vpack.c.bf16 %v1649, %v1649
        %v1659 = vsel %vm965, %v1655, 0
        %v1662 = vsel %vm965, %v1656, 0
        %1664 = vmatpush.bf16.xpose.msra.mxu0 0
        %1665 = vmatpush.bf16.xpose.msra.mxu0 0
        %1666 = vmatpush.bf16.xpose.msra.mxu0 0
        %1667 = vmatpush.bf16.xpose.msra.mxu0 0
        %1668 = vmatpush.bf16.xpose.msra.mxu0 0
        %1669 = vmatpush.bf16.xpose.msra.mxu0 0
        %1670 = vmatpush.bf16.xpose.msra.mxu0 0
        %1671 = vmatpush.bf16.xpose.msra.mxu0 %v1662
        %1672 = vmatmul.bf16.gmra.mxu0 %v1659
        %v1673 = vpop.f32.mrf.mxu0
        %v1674 = vadd.f32 0.0, %v1673
        %v1675 = vpop.f32.mrf.mxu0
        %1676 = vdwg.mxu0
        %v1677 = vsel %vm1654, %v1674, -1e+09
        %v1678 = vsel %vm965, %v1677, -inf
        %1679 = vmax.xlane.f32.xlu0 %v1678
        %v1680 = vpop.xlane.xlu0 %1679
        %v1681 = vsub.f32 %v1677, %v1680
        %v1682 = vmul.f32 %v1681, 1.442695
        %v1683 = vpow.pop %v1682
        %v1684 = vsel %vm965, %v1683, 0.0
        %1685 = vadd.xlane.f32.xlu0 %v1684
        %v1686 = vpop.xlane.xlu0 %1685
        %v1687 = vrcp.pop %v1686
        %v1688 = vmul.f32 %v1683, %v1687
        %v1689 = vpack.c.bf16 %v1688, %v1688
        %v1691 = vsel %vm965, %v1689, 0
        %v1694 = vsel %vm1001, %v1657, 0
        %1696 = vmatpush.bf16.msra.mxu0 0
        %1697 = vmatpush.bf16.msra.mxu0 0
        %1698 = vmatpush.bf16.msra.mxu0 0
        %1699 = vmatpush.bf16.msra.mxu0 0
        %1700 = vmatpush.bf16.msra.mxu0 0
        %1701 = vmatpush.bf16.msra.mxu0 0
        %1702 = vmatpush.bf16.msra.mxu0 0
        %1703 = vmatpush.bf16.msra.mxu0 %v1694
        %1704 = vmatmul.bf16.gmra.mxu0 %v1691
        %v1705 = vpop.f32.mrf.mxu0
        %v1706 = vadd.f32 0.0, %v1705
        %v1707 = vpop.f32.mrf.mxu0
        %1708 = vdwg.mxu0
        %1710 = vrot.lane.b32.xlu0 %v1655, 120
        %v1711 = vpop.permute.xlu0 %1710
        %1713 = vrot.lane.b32.xlu0 %v1656, 120
        %v1714 = vpop.permute.xlu0 %1713
        %v1716 = vsel %vm965, %v1711, 0
        %v1719 = vsel %vm965, %v1714, 0
        %1721 = vmatpush.bf16.xpose.msra.mxu0 0
        %1722 = vmatpush.bf16.xpose.msra.mxu0 0
        %1723 = vmatpush.bf16.xpose.msra.mxu0 0
        %1724 = vmatpush.bf16.xpose.msra.mxu0 0
        %1725 = vmatpush.bf16.xpose.msra.mxu0 0
        %1726 = vmatpush.bf16.xpose.msra.mxu0 0
        %1727 = vmatpush.bf16.xpose.msra.mxu0 0
        %1728 = vmatpush.bf16.xpose.msra.mxu0 %v1719
        %1729 = vmatmul.bf16.gmra.mxu0 %v1716
        %v1730 = vpop.f32.mrf.mxu0
        %v1731 = vadd.f32 0.0, %v1730
        %v1732 = vpop.f32.mrf.mxu0
        %1733 = vdwg.mxu0
        %v1734 = vsel %vm1654, %v1731, -1e+09
        %v1735 = vsel %vm965, %v1734, -inf
        %1736 = vmax.xlane.f32.xlu0 %v1735
        %v1737 = vpop.xlane.xlu0 %1736
        %v1738 = vsub.f32 %v1734, %v1737
        %v1739 = vmul.f32 %v1738, 1.442695
        %v1740 = vpow.pop %v1739
        %v1741 = vsel %vm965, %v1740, 0.0
        %1742 = vadd.xlane.f32.xlu0 %v1741
        %v1743 = vpop.xlane.xlu0 %1742
        %v1744 = vrcp.pop %v1743
        %v1745 = vmul.f32 %v1740, %v1744
        %v1746 = vpack.c.bf16 %v1745, %v1745
        %1748 = vrot.lane.b32.xlu0 %v1657, 120
        %v1749 = vpop.permute.xlu0 %1748
        %v1751 = vsel %vm965, %v1746, 0
        %v1754 = vsel %vm1001, %v1749, 0
        %1756 = vmatpush.bf16.msra.mxu0 0
        %1757 = vmatpush.bf16.msra.mxu0 0
        %1758 = vmatpush.bf16.msra.mxu0 0
        %1759 = vmatpush.bf16.msra.mxu0 0
        %1760 = vmatpush.bf16.msra.mxu0 0
        %1761 = vmatpush.bf16.msra.mxu0 0
        %1762 = vmatpush.bf16.msra.mxu0 0
        %1763 = vmatpush.bf16.msra.mxu0 %v1754
        %1764 = vmatmul.bf16.gmra.mxu0 %v1751
        %v1765 = vpop.f32.mrf.mxu0
        %v1766 = vadd.f32 0.0, %v1765
        %v1767 = vpop.f32.mrf.mxu0
        %1768 = vdwg.mxu0
        %1769 = vrot.lane.b32.xlu0 %v1655, 112
        %v1770 = vpop.permute.xlu0 %1769
        %1771 = vrot.lane.b32.xlu0 %v1656, 112
        %v1772 = vpop.permute.xlu0 %1771
        %v1774 = vsel %vm965, %v1770, 0
        %v1777 = vsel %vm965, %v1772, 0
        %1779 = vmatpush.bf16.xpose.msra.mxu0 0
        %1780 = vmatpush.bf16.xpose.msra.mxu0 0
        %1781 = vmatpush.bf16.xpose.msra.mxu0 0
        %1782 = vmatpush.bf16.xpose.msra.mxu0 0
        %1783 = vmatpush.bf16.xpose.msra.mxu0 0
        %1784 = vmatpush.bf16.xpose.msra.mxu0 0
        %1785 = vmatpush.bf16.xpose.msra.mxu0 0
        %1786 = vmatpush.bf16.xpose.msra.mxu0 %v1777
        %1787 = vmatmul.bf16.gmra.mxu0 %v1774
        %v1788 = vpop.f32.mrf.mxu0
        %v1789 = vadd.f32 0.0, %v1788
        %v1790 = vpop.f32.mrf.mxu0
        %1791 = vdwg.mxu0
        %v1792 = vsel %vm1654, %v1789, -1e+09
        %v1793 = vsel %vm965, %v1792, -inf
        %1794 = vmax.xlane.f32.xlu0 %v1793
        %v1795 = vpop.xlane.xlu0 %1794
        %v1796 = vsub.f32 %v1792, %v1795
        %v1797 = vmul.f32 %v1796, 1.442695
        %v1798 = vpow.pop %v1797
        %v1799 = vsel %vm965, %v1798, 0.0
        %1800 = vadd.xlane.f32.xlu0 %v1799
        %v1801 = vpop.xlane.xlu0 %1800
        %v1802 = vrcp.pop %v1801
        %v1803 = vmul.f32 %v1798, %v1802
        %v1804 = vpack.c.bf16 %v1803, %v1803
        %1805 = vrot.lane.b32.xlu0 %v1657, 112
        %v1806 = vpop.permute.xlu0 %1805
        %v1808 = vsel %vm965, %v1804, 0
        %v1811 = vsel %vm1001, %v1806, 0
        %1813 = vmatpush.bf16.msra.mxu0 0
        %1814 = vmatpush.bf16.msra.mxu0 0
        %1815 = vmatpush.bf16.msra.mxu0 0
        %1816 = vmatpush.bf16.msra.mxu0 0
        %1817 = vmatpush.bf16.msra.mxu0 0
        %1818 = vmatpush.bf16.msra.mxu0 0
        %1819 = vmatpush.bf16.msra.mxu0 0
        %1820 = vmatpush.bf16.msra.mxu0 %v1811
        %1821 = vmatmul.bf16.gmra.mxu0 %v1808
        %v1822 = vpop.f32.mrf.mxu0
        %v1823 = vadd.f32 0.0, %v1822
        %v1824 = vpop.f32.mrf.mxu0
        %1825 = vdwg.mxu0
        %1826 = vrot.lane.b32.xlu0 %v1655, 104
        %v1827 = vpop.permute.xlu0 %1826
        %1828 = vrot.lane.b32.xlu0 %v1656, 104
        %v1829 = vpop.permute.xlu0 %1828
        %v1831 = vsel %vm965, %v1827, 0
        %v1834 = vsel %vm965, %v1829, 0
        %1836 = vmatpush.bf16.xpose.msra.mxu0 0
        %1837 = vmatpush.bf16.xpose.msra.mxu0 0
        %1838 = vmatpush.bf16.xpose.msra.mxu0 0
        %1839 = vmatpush.bf16.xpose.msra.mxu0 0
        %1840 = vmatpush.bf16.xpose.msra.mxu0 0
        %1841 = vmatpush.bf16.xpose.msra.mxu0 0
        %1842 = vmatpush.bf16.xpose.msra.mxu0 0
        %1843 = vmatpush.bf16.xpose.msra.mxu0 %v1834
        %1844 = vmatmul.bf16.gmra.mxu0 %v1831
        %v1845 = vpop.f32.mrf.mxu0
        %v1846 = vadd.f32 0.0, %v1845
        %v1847 = vpop.f32.mrf.mxu0
        %1848 = vdwg.mxu0
        %v1849 = vsel %vm1654, %v1846, -1e+09
        %v1850 = vsel %vm965, %v1849, -inf
        %1851 = vmax.xlane.f32.xlu0 %v1850
        %v1852 = vpop.xlane.xlu0 %1851
        %v1853 = vsub.f32 %v1849, %v1852
        %v1854 = vmul.f32 %v1853, 1.442695
        %v1855 = vpow.pop %v1854
        %v1856 = vsel %vm965, %v1855, 0.0
        %1857 = vadd.xlane.f32.xlu0 %v1856
        %v1858 = vpop.xlane.xlu0 %1857
        %v1859 = vrcp.pop %v1858
        %v1860 = vmul.f32 %v1855, %v1859
        %v1861 = vpack.c.bf16 %v1860, %v1860
        %1862 = vrot.lane.b32.xlu0 %v1657, 104
        %v1863 = vpop.permute.xlu0 %1862
        %v1865 = vsel %vm965, %v1861, 0
        %v1868 = vsel %vm1001, %v1863, 0
        %1870 = vmatpush.bf16.msra.mxu0 0
        %1871 = vmatpush.bf16.msra.mxu0 0
        %1872 = vmatpush.bf16.msra.mxu0 0
        %1873 = vmatpush.bf16.msra.mxu0 0
        %1874 = vmatpush.bf16.msra.mxu0 0
        %1875 = vmatpush.bf16.msra.mxu0 0
        %1876 = vmatpush.bf16.msra.mxu0 0
        %1877 = vmatpush.bf16.msra.mxu0 %v1868
        %1878 = vmatmul.bf16.gmra.mxu0 %v1865
        %v1879 = vpop.f32.mrf.mxu0
        %v1880 = vadd.f32 0.0, %v1879
        %v1881 = vpop.f32.mrf.mxu0
        %1882 = vdwg.mxu0
        %1884 = vrot.lane.b32.xlu0 %v1766, 8
        %v1885 = vpop.permute.xlu0 %1884
        %1888 = vrot.lane.b32.xlu0 %v1823, 16
        %v1889 = vpop.permute.xlu0 %1888
        %1892 = vrot.lane.b32.xlu0 %v1880, 24
        %v1893 = vpop.permute.xlu0 %1892
        %v1895 = vsel %vm965, %v1706, %v1885
        %v1896 = vsel %vm1205, %v1895, %v1889
        %v1897 = vsel %vm1207, %v1896, %v1893
        %v1898 = vunpack.c.l.bf16 %v856
        %vm1899 = vcmp.ne.f32.partialorder %v1898, 0.0
        %v1900 = vpack.c.bf16 %v1591, %v1591
        %v1901 = vpack.c.bf16 %v1625, %v1625
        %v1902 = vpack.c.bf16 %v1651, %v1651
        %v1904 = vsel %vm965, %v1900, 0
        %v1907 = vsel %vm965, %v1901, 0
        %1909 = vmatpush.bf16.xpose.msra.mxu0 0
        %1910 = vmatpush.bf16.xpose.msra.mxu0 0
        %1911 = vmatpush.bf16.xpose.msra.mxu0 0
        %1912 = vmatpush.bf16.xpose.msra.mxu0 0
        %1913 = vmatpush.bf16.xpose.msra.mxu0 0
        %1914 = vmatpush.bf16.xpose.msra.mxu0 0
        %1915 = vmatpush.bf16.xpose.msra.mxu0 0
        %1916 = vmatpush.bf16.xpose.msra.mxu0 %v1907
        %1917 = vmatmul.bf16.gmra.mxu0 %v1904
        %v1918 = vpop.f32.mrf.mxu0
        %v1919 = vadd.f32 0.0, %v1918
        %v1920 = vpop.f32.mrf.mxu0
        %1921 = vdwg.mxu0
        %v1922 = vsel %vm1899, %v1919, -1e+09
        %v1923 = vsel %vm965, %v1922, -inf
        %1924 = vmax.xlane.f32.xlu0 %v1923
        %v1925 = vpop.xlane.xlu0 %1924
        %v1926 = vsub.f32 %v1922, %v1925
        %v1927 = vmul.f32 %v1926, 1.442695
        %v1928 = vpow.pop %v1927
        %v1929 = vsel %vm965, %v1928, 0.0
        %1930 = vadd.xlane.f32.xlu0 %v1929
        %v1931 = vpop.xlane.xlu0 %1930
        %v1932 = vrcp.pop %v1931
        %v1933 = vmul.f32 %v1928, %v1932
        %v1934 = vpack.c.bf16 %v1933, %v1933
        %v1936 = vsel %vm965, %v1934, 0
        %v1939 = vsel %vm1001, %v1902, 0
        %1941 = vmatpush.bf16.msra.mxu0 0
        %1942 = vmatpush.bf16.msra.mxu0 0
        %1943 = vmatpush.bf16.msra.mxu0 0
        %1944 = vmatpush.bf16.msra.mxu0 0
        %1945 = vmatpush.bf16.msra.mxu0 0
        %1946 = vmatpush.bf16.msra.mxu0 0
        %1947 = vmatpush.bf16.msra.mxu0 0
        %1948 = vmatpush.bf16.msra.mxu0 %v1939
        %1949 = vmatmul.bf16.gmra.mxu0 %v1936
        %v1950 = vpop.f32.mrf.mxu0
        %v1951 = vadd.f32 0.0, %v1950
        %v1952 = vpop.f32.mrf.mxu0
        %1953 = vdwg.mxu0
        %1955 = vrot.lane.b32.xlu0 %v1900, 120
        %v1956 = vpop.permute.xlu0 %1955
        %1958 = vrot.lane.b32.xlu0 %v1901, 120
        %v1959 = vpop.permute.xlu0 %1958
        %v1961 = vsel %vm965, %v1956, 0
        %v1964 = vsel %vm965, %v1959, 0
        %1966 = vmatpush.bf16.xpose.msra.mxu0 0
        %1967 = vmatpush.bf16.xpose.msra.mxu0 0
        %1968 = vmatpush.bf16.xpose.msra.mxu0 0
        %1969 = vmatpush.bf16.xpose.msra.mxu0 0
        %1970 = vmatpush.bf16.xpose.msra.mxu0 0
        %1971 = vmatpush.bf16.xpose.msra.mxu0 0
        %1972 = vmatpush.bf16.xpose.msra.mxu0 0
        %1973 = vmatpush.bf16.xpose.msra.mxu0 %v1964
        %1974 = vmatmul.bf16.gmra.mxu0 %v1961
        %v1975 = vpop.f32.mrf.mxu0
        %v1976 = vadd.f32 0.0, %v1975
        %v1977 = vpop.f32.mrf.mxu0
        %1978 = vdwg.mxu0
        %v1979 = vsel %vm1899, %v1976, -1e+09
        %v1980 = vsel %vm965, %v1979, -inf
        %1981 = vmax.xlane.f32.xlu0 %v1980
        %v1982 = vpop.xlane.xlu0 %1981
        %v1983 = vsub.f32 %v1979, %v1982
        %v1984 = vmul.f32 %v1983, 1.442695
        %v1985 = vpow.pop %v1984
        %v1986 = vsel %vm965, %v1985, 0.0
        %1987 = vadd.xlane.f32.xlu0 %v1986
        %v1988 = vpop.xlane.xlu0 %1987
        %v1989 = vrcp.pop %v1988
        %v1990 = vmul.f32 %v1985, %v1989
        %v1991 = vpack.c.bf16 %v1990, %v1990
        %1993 = vrot.lane.b32.xlu0 %v1902, 120
        %v1994 = vpop.permute.xlu0 %1993
        %v1996 = vsel %vm965, %v1991, 0
        %v1999 = vsel %vm1001, %v1994, 0
        %2001 = vmatpush.bf16.msra.mxu0 0
        %2002 = vmatpush.bf16.msra.mxu0 0
        %2003 = vmatpush.bf16.msra.mxu0 0
        %2004 = vmatpush.bf16.msra.mxu0 0
        %2005 = vmatpush.bf16.msra.mxu0 0
        %2006 = vmatpush.bf16.msra.mxu0 0
        %2007 = vmatpush.bf16.msra.mxu0 0
        %2008 = vmatpush.bf16.msra.mxu0 %v1999
        %2009 = vmatmul.bf16.gmra.mxu0 %v1996
        %v2010 = vpop.f32.mrf.mxu0
        %v2011 = vadd.f32 0.0, %v2010
        %v2012 = vpop.f32.mrf.mxu0
        %2013 = vdwg.mxu0
        %2014 = vrot.lane.b32.xlu0 %v1900, 112
        %v2015 = vpop.permute.xlu0 %2014
        %2016 = vrot.lane.b32.xlu0 %v1901, 112
        %v2017 = vpop.permute.xlu0 %2016
        %v2019 = vsel %vm965, %v2015, 0
        %v2022 = vsel %vm965, %v2017, 0
        %2024 = vmatpush.bf16.xpose.msra.mxu0 0
        %2025 = vmatpush.bf16.xpose.msra.mxu0 0
        %2026 = vmatpush.bf16.xpose.msra.mxu0 0
        %2027 = vmatpush.bf16.xpose.msra.mxu0 0
        %2028 = vmatpush.bf16.xpose.msra.mxu0 0
        %2029 = vmatpush.bf16.xpose.msra.mxu0 0
        %2030 = vmatpush.bf16.xpose.msra.mxu0 0
        %2031 = vmatpush.bf16.xpose.msra.mxu0 %v2022
        %2032 = vmatmul.bf16.gmra.mxu0 %v2019
        %v2033 = vpop.f32.mrf.mxu0
        %v2034 = vadd.f32 0.0, %v2033
        %v2035 = vpop.f32.mrf.mxu0
        %2036 = vdwg.mxu0
        %v2037 = vsel %vm1899, %v2034, -1e+09
        %v2038 = vsel %vm965, %v2037, -inf
        %2039 = vmax.xlane.f32.xlu0 %v2038
        %v2040 = vpop.xlane.xlu0 %2039
        %v2041 = vsub.f32 %v2037, %v2040
        %v2042 = vmul.f32 %v2041, 1.442695
        %v2043 = vpow.pop %v2042
        %v2044 = vsel %vm965, %v2043, 0.0
        %2045 = vadd.xlane.f32.xlu0 %v2044
        %v2046 = vpop.xlane.xlu0 %2045
        %v2047 = vrcp.pop %v2046
        %v2048 = vmul.f32 %v2043, %v2047
        %v2049 = vpack.c.bf16 %v2048, %v2048
        %2050 = vrot.lane.b32.xlu0 %v1902, 112
        %v2051 = vpop.permute.xlu0 %2050
        %v2053 = vsel %vm965, %v2049, 0
        %v2056 = vsel %vm1001, %v2051, 0
        %2058 = vmatpush.bf16.msra.mxu0 0
        %2059 = vmatpush.bf16.msra.mxu0 0
        %2060 = vmatpush.bf16.msra.mxu0 0
        %2061 = vmatpush.bf16.msra.mxu0 0
        %2062 = vmatpush.bf16.msra.mxu0 0
        %2063 = vmatpush.bf16.msra.mxu0 0
        %2064 = vmatpush.bf16.msra.mxu0 0
        %2065 = vmatpush.bf16.msra.mxu0 %v2056
        %2066 = vmatmul.bf16.gmra.mxu0 %v2053
        %v2067 = vpop.f32.mrf.mxu0
        %v2068 = vadd.f32 0.0, %v2067
        %v2069 = vpop.f32.mrf.mxu0
        %2070 = vdwg.mxu0
        %2071 = vrot.lane.b32.xlu0 %v1900, 104
        %v2072 = vpop.permute.xlu0 %2071
        %2073 = vrot.lane.b32.xlu0 %v1901, 104
        %v2074 = vpop.permute.xlu0 %2073
        %v2076 = vsel %vm965, %v2072, 0
        %v2079 = vsel %vm965, %v2074, 0
        %2081 = vmatpush.bf16.xpose.msra.mxu0 0
        %2082 = vmatpush.bf16.xpose.msra.mxu0 0
        %2083 = vmatpush.bf16.xpose.msra.mxu0 0
        %2084 = vmatpush.bf16.xpose.msra.mxu0 0
        %2085 = vmatpush.bf16.xpose.msra.mxu0 0
        %2086 = vmatpush.bf16.xpose.msra.mxu0 0
        %2087 = vmatpush.bf16.xpose.msra.mxu0 0
        %2088 = vmatpush.bf16.xpose.msra.mxu0 %v2079
        %2089 = vmatmul.bf16.gmra.mxu0 %v2076
        %v2090 = vpop.f32.mrf.mxu0
        %v2091 = vadd.f32 0.0, %v2090
        %v2092 = vpop.f32.mrf.mxu0
        %2093 = vdwg.mxu0
        %v2094 = vsel %vm1899, %v2091, -1e+09
        %v2095 = vsel %vm965, %v2094, -inf
        %2096 = vmax.xlane.f32.xlu0 %v2095
        %v2097 = vpop.xlane.xlu0 %2096
        %v2098 = vsub.f32 %v2094, %v2097
        %v2099 = vmul.f32 %v2098, 1.442695
        %v2100 = vpow.pop %v2099
        %v2101 = vsel %vm965, %v2100, 0.0
        %2102 = vadd.xlane.f32.xlu0 %v2101
        %v2103 = vpop.xlane.xlu0 %2102
        %v2104 = vrcp.pop %v2103
        %v2105 = vmul.f32 %v2100, %v2104
        %v2106 = vpack.c.bf16 %v2105, %v2105
        %2107 = vrot.lane.b32.xlu0 %v1902, 104
        %v2108 = vpop.permute.xlu0 %2107
        %v2110 = vsel %vm965, %v2106, 0
        %v2113 = vsel %vm1001, %v2108, 0
        %2115 = vmatpush.bf16.msra.mxu0 0
        %2116 = vmatpush.bf16.msra.mxu0 0
        %2117 = vmatpush.bf16.msra.mxu0 0
        %2118 = vmatpush.bf16.msra.mxu0 0
        %2119 = vmatpush.bf16.msra.mxu0 0
        %2120 = vmatpush.bf16.msra.mxu0 0
        %2121 = vmatpush.bf16.msra.mxu0 0
        %2122 = vmatpush.bf16.msra.mxu0 %v2113
        %2123 = vmatmul.bf16.gmra.mxu0 %v2110
        %v2124 = vpop.f32.mrf.mxu0
        %v2125 = vadd.f32 0.0, %v2124
        %v2126 = vpop.f32.mrf.mxu0
        %2127 = vdwg.mxu0
        %2129 = vrot.lane.b32.xlu0 %v2011, 8
        %v2130 = vpop.permute.xlu0 %2129
        %2133 = vrot.lane.b32.xlu0 %v2068, 16
        %v2134 = vpop.permute.xlu0 %2133
        %2137 = vrot.lane.b32.xlu0 %v2125, 24
        %v2138 = vpop.permute.xlu0 %2137
        %v2140 = vsel %vm965, %v1951, %v2130
        %v2141 = vsel %vm1205, %v2140, %v2134
        %v2142 = vsel %vm1207, %v2141, %v2138
        %v2143 = vpack.c.bf16 %v2142, %v1897
        %v2148 = vunpack.c.l.b16 %v1558
        %v2149 = vunpack.c.l.b16 %v1559
        %v2150 = vunpack.c.l.b16 %v1560
        %v2151 = vunpack.c.l.b16 %v1561
        %v2152 = vpack.c.b16 %v2149, %v2148
        %v2153 = vpack.c.b16 %v2151, %v2150
        %v2157 = vsel %vm890, %v2143, 0
        %2159 = vmatpush.bf16.msra.mxu0 0
        %2160 = vmatpush.bf16.msra.mxu0 0
        %2161 = vmatpush.bf16.msra.mxu0 0
        %2162 = vmatpush.bf16.msra.mxu0 0
        %2163 = vmatpush.bf16.msra.mxu0 0
        %2164 = vmatpush.bf16.msra.mxu0 0
        %2165 = vmatpush.bf16.msra.mxu0 %v2153
        %2166 = vmatpush.bf16.msra.mxu0 %v2152
        %2167 = vmatmul.bf16.gmra.mxu0 %v2157
        %v2168 = vpop.f32.mrf.mxu0
        %v2169 = vadd.f32 %v1539, %v2168
        %v2170 = vpop.f32.mrf.mxu0
        %v2171 = vadd.f32 %v1540, %v2170
        %2172 = vdwg.mxu0
        %v2173 = vsel %vm890, %v2169, 0.0
        %2174 = vadd.xlane.f32.xlu0 %v2173
        %v2175 = vpop.xlane.xlu0 %2174
        %v2176 = vsel %vm890, %v2171, 0.0
        %2177 = vadd.xlane.f32.xlu0 %v2176
        %v2178 = vpop.xlane.xlu0 %2177
        %v2179 = vmul.f32 %v2175, %v1496
        %v2180 = vmul.f32 %v2178, %v1496
        %v2181 = vsub.f32 %v2169, %v2179
        %v2182 = vsub.f32 %v2171, %v2180
        %v2183 = vmul.f32 %v2181, %v2181
        %v2184 = vmul.f32 %v2182, %v2182
        %v2185 = vsel %vm890, %v2183, 0.0
        %2186 = vadd.xlane.f32.xlu0 %v2185
        %v2187 = vpop.xlane.xlu0 %2186
        %v2188 = vsel %vm890, %v2184, 0.0
        %2189 = vadd.xlane.f32.xlu0 %v2188
        %v2190 = vpop.xlane.xlu0 %2189
        %v2191 = vmul.f32 %v2187, %v1496
        %v2192 = vmul.f32 %v2190, %v1496
        %v2193 = vadd.f32 %v2191, 1e-06
        %v2194 = vadd.f32 %v2192, 1e-06
        %v2195 = vrsqrt.pop %v2193
        %v2196 = vmul.f32 %v2195, %v2193
        %v2197 = vmul.f32 %v2196, %v2195
        %v2198 = vmul.f32 0.5, %v2197
        %v2199 = vsub.f32 1.5, %v2198
        %v2200 = vmul.f32 %v2195, %v2199
        %vm2201 = vweird.f32 %v2193
        %vm2202 = vweird.f32 %v2195
        %vm2203 = vmor %vm2201, %vm2202
        %v2204 = vsel %vm2203, %v2195, %v2200
        %v2205 = vrsqrt.pop %v2194
        %v2206 = vmul.f32 %v2205, %v2194
        %v2207 = vmul.f32 %v2206, %v2205
        %v2208 = vmul.f32 0.5, %v2207
        %v2209 = vsub.f32 1.5, %v2208
        %v2210 = vmul.f32 %v2205, %v2209
        %vm2211 = vweird.f32 %v2194
        %vm2212 = vweird.f32 %v2205
        %vm2213 = vmor %vm2211, %vm2212
        %v2214 = vsel %vm2213, %v2205, %v2210
        %v2215 = vmul.f32 %v2181, %v2204
        %v2216 = vmul.f32 %v2182, %v2214
        %v2217 = vperm.slane %v1562, 0
        %v2218 = vmul.f32 %v2215, %v2217
        %v2219 = vmul.f32 %v2216, %v2217
        %v2220 = vperm.slane %v1563, 0
        %v2221 = vadd.f32 %v2218, %v2220
        %v2222 = vadd.f32 %v2219, %v2220
        %v2223 = vld [vmem:[%s823] sm:$0xf]
        %v2224 = vld [vmem:[%s823 + $0x4] sm:$0xf]
        %v2225 = vld [vmem:[%s823 + $0x8] sm:$0xf]
        %v2226 = vld [vmem:[%s823 + $0xc] sm:$0xf]
        %v2227 = vld [vmem:[%s826] sm:$0x1]
        %v2228 = vld [vmem:[%s831] sm:$0xf]
        %v2229 = vld [vmem:[%s831 + $0x4] sm:$0xf]
        %v2230 = vld [vmem:[%s831 + $0x8] sm:$0xf]
        %v2231 = vld [vmem:[%s831 + $0xc] sm:$0xf]
        %v2232 = vld [vmem:[%s831 + $0x10] sm:$0xf]
        %v2233 = vld [vmem:[%s831 + $0x14] sm:$0xf]
        %v2234 = vld [vmem:[%s831 + $0x18] sm:$0xf]
        %v2235 = vld [vmem:[%s831 + $0x1c] sm:$0xf]
        %v2236 = vld [vmem:[%s834] sm:$0x1]
        %v2237 = vld [vmem:[%s837] sm:$0x1]
        %v2238 = vld [vmem:[%s840] sm:$0x1]
        %v2239 = vpack.c.bf16 %v2222, %v2221
        %v2241 = vperm.slane %v2227, 0
        %v2247 = vunpack.c.l.b16 %v2223
        %v2248 = vunpack.c.l.b16 %v2224
        %v2249 = vunpack.c.l.b16 %v2225
        %v2250 = vunpack.c.l.b16 %v2226
        %v2251 = vpack.c.b16 %v2248, %v2247
        %v2252 = vpack.c.b16 %v2250, %v2249
        %v2256 = vsel %vm890, %v2239, 0
        %2258 = vmatpush.bf16.msra.mxu0 0
        %2259 = vmatpush.bf16.msra.mxu0 0
        %2260 = vmatpush.bf16.msra.mxu0 0
        %2261 = vmatpush.bf16.msra.mxu0 0
        %2262 = vmatpush.bf16.msra.mxu0 0
        %2263 = vmatpush.bf16.msra.mxu0 0
        %2264 = vmatpush.bf16.msra.mxu0 %v2252
        %2265 = vmatpush.bf16.msra.mxu0 %v2251
        %2266 = vmatmul.bf16.gmra.mxu0 %v2256
        %v2267 = vpop.f32.mrf.mxu0
        %v2268 = vadd.f32 %v2241, %v2267
        %v2269 = vpop.f32.mrf.mxu0
        %v2270 = vadd.f32 %v2241, %v2269
        %2271 = vdwg.mxu0
        %v2272 = vmax.f32 %v2268, 0.0
        %v2273 = vmax.f32 %v2270, 0.0
        %v2274 = vpack.c.bf16 %v2273, %v2272
        %v2276 = vperm.slane %v2236, 0
        %v2286 = vunpack.c.l.b16 %v2228
        %v2287 = vunpack.c.l.b16 %v2229
        %v2288 = vunpack.c.l.b16 %v2230
        %v2289 = vunpack.c.l.b16 %v2231
        %v2290 = vunpack.c.l.b16 %v2232
        %v2291 = vunpack.c.l.b16 %v2233
        %v2292 = vunpack.c.l.b16 %v2234
        %v2293 = vunpack.c.l.b16 %v2235
        %v2294 = vpack.c.b16 %v2287, %v2286
        %v2295 = vpack.c.b16 %v2289, %v2288
        %v2296 = vpack.c.b16 %v2291, %v2290
        %v2297 = vpack.c.b16 %v2293, %v2292
        %vm2302 = vcmask 523264
        %v2304 = vsel %vm2302, %v2274, 0
        %2306 = vmatpush.bf16.msra.mxu0 0
        %2307 = vmatpush.bf16.msra.mxu0 0
        %2308 = vmatpush.bf16.msra.mxu0 0
        %2309 = vmatpush.bf16.msra.mxu0 0
        %2310 = vmatpush.bf16.msra.mxu0 %v2297
        %2311 = vmatpush.bf16.msra.mxu0 %v2296
        %2312 = vmatpush.bf16.msra.mxu0 %v2295
        %2313 = vmatpush.bf16.msra.mxu0 %v2294
        %2314 = vmatmul.bf16.gmra.mxu0 %v2304
        %v2315 = vpop.f32.mrf.mxu0
        %v2316 = vadd.f32 %v2276, %v2315
        %v2317 = vpop.f32.mrf.mxu0
        %v2318 = vadd.f32 %v2276, %v2317
        %2319 = vdwg.mxu0
        %v2320 = vadd.f32 %v2316, %v2221
        %v2321 = vadd.f32 %v2318, %v2222
        %v2322 = vsel %vm890, %v2320, 0.0
        %2323 = vadd.xlane.f32.xlu0 %v2322
        %v2324 = vpop.xlane.xlu0 %2323
        %v2325 = vsel %vm890, %v2321, 0.0
        %2326 = vadd.xlane.f32.xlu0 %v2325
        %v2327 = vpop.xlane.xlu0 %2326
        %v2328 = vmul.f32 %v2324, %v1496
        %v2329 = vmul.f32 %v2327, %v1496
        %v2330 = vsub.f32 %v2320, %v2328
        %v2331 = vsub.f32 %v2321, %v2329
        %v2332 = vmul.f32 %v2330, %v2330
        %v2333 = vmul.f32 %v2331, %v2331
        %v2334 = vsel %vm890, %v2332, 0.0
        %2335 = vadd.xlane.f32.xlu0 %v2334
        %v2336 = vpop.xlane.xlu0 %2335
        %v2337 = vsel %vm890, %v2333, 0.0
        %2338 = vadd.xlane.f32.xlu0 %v2337
        %v2339 = vpop.xlane.xlu0 %2338
        %v2340 = vmul.f32 %v2336, %v1496
        %v2341 = vmul.f32 %v2339, %v1496
        %v2342 = vadd.f32 %v2340, 1e-06
        %v2343 = vadd.f32 %v2341, 1e-06
        %v2344 = vrsqrt.pop %v2342
        %v2345 = vmul.f32 %v2344, %v2342
        %v2346 = vmul.f32 %v2345, %v2344
        %v2347 = vmul.f32 0.5, %v2346
        %v2348 = vsub.f32 1.5, %v2347
        %v2349 = vmul.f32 %v2344, %v2348
        %vm2350 = vweird.f32 %v2342
        %vm2351 = vweird.f32 %v2344
        %vm2352 = vmor %vm2350, %vm2351
        %v2353 = vsel %vm2352, %v2344, %v2349
        %v2354 = vrsqrt.pop %v2343
        %v2355 = vmul.f32 %v2354, %v2343
        %v2356 = vmul.f32 %v2355, %v2354
        %v2357 = vmul.f32 0.5, %v2356
        %v2358 = vsub.f32 1.5, %v2357
        %v2359 = vmul.f32 %v2354, %v2358
        %vm2360 = vweird.f32 %v2343
        %vm2361 = vweird.f32 %v2354
        %vm2362 = vmor %vm2360, %vm2361
        %v2363 = vsel %vm2362, %v2354, %v2359
        %v2364 = vmul.f32 %v2330, %v2353
        %v2365 = vmul.f32 %v2331, %v2363
        %v2367 = vperm.slane %v2237, 0
        %v2369 = vmul.f32 %v2364, %v2367
        %v2370 = vmul.f32 %v2365, %v2367
        %v2372 = vperm.slane %v2238, 0
        %v2374 = vadd.f32 %v2369, %v2372
        %v2375 = vadd.f32 %v2370, %v2372
        %2376 = vst.msk [vmem:[#allocation14] sm:$0xff] %vm890, %v2374
        %2377 = vst.msk [vmem:[#allocation14 + $0x8] sm:$0xff] %vm890, %v2375
        // Predicated region
        $region121: #{tpu_custom_call.1} parent=83 // pred_check
          %p2378 = pneg %p440
        $region122: #{tpu_custom_call.1} parent=83 // pred_check_branch
          %2380 = sbr.rel (%p2378) target = $region124
        $region123: #{tpu_custom_call.1} parent=83 // pred_region
          %2382 = vsyncadd [#allocation4], 0
          %s2383 = sshll.u32 [#allocation14], 4
          %s2384 = int_to_ptr.vmem [resolvable:$true] %s2383
          %s2385 = sshll.u32 %s16, 4
          %s2386 = int_to_ptr.hbm [resolvable:$true] %s2385
          %2391 = dma.vmem_to_hbm [thread:$0]  %s2384, 256, %s2386, [#allocation4], 128, 128, 8
        $region124: #{tpu_custom_call.1} parent=83 // pred_fallthru
          _
        // Predicated region
        $region125: #{tpu_custom_call.1} parent=83 // pred_check
          %p2392 = pneg %p440
        $region126: #{tpu_custom_call.1} parent=83 // pred_check_branch
          %2394 = sbr.rel (%p2392) target = $region128
        $region127: #{tpu_custom_call.1} parent=83 // pred_region
          %2396 = dma.done [#allocation4], 256
        $region128: #{tpu_custom_call.1} parent=83 // pred_fallthru
          _
      $region84: #{tpu_custom_call.1} parent=5 // pred_fallthru
        _
      %p2397 = scmp.le.s32.totalorder 2, %s26
      // Predicated region
      $region129: #{tpu_custom_call.1} parent=5 // pred_check
        %p2398 = pneg %p2397
      $region130: #{tpu_custom_call.1} parent=5 // pred_check_branch
        %2400 = sbr.rel (%p2398) target = $region132
      $region131: #{tpu_custom_call.1} parent=5 // pred_region
        %s2401 = ssub.s32 %s26, 2
      $region132: #{tpu_custom_call.1} parent=5 // pred_fallthru
        _
    $region6: #{tpu_custom_call.1} parent=1 // loop_footer
      %s30 = sadd.s32 1, %s26
    $region7: #{tpu_custom_call.1} parent=1 // loop_footer_branch
      %25 = sbr.rel target = $region3
    $region8: #{tpu_custom_call.1} parent=1 // loop_exit
      _
    %2402 = vsyncpa [#allocation3], 1
    %s2403 = scalar_lea.sflag [#allocation3], 1
    %2404 = vsyncpa %s2403, 1
    %2405 = vsyncpa [#allocation6], 1
    %2406 = vsyncpa [#allocation9], 1
    %2407 = vsyncpa [#allocation4], 1
    %s2408 = scalar_lea.sflag [#allocation4], 1
    %2409 = vsyncpa %s2408, 1

</llo_original>
